<compile_context>
chip_gen: v6e
topology: v6e:2x2x1
jax: 0.10.0
libtpu: 0.0.40
codegen_flags: <defaults>
</compile_context>

<pallas_src>
import numpy as np
import jax
import jax.numpy as jnp
from jax.experimental import pallas as pl
from jax.experimental.pallas import tpu as pltpu


LATENT_DIM = 128
BN_EPS = 0.8            # nn.BatchNorm1d(n, 0.8) -> eps = 0.8
LEAKY_SLOPE = 0.2


def _generator_kernel(
    labels_ref, e1_ref, noise_ref,
    w1b_ref, g1_ref, be1_ref,
    w2_ref, g2_ref, be2_ref,
    w3_ref, g3_ref, be3_ref,
    w4_hbm_ref, g4_ref, be4_ref,
    w5_hbm_ref, b5_ref,
    out_ref,
    w4_vmem, w5_vmem, dma_sems,
):
    """Fused: folded-embed -> 4 x (Linear -> BN(batch stats) -> LeakyReLU) -> Linear -> Tanh.

    w4 / w5 arrive as HBM refs; their DMAs are started here and waited on only
    right before they are needed, overlapping with layer-1..3 compute.
    """
    # Kick off the big weight DMAs immediately so they overlap layers 1-3.
    w4_cp = pltpu.make_async_copy(w4_hbm_ref, w4_vmem, dma_sems.at[0])
    w5_cp = pltpu.make_async_copy(w5_hbm_ref, w5_vmem, dma_sems.at[1])
    w4_cp.start()
    w5_cp.start()

    B = noise_ref.shape[0]
    num_classes = e1_ref.shape[0]

    def dot16(h, w):
        # bf16 inputs, f32 accumulation on the MXU.
        return jnp.dot(h.astype(jnp.bfloat16), w, preferred_element_type=jnp.float32)

    def bn_lrelu(z, gamma, beta):
        # Single-pass train-mode BatchNorm1d (biased batch var, eps=0.8),
        # gamma folded into the scale, then LeakyReLU(0.2).  All f32.
        mean = jnp.mean(z, axis=0, keepdims=True)
        ms = jnp.mean(z * z, axis=0, keepdims=True)
        var = jnp.maximum(ms - mean * mean, 0.0)   # guard FP cancellation
        s = gamma * jax.lax.rsqrt(var + BN_EPS)
        zn = z * s + (beta - mean * s)
        return jnp.where(zn >= 0.0, zn, LEAKY_SLOPE * zn)

    # Folded embedding path: one_hot(labels) @ E1 with E1 = embed @ W1[:nc],
    # i.e. an exact f32 row-select of the precomputed (nc, 128) table.
    cls = jax.lax.broadcasted_iota(jnp.int32, (B, num_classes), 1)
    one_hot = (labels_ref[...] == cls).astype(jnp.float32)           # (B, nc)
    z = jnp.dot(one_hot, e1_ref[...], preferred_element_type=jnp.float32)

    # Layer 1 (noise columns of W1); biases b1..b4 are dead under train-BN.
    z = z + dot16(noise_ref[...], w1b_ref[...])                       # (B, 128)
    h = bn_lrelu(z, g1_ref[...], be1_ref[...])
    h = bn_lrelu(dot16(h, w2_ref[...]), g2_ref[...], be2_ref[...])    # (B, 256)
    h = bn_lrelu(dot16(h, w3_ref[...]), g3_ref[...], be3_ref[...])    # (B, 512)

    w4_cp.wait()
    h = bn_lrelu(dot16(h, w4_vmem[...]), g4_ref[...], be4_ref[...])   # (B, 1024)

    w5_cp.wait()
    z = dot16(h, w5_vmem[...]) + b5_ref[...]                          # (B, out_dim_padded)
    out_ref[...] = jnp.tanh(z)


def prepare_kernel_params(params, num_classes):
    """One-time prep: fold embedding into E1 = embed @ W1[:nc], cast weights to
    bf16, drop dead BN-layer biases, pad w5/b5 columns to a multiple of 128."""
    w1 = params["w1"].astype(jnp.float32)
    kp = {
        # (num_classes, 128) f32 table: exact fold of embed lookup + W1[:nc].
        "e1": jnp.dot(params["embed"].astype(jnp.float32), w1[:num_classes]),
        "w1b": w1[num_classes:].astype(jnp.bfloat16),
        "g1": params["g1"], "be1": params["be1"],
    }
    for i in (2, 3, 4):
        kp[f"w{i}"] = params[f"w{i}"].astype(jnp.bfloat16)
        kp[f"g{i}"] = params[f"g{i}"]
        kp[f"be{i}"] = params[f"be{i}"]

    # Lane-dense output: pad output columns to a multiple of 128 (sliced off
    # in the wrapper).  Zero weight/bias columns -> tanh(0)=0 in the padding.
    out_dim = int(params["w5"].shape[1])
    pad = (-out_dim) % 128
    w5 = params["w5"].astype(jnp.bfloat16)
    b5 = params["b5"].astype(jnp.float32)
    if pad:
        w5 = jnp.pad(w5, ((0, 0), (0, pad)))
        b5 = jnp.pad(b5, ((0, 0), (0, pad)))
    kp["w5"] = w5
    kp["b5"] = b5
    return kp


def _mlp_pallas(labels, noise, kp):
    """Run the fused generator MLP kernel.

    noise: (B, input_dim) f32, labels: (B,) int.  Returns (B, out_dim_padded) f32.
    """
    B = noise.shape[0]
    out_dim_p = kp["w5"].shape[1]
    labels2d = labels.astype(jnp.int32).reshape(B, 1)

    inputs = [
        labels2d, kp["e1"], noise.astype(jnp.float32),
        kp["w1b"], kp["g1"], kp["be1"],
        kp["w2"], kp["g2"], kp["be2"],
        kp["w3"], kp["g3"], kp["be3"],
        kp["w4"], kp["g4"], kp["be4"],
        kp["w5"], kp["b5"],
    ]

    vmem = pl.BlockSpec(memory_space=pltpu.MemorySpace.VMEM)
    hbm = pl.BlockSpec(memory_space=pl.ANY)        # manual DMA inside the kernel
    in_specs = [
        vmem, vmem, vmem,        # labels, E1, noise
        vmem, vmem, vmem,        # w1b, g1, be1
        vmem, vmem, vmem,        # w2, g2, be2
        vmem, vmem, vmem,        # w3, g3, be3
        hbm, vmem, vmem,         # w4 (overlapped DMA), g4, be4
        hbm, vmem,               # w5 (overlapped DMA), b5
    ]

    # Advisory cost estimate (kernel is dominated by weight DMA at small B).
    mm_dims = [kp["e1"].shape, kp["w1b"].shape, kp["w2"].shape,
               kp["w3"].shape, kp["w4"].shape, kp["w5"].shape]
    flops = 2 * B * sum(int(m) * int(n) for m, n in mm_dims)
    transcendentals = B * int(out_dim_p) + sum(int(n) for _, n in mm_dims[:-1])
    bytes_accessed = (sum(int(np.prod(x.shape)) * x.dtype.itemsize for x in inputs)
                      + B * int(out_dim_p) * 4)

    # TODO(synk): if this generator is called in a training loop, amortize the
    # weight stream: batch multiple calls (B >= 128/256) behind a batch-tile
    # grid axis marked "parallel" (v7x: 2 TCs, only 64 MiB VMEM -> tile_B <=
    # 512, and switch BN stats to a two-pass / cross-core reduction to keep
    # exact full-batch semantics), or use cross-call weight prefetch (P10).
    return pl.pallas_call(
        _generator_kernel,
        out_shape=jax.ShapeDtypeStruct((B, out_dim_p), jnp.float32),
        # Whole problem (~2.5 MB weights + tiny activations) fits in VMEM; no grid.
        in_specs=in_specs,
        out_specs=pl.BlockSpec(memory_space=pltpu.MemorySpace.VMEM),
        scratch_shapes=[
            pltpu.VMEM(kp["w4"].shape, jnp.bfloat16),   # w4 landing buffer
            pltpu.VMEM(kp["w5"].shape, jnp.bfloat16),   # w5 landing buffer
            pltpu.SemaphoreType.DMA((2,)),
        ],
        compiler_params=pltpu.CompilerParams(vmem_limit_bytes=32 * 1024 * 1024),
        cost_estimate=pl.CostEstimate(flops=flops,
                                      transcendentals=transcendentals,
                                      bytes_accessed=bytes_accessed),
    )(*inputs)


def _ste_gray(img, init_images):
    """ste_function_gray.forward: rank-match init pixels onto gen pixel ordering.

    out[argsort(gen)] = sort(init)  <=>  out = sort(init)[argsort(argsort(gen))]
    """
    B = img.shape[0]
    gen_pixels = img.reshape(B, -1)
    init_pixels = init_images.reshape(B, -1)
    sorted_init = jnp.sort(init_pixels, axis=-1)
    rank = jnp.argsort(jnp.argsort(gen_pixels, axis=-1), axis=-1)
    out = jnp.take_along_axis(sorted_init, rank, axis=-1)
    return out.reshape(init_images.shape)


def init_generator_params(key, input_dim, num_classes, image_shape):
    """Deterministic parameter init mirroring the PyTorch module's shapes."""
    out_dim = int(np.prod(image_shape))
    dims = [input_dim + num_classes, LATENT_DIM, LATENT_DIM * 2,
            LATENT_DIM * 4, LATENT_DIM * 8, out_dim]
    keys = jax.random.split(key, 12)

    def linear(kw, kb, fan_in, fan_out):
        bound = 1.0 / np.sqrt(fan_in)
        w = jax.random.uniform(kw, (fan_in, fan_out), jnp.float32, -bound, bound)
        b = jax.random.uniform(kb, (1, fan_out), jnp.float32, -bound, bound)
        return w, b

    params = {}
    # Embedding table: (num_classes, num_classes), N(0, 1) like nn.Embedding default.
    params["embed"] = jax.random.normal(keys[0], (num_classes, num_classes), jnp.float32)
    for i in range(5):
        w, b = linear(keys[1 + 2 * i], keys[2 + 2 * i], dims[i], dims[i + 1])
        params[f"w{i + 1}"] = w
        # Biases b1..b4 mirror the PyTorch module but are mathematically dead
        # under the train-mode BatchNorm that follows; only b5 is used in-kernel.
        params[f"b{i + 1}"] = b
        if i < 4:
            params[f"g{i + 1}"] = jnp.ones((1, dims[i + 1]), jnp.float32)
            params[f"be{i + 1}"] = jnp.zeros((1, dims[i + 1]), jnp.float32)
    return params


def _mlp_reference(params, noise, labels):
    """Pure-JAX f32 reference of the generator MLP (train-mode BN, with biases)."""
    emb = params["embed"][labels]
    h = jnp.concatenate([emb, noise], axis=-1)
    for i in range(1, 5):
        z = h @ params[f"w{i}"] + params[f"b{i}"]
        mean = jnp.mean(z, axis=0, keepdims=True)
        var = jnp.mean((z - mean) ** 2, axis=0, keepdims=True)
        zn = params[f"g{i}"] * (z - mean) * jax.lax.rsqrt(var + BN_EPS) + params[f"be{i}"]
        h = jnp.where(zn >= 0.0, zn, LEAKY_SLOPE * zn)
    return jnp.tanh(h @ params["w5"] + params["b5"])


def generator_forward(kparams, noise, random_images, labels, image_shape):
    """Matches Generator.forward: returns (img_quantized, img)."""
    B = noise.shape[0]
    out_dim = int(np.prod(image_shape))
    flat_img = _mlp_pallas(labels, noise, kparams)          # (B, out_dim_padded)
    img = flat_img[:, :out_dim].reshape((B,) + tuple(image_shape))   # NCHW
    if random_images.shape[1] == 1:
        img_quantized = _ste_gray(img, random_images)
    else:
        # TODO(synk): RGB STE path (ste_function_rgb, grayscale-weighted argsort) not implemented.
        img_quantized = random_images
    return img_quantized, img


if __name__ == "__main__":
    B = 8
    input_dim = 32
    num_classes = 10
    image_shape = (1, 14, 14)   # prod = 196 -> exercises lane-dense output padding (196 -> 256)

    key = jax.random.PRNGKey(0)
    k_params, k_noise, k_labels, k_rand = jax.random.split(key, 4)

    params = init_generator_params(k_params, input_dim, num_classes, image_shape)
    kparams = prepare_kernel_params(params, num_classes)   # one-time fold/cast/pad prep

    noise = jax.random.normal(k_noise, (B, input_dim), jnp.float32)
    labels = jax.random.randint(k_labels, (B,), 0, num_classes)
    random_images = jax.random.uniform(k_rand, (B,) + image_shape, jnp.float32,
                                       minval=-1.0, maxval=1.0)

    img_q, img = generator_forward(kparams, noise, random_images, labels, image_shape)
    jax.block_until_ready((img_q, img))

    assert img.shape == (B,) + image_shape
    assert img_q.shape == (B,) + image_shape
    assert bool(jnp.all(jnp.isfinite(img)))
    assert bool(jnp.all(jnp.abs(img) <= 1.0))   # tanh range sanity

    # Tolerance-based comparison against the pure-JAX f32 reference
    # (bf16 weight/activation casts give ~1e-2 level deviations).
    ref = _mlp_reference(params, noise, labels).reshape((B,) + image_shape)
    max_err = float(jnp.max(jnp.abs(img - ref)))
    assert max_err < 0.08, f"max |kernel - ref| = {max_err}"

    print("KERNEL_OK")
</pallas_src>

<mosaic_0001>
module attributes {stable_mosaic.version = 11 : i64} {
  func.func @_generator_kernel(%arg0: memref<8x1xi32, #tpu.memory_space<vmem>>, %arg1: memref<10x128xf32, #tpu.memory_space<vmem>>, %arg2: memref<8x32xf32, #tpu.memory_space<vmem>>, %arg3: memref<32x128xbf16, #tpu.memory_space<vmem>>, %arg4: memref<1x128xf32, #tpu.memory_space<vmem>>, %arg5: memref<1x128xf32, #tpu.memory_space<vmem>>, %arg6: memref<128x256xbf16, #tpu.memory_space<vmem>>, %arg7: memref<1x256xf32, #tpu.memory_space<vmem>>, %arg8: memref<1x256xf32, #tpu.memory_space<vmem>>, %arg9: memref<256x512xbf16, #tpu.memory_space<vmem>>, %arg10: memref<1x512xf32, #tpu.memory_space<vmem>>, %arg11: memref<1x512xf32, #tpu.memory_space<vmem>>, %arg12: memref<512x1024xbf16, #tpu.memory_space<any>>, %arg13: memref<1x1024xf32, #tpu.memory_space<vmem>>, %arg14: memref<1x1024xf32, #tpu.memory_space<vmem>>, %arg15: memref<1024x256xbf16, #tpu.memory_space<any>>, %arg16: memref<1x256xf32, #tpu.memory_space<vmem>>, %arg17: memref<8x256xf32, #tpu.memory_space<vmem>>, %arg18: memref<512x1024xbf16, #tpu.memory_space<vmem>>, %arg19: memref<1024x256xbf16, #tpu.memory_space<vmem>>, %arg20: memref<2x!tpu.dma_semaphore, #tpu.memory_space<semaphore_mem>>) attributes {dimension_semantics = [], scalar_prefetch = 0 : i64, scratch_operands = 3 : i64, tpu.core_type = #tpu.core_type<tc>} {
    %c0_i32 = arith.constant 0 : i32
    %0 = tpu.memref_slice %arg20[%c0_i32] : memref<2x!tpu.dma_semaphore, #tpu.memory_space<semaphore_mem>> -> memref<1x!tpu.dma_semaphore, #tpu.memory_space<semaphore_mem>>
    %1 = tpu.memref_squeeze %0 : memref<1x!tpu.dma_semaphore, #tpu.memory_space<semaphore_mem>> -> memref<!tpu.dma_semaphore, #tpu.memory_space<semaphore_mem>>
    tpu.enqueue_dma source(%arg12 : memref<512x1024xbf16, #tpu.memory_space<any>>) target(%arg18 : memref<512x1024xbf16, #tpu.memory_space<vmem>>) target_semaphore(%1 : memref<!tpu.dma_semaphore, #tpu.memory_space<semaphore_mem>>)
    %c1_i32 = arith.constant 1 : i32
    %2 = tpu.memref_slice %arg20[%c1_i32] : memref<2x!tpu.dma_semaphore, #tpu.memory_space<semaphore_mem>> -> memref<1x!tpu.dma_semaphore, #tpu.memory_space<semaphore_mem>>
    %3 = tpu.memref_squeeze %2 : memref<1x!tpu.dma_semaphore, #tpu.memory_space<semaphore_mem>> -> memref<!tpu.dma_semaphore, #tpu.memory_space<semaphore_mem>>
    tpu.enqueue_dma source(%arg15 : memref<1024x256xbf16, #tpu.memory_space<any>>) target(%arg19 : memref<1024x256xbf16, #tpu.memory_space<vmem>>) target_semaphore(%3 : memref<!tpu.dma_semaphore, #tpu.memory_space<semaphore_mem>>)
    %4 = tpu.iota {dimensions = array<i32: 1>} : vector<8x10xi32>
    %c0 = arith.constant 0 : index
    %c0_0 = arith.constant 0 : index
    %5 = vector.load %arg0[%c0, %c0_0] : memref<8x1xi32, #tpu.memory_space<vmem>>, vector<8x1xi32>
    %6 = vector.broadcast %5 : vector<8x1xi32> to vector<8x10xi32>
    %7 = arith.cmpi eq, %6, %4 : vector<8x10xi32>
    %8 = arith.extui %7 : vector<8x10xi1> to vector<8x10xi32>
    %9 = arith.sitofp %8 : vector<8x10xi32> to vector<8x10xf32>
    %c0_1 = arith.constant 0 : index
    %c0_2 = arith.constant 0 : index
    %10 = vector.load %arg1[%c0_1, %c0_2] : memref<10x128xf32, #tpu.memory_space<vmem>>, vector<10x128xf32>
    %cst = arith.constant dense<0.000000e+00> : vector<8x128xf32>
    %11 = tpu.matmul %9, %10, %cst {dimension_numbers = #tpu.dot_dimension_numbers<[1], [0], [0], [1], [0, 0, 1, 1], [], []>} : vector<8x10xf32>, vector<10x128xf32>, vector<8x128xf32> -> vector<8x128xf32>
    %c0_3 = arith.constant 0 : index
    %c0_4 = arith.constant 0 : index
    %12 = vector.load %arg2[%c0_3, %c0_4] : memref<8x32xf32, #tpu.memory_space<vmem>>, vector<8x32xf32>
    %c0_5 = arith.constant 0 : index
    %c0_6 = arith.constant 0 : index
    %13 = vector.load %arg3[%c0_5, %c0_6] : memref<32x128xbf16, #tpu.memory_space<vmem>>, vector<32x128xbf16>
    %14 = arith.truncf %12 : vector<8x32xf32> to vector<8x32xbf16>
    %cst_7 = arith.constant dense<0.000000e+00> : vector<8x128xf32>
    %15 = tpu.matmul %14, %13, %cst_7 {dimension_numbers = #tpu.dot_dimension_numbers<[1], [0], [0], [1], [0, 0, 1, 1], [], []>} : vector<8x32xbf16>, vector<32x128xbf16>, vector<8x128xf32> -> vector<8x128xf32>
    %16 = arith.addf %11, %15 : vector<8x128xf32>
    %c0_8 = arith.constant 0 : index
    %c0_9 = arith.constant 0 : index
    %17 = vector.load %arg4[%c0_8, %c0_9] : memref<1x128xf32, #tpu.memory_space<vmem>>, vector<1x128xf32>
    %c0_10 = arith.constant 0 : index
    %c0_11 = arith.constant 0 : index
    %18 = vector.load %arg5[%c0_10, %c0_11] : memref<1x128xf32, #tpu.memory_space<vmem>>, vector<1x128xf32>
    %cst_12 = arith.constant dense<0.000000e+00> : vector<128xf32>
    %19 = vector.multi_reduction <add>, %16, %cst_12 [0] : vector<8x128xf32> to vector<128xf32>
    %20 = vector.shape_cast %19 : vector<128xf32> to vector<1x128xf32>
    %cst_13 = arith.constant 8.000000e+00 : f32
    %21 = vector.broadcast %cst_13 : f32 to vector<1x128xf32>
    %22 = arith.divf %20, %21 : vector<1x128xf32>
    %23 = arith.mulf %16, %16 : vector<8x128xf32>
    %cst_14 = arith.constant dense<0.000000e+00> : vector<128xf32>
    %24 = vector.multi_reduction <add>, %23, %cst_14 [0] : vector<8x128xf32> to vector<128xf32>
    %25 = vector.shape_cast %24 : vector<128xf32> to vector<1x128xf32>
    %cst_15 = arith.constant 8.000000e+00 : f32
    %26 = vector.broadcast %cst_15 : f32 to vector<1x128xf32>
    %27 = arith.divf %25, %26 : vector<1x128xf32>
    %28 = arith.mulf %22, %22 : vector<1x128xf32>
    %29 = arith.subf %27, %28 : vector<1x128xf32>
    %cst_16 = arith.constant 0.000000e+00 : f32
    %30 = vector.broadcast %cst_16 : f32 to vector<1x128xf32>
    %31 = arith.maximumf %29, %30 : vector<1x128xf32>
    %cst_17 = arith.constant 8.000000e-01 : f32
    %32 = vector.broadcast %cst_17 : f32 to vector<1x128xf32>
    %33 = arith.addf %31, %32 : vector<1x128xf32>
    %34 = math.rsqrt %33 : vector<1x128xf32>
    %35 = arith.mulf %17, %34 : vector<1x128xf32>
    %36 = vector.broadcast %35 : vector<1x128xf32> to vector<8x128xf32>
    %37 = arith.mulf %16, %36 : vector<8x128xf32>
    %38 = arith.mulf %22, %35 : vector<1x128xf32>
    %39 = arith.subf %18, %38 : vector<1x128xf32>
    %40 = vector.broadcast %39 : vector<1x128xf32> to vector<8x128xf32>
    %41 = arith.addf %37, %40 : vector<8x128xf32>
    %cst_18 = arith.constant 0.000000e+00 : f32
    %42 = vector.broadcast %cst_18 : f32 to vector<8x128xf32>
    %43 = arith.cmpf oge, %41, %42 : vector<8x128xf32>
    %cst_19 = arith.constant 2.000000e-01 : f32
    %44 = vector.broadcast %cst_19 : f32 to vector<8x128xf32>
    %45 = arith.mulf %44, %41 : vector<8x128xf32>
    %46 = arith.select %43, %41, %45 : vector<8x128xi1>, vector<8x128xf32>
    %c0_20 = arith.constant 0 : index
    %c0_21 = arith.constant 0 : index
    %47 = vector.load %arg6[%c0_20, %c0_21] : memref<128x256xbf16, #tpu.memory_space<vmem>>, vector<128x256xbf16>
    %48 = arith.truncf %46 : vector<8x128xf32> to vector<8x128xbf16>
    %cst_22 = arith.constant dense<0.000000e+00> : vector<8x256xf32>
    %49 = tpu.matmul %48, %47, %cst_22 {dimension_numbers = #tpu.dot_dimension_numbers<[1], [0], [0], [1], [0, 0, 1, 1], [], []>} : vector<8x128xbf16>, vector<128x256xbf16>, vector<8x256xf32> -> vector<8x256xf32>
    %c0_23 = arith.constant 0 : index
    %c0_24 = arith.constant 0 : index
    %50 = vector.load %arg7[%c0_23, %c0_24] : memref<1x256xf32, #tpu.memory_space<vmem>>, vector<1x256xf32>
    %c0_25 = arith.constant 0 : index
    %c0_26 = arith.constant 0 : index
    %51 = vector.load %arg8[%c0_25, %c0_26] : memref<1x256xf32, #tpu.memory_space<vmem>>, vector<1x256xf32>
    %cst_27 = arith.constant dense<0.000000e+00> : vector<256xf32>
    %52 = vector.multi_reduction <add>, %49, %cst_27 [0] : vector<8x256xf32> to vector<256xf32>
    %53 = vector.shape_cast %52 : vector<256xf32> to vector<1x256xf32>
    %cst_28 = arith.constant 8.000000e+00 : f32
    %54 = vector.broadcast %cst_28 : f32 to vector<1x256xf32>
    %55 = arith.divf %53, %54 : vector<1x256xf32>
    %56 = arith.mulf %49, %49 : vector<8x256xf32>
    %cst_29 = arith.constant dense<0.000000e+00> : vector<256xf32>
    %57 = vector.multi_reduction <add>, %56, %cst_29 [0] : vector<8x256xf32> to vector<256xf32>
    %58 = vector.shape_cast %57 : vector<256xf32> to vector<1x256xf32>
    %cst_30 = arith.constant 8.000000e+00 : f32
    %59 = vector.broadcast %cst_30 : f32 to vector<1x256xf32>
    %60 = arith.divf %58, %59 : vector<1x256xf32>
    %61 = arith.mulf %55, %55 : vector<1x256xf32>
    %62 = arith.subf %60, %61 : vector<1x256xf32>
    %cst_31 = arith.constant 0.000000e+00 : f32
    %63 = vector.broadcast %cst_31 : f32 to vector<1x256xf32>
    %64 = arith.maximumf %62, %63 : vector<1x256xf32>
    %cst_32 = arith.constant 8.000000e-01 : f32
    %65 = vector.broadcast %cst_32 : f32 to vector<1x256xf32>
    %66 = arith.addf %64, %65 : vector<1x256xf32>
    %67 = math.rsqrt %66 : vector<1x256xf32>
    %68 = arith.mulf %50, %67 : vector<1x256xf32>
    %69 = vector.broadcast %68 : vector<1x256xf32> to vector<8x256xf32>
    %70 = arith.mulf %49, %69 : vector<8x256xf32>
    %71 = arith.mulf %55, %68 : vector<1x256xf32>
    %72 = arith.subf %51, %71 : vector<1x256xf32>
    %73 = vector.broadcast %72 : vector<1x256xf32> to vector<8x256xf32>
    %74 = arith.addf %70, %73 : vector<8x256xf32>
    %cst_33 = arith.constant 0.000000e+00 : f32
    %75 = vector.broadcast %cst_33 : f32 to vector<8x256xf32>
    %76 = arith.cmpf oge, %74, %75 : vector<8x256xf32>
    %cst_34 = arith.constant 2.000000e-01 : f32
    %77 = vector.broadcast %cst_34 : f32 to vector<8x256xf32>
    %78 = arith.mulf %77, %74 : vector<8x256xf32>
    %79 = arith.select %76, %74, %78 : vector<8x256xi1>, vector<8x256xf32>
    %c0_35 = arith.constant 0 : index
    %c0_36 = arith.constant 0 : index
    %80 = vector.load %arg9[%c0_35, %c0_36] : memref<256x512xbf16, #tpu.memory_space<vmem>>, vector<256x512xbf16>
    %81 = arith.truncf %79 : vector<8x256xf32> to vector<8x256xbf16>
    %cst_37 = arith.constant dense<0.000000e+00> : vector<8x512xf32>
    %82 = tpu.matmul %81, %80, %cst_37 {dimension_numbers = #tpu.dot_dimension_numbers<[1], [0], [0], [1], [0, 0, 1, 1], [], []>} : vector<8x256xbf16>, vector<256x512xbf16>, vector<8x512xf32> -> vector<8x512xf32>
    %c0_38 = arith.constant 0 : index
    %c0_39 = arith.constant 0 : index
    %83 = vector.load %arg10[%c0_38, %c0_39] : memref<1x512xf32, #tpu.memory_space<vmem>>, vector<1x512xf32>
    %c0_40 = arith.constant 0 : index
    %c0_41 = arith.constant 0 : index
    %84 = vector.load %arg11[%c0_40, %c0_41] : memref<1x512xf32, #tpu.memory_space<vmem>>, vector<1x512xf32>
    %cst_42 = arith.constant dense<0.000000e+00> : vector<512xf32>
    %85 = vector.multi_reduction <add>, %82, %cst_42 [0] : vector<8x512xf32> to vector<512xf32>
    %86 = vector.shape_cast %85 : vector<512xf32> to vector<1x512xf32>
    %cst_43 = arith.constant 8.000000e+00 : f32
    %87 = vector.broadcast %cst_43 : f32 to vector<1x512xf32>
    %88 = arith.divf %86, %87 : vector<1x512xf32>
    %89 = arith.mulf %82, %82 : vector<8x512xf32>
    %cst_44 = arith.constant dense<0.000000e+00> : vector<512xf32>
    %90 = vector.multi_reduction <add>, %89, %cst_44 [0] : vector<8x512xf32> to vector<512xf32>
    %91 = vector.shape_cast %90 : vector<512xf32> to vector<1x512xf32>
    %cst_45 = arith.constant 8.000000e+00 : f32
    %92 = vector.broadcast %cst_45 : f32 to vector<1x512xf32>
    %93 = arith.divf %91, %92 : vector<1x512xf32>
    %94 = arith.mulf %88, %88 : vector<1x512xf32>
    %95 = arith.subf %93, %94 : vector<1x512xf32>
    %cst_46 = arith.constant 0.000000e+00 : f32
    %96 = vector.broadcast %cst_46 : f32 to vector<1x512xf32>
    %97 = arith.maximumf %95, %96 : vector<1x512xf32>
    %cst_47 = arith.constant 8.000000e-01 : f32
    %98 = vector.broadcast %cst_47 : f32 to vector<1x512xf32>
    %99 = arith.addf %97, %98 : vector<1x512xf32>
    %100 = math.rsqrt %99 : vector<1x512xf32>
    %101 = arith.mulf %83, %100 : vector<1x512xf32>
    %102 = vector.broadcast %101 : vector<1x512xf32> to vector<8x512xf32>
    %103 = arith.mulf %82, %102 : vector<8x512xf32>
    %104 = arith.mulf %88, %101 : vector<1x512xf32>
    %105 = arith.subf %84, %104 : vector<1x512xf32>
    %106 = vector.broadcast %105 : vector<1x512xf32> to vector<8x512xf32>
    %107 = arith.addf %103, %106 : vector<8x512xf32>
    %cst_48 = arith.constant 0.000000e+00 : f32
    %108 = vector.broadcast %cst_48 : f32 to vector<8x512xf32>
    %109 = arith.cmpf oge, %107, %108 : vector<8x512xf32>
    %cst_49 = arith.constant 2.000000e-01 : f32
    %110 = vector.broadcast %cst_49 : f32 to vector<8x512xf32>
    %111 = arith.mulf %110, %107 : vector<8x512xf32>
    %112 = arith.select %109, %107, %111 : vector<8x512xi1>, vector<8x512xf32>
    %c0_i32_50 = arith.constant 0 : i32
    %113 = tpu.memref_slice %arg20[%c0_i32_50] : memref<2x!tpu.dma_semaphore, #tpu.memory_space<semaphore_mem>> -> memref<1x!tpu.dma_semaphore, #tpu.memory_space<semaphore_mem>>
    %114 = tpu.memref_squeeze %113 : memref<1x!tpu.dma_semaphore, #tpu.memory_space<semaphore_mem>> -> memref<!tpu.dma_semaphore, #tpu.memory_space<semaphore_mem>>
    tpu.wait_dma2 semaphore(%114 : memref<!tpu.dma_semaphore, #tpu.memory_space<semaphore_mem>>) src(%arg12 : memref<512x1024xbf16, #tpu.memory_space<any>>) dst(%arg18 : memref<512x1024xbf16, #tpu.memory_space<vmem>>)
    %c0_51 = arith.constant 0 : index
    %c0_52 = arith.constant 0 : index
    %115 = vector.load %arg18[%c0_51, %c0_52] : memref<512x1024xbf16, #tpu.memory_space<vmem>>, vector<512x1024xbf16>
    %116 = arith.truncf %112 : vector<8x512xf32> to vector<8x512xbf16>
    %cst_53 = arith.constant dense<0.000000e+00> : vector<8x1024xf32>
    %117 = tpu.matmul %116, %115, %cst_53 {dimension_numbers = #tpu.dot_dimension_numbers<[1], [0], [0], [1], [0, 0, 1, 1], [], []>} : vector<8x512xbf16>, vector<512x1024xbf16>, vector<8x1024xf32> -> vector<8x1024xf32>
    %c0_54 = arith.constant 0 : index
    %c0_55 = arith.constant 0 : index
    %118 = vector.load %arg13[%c0_54, %c0_55] : memref<1x1024xf32, #tpu.memory_space<vmem>>, vector<1x1024xf32>
    %c0_56 = arith.constant 0 : index
    %c0_57 = arith.constant 0 : index
    %119 = vector.load %arg14[%c0_56, %c0_57] : memref<1x1024xf32, #tpu.memory_space<vmem>>, vector<1x1024xf32>
    %cst_58 = arith.constant dense<0.000000e+00> : vector<1024xf32>
    %120 = vector.multi_reduction <add>, %117, %cst_58 [0] : vector<8x1024xf32> to vector<1024xf32>
    %121 = vector.shape_cast %120 : vector<1024xf32> to vector<1x1024xf32>
    %cst_59 = arith.constant 8.000000e+00 : f32
    %122 = vector.broadcast %cst_59 : f32 to vector<1x1024xf32>
    %123 = arith.divf %121, %122 : vector<1x1024xf32>
    %124 = arith.mulf %117, %117 : vector<8x1024xf32>
    %cst_60 = arith.constant dense<0.000000e+00> : vector<1024xf32>
    %125 = vector.multi_reduction <add>, %124, %cst_60 [0] : vector<8x1024xf32> to vector<1024xf32>
    %126 = vector.shape_cast %125 : vector<1024xf32> to vector<1x1024xf32>
    %cst_61 = arith.constant 8.000000e+00 : f32
    %127 = vector.broadcast %cst_61 : f32 to vector<1x1024xf32>
    %128 = arith.divf %126, %127 : vector<1x1024xf32>
    %129 = arith.mulf %123, %123 : vector<1x1024xf32>
    %130 = arith.subf %128, %129 : vector<1x1024xf32>
    %cst_62 = arith.constant 0.000000e+00 : f32
    %131 = vector.broadcast %cst_62 : f32 to vector<1x1024xf32>
    %132 = arith.maximumf %130, %131 : vector<1x1024xf32>
    %cst_63 = arith.constant 8.000000e-01 : f32
    %133 = vector.broadcast %cst_63 : f32 to vector<1x1024xf32>
    %134 = arith.addf %132, %133 : vector<1x1024xf32>
    %135 = math.rsqrt %134 : vector<1x1024xf32>
    %136 = arith.mulf %118, %135 : vector<1x1024xf32>
    %137 = vector.broadcast %136 : vector<1x1024xf32> to vector<8x1024xf32>
    %138 = arith.mulf %117, %137 : vector<8x1024xf32>
    %139 = arith.mulf %123, %136 : vector<1x1024xf32>
    %140 = arith.subf %119, %139 : vector<1x1024xf32>
    %141 = vector.broadcast %140 : vector<1x1024xf32> to vector<8x1024xf32>
    %142 = arith.addf %138, %141 : vector<8x1024xf32>
    %cst_64 = arith.constant 0.000000e+00 : f32
    %143 = vector.broadcast %cst_64 : f32 to vector<8x1024xf32>
    %144 = arith.cmpf oge, %142, %143 : vector<8x1024xf32>
    %cst_65 = arith.constant 2.000000e-01 : f32
    %145 = vector.broadcast %cst_65 : f32 to vector<8x1024xf32>
    %146 = arith.mulf %145, %142 : vector<8x1024xf32>
    %147 = arith.select %144, %142, %146 : vector<8x1024xi1>, vector<8x1024xf32>
    %c1_i32_66 = arith.constant 1 : i32
    %148 = tpu.memref_slice %arg20[%c1_i32_66] : memref<2x!tpu.dma_semaphore, #tpu.memory_space<semaphore_mem>> -> memref<1x!tpu.dma_semaphore, #tpu.memory_space<semaphore_mem>>
    %149 = tpu.memref_squeeze %148 : memref<1x!tpu.dma_semaphore, #tpu.memory_space<semaphore_mem>> -> memref<!tpu.dma_semaphore, #tpu.memory_space<semaphore_mem>>
    tpu.wait_dma2 semaphore(%149 : memref<!tpu.dma_semaphore, #tpu.memory_space<semaphore_mem>>) src(%arg15 : memref<1024x256xbf16, #tpu.memory_space<any>>) dst(%arg19 : memref<1024x256xbf16, #tpu.memory_space<vmem>>)
    %c0_67 = arith.constant 0 : index
    %c0_68 = arith.constant 0 : index
    %150 = vector.load %arg19[%c0_67, %c0_68] : memref<1024x256xbf16, #tpu.memory_space<vmem>>, vector<1024x256xbf16>
    %151 = arith.truncf %147 : vector<8x1024xf32> to vector<8x1024xbf16>
    %cst_69 = arith.constant dense<0.000000e+00> : vector<8x256xf32>
    %152 = tpu.matmul %151, %150, %cst_69 {dimension_numbers = #tpu.dot_dimension_numbers<[1], [0], [0], [1], [0, 0, 1, 1], [], []>} : vector<8x1024xbf16>, vector<1024x256xbf16>, vector<8x256xf32> -> vector<8x256xf32>
    %c0_70 = arith.constant 0 : index
    %c0_71 = arith.constant 0 : index
    %153 = vector.load %arg16[%c0_70, %c0_71] : memref<1x256xf32, #tpu.memory_space<vmem>>, vector<1x256xf32>
    %154 = vector.broadcast %153 : vector<1x256xf32> to vector<8x256xf32>
    %155 = arith.addf %152, %154 : vector<8x256xf32>
    %156 = math.tanh %155 : vector<8x256xf32>
    %c0_72 = arith.constant 0 : index
    %c0_73 = arith.constant 0 : index
    %157 = vector.load %arg17[%c0_72, %c0_73] : memref<8x256xf32, #tpu.memory_space<vmem>>, vector<8x256xf32>
    tpu.vector_store %arg17[%c0_72, %c0_73], %156 {strides = array<i32>} : memref<8x256xf32, #tpu.memory_space<vmem>>, vector<8x256xf32>,
    return
  }
}

</mosaic_0001>

<llo_original>
// kernel: tpu_custom_call.1
$region0: #{tpu_custom_call.1}
  #allocation0 [shape = 'u32[]', space=smem, size = 0x4, offset = 0x4, fixed_abs, tag = 'smem constant byte address 0x4 - core index']
  #allocation1 [shape = 'u32[144,128]{1,0:T(1,128)}', space=vmem, size = 0x12000, scoped, tag = 'internal scratch']
  #allocation2 [shape = 'bf16[512,1024]{1,0:T(8,128)(2,1)}', space=vmem, size = 0x100000, scoped, tag = 'scratch operand']
  #allocation3 [shape = 'bf16[1024,256]{1,0:T(8,128)(2,1)}', space=vmem, size = 0x80000, scoped, tag = 'scratch operand']
  #allocation4 [shape = 's32[2]{0}', space=sflag, size = 0x8, scoped, tag = 'scratch operand']
  #allocation21 [shape = 's32[]', space=sflag, size = 0x4, offset = 0, fixed_abs, tag = 'sflag constant byte address 0x0 - dummy sync flag']
  #allocation22 [shape = 's32[]', space=sflag, size = 0x4, offset = 0, fixed_abs, tag = 'sflag constant byte address 0x0 - dummy sync flag']
  #allocation23 [shape = 'u32[]', space=smem, size = 0x4, offset = 0x44, fixed_abs, tag = 'smem constant byte address 0x44 - assertion arg 0']
  #allocation24 [shape = 'u32[]', space=smem, size = 0x4, offset = 0x48, fixed_abs, tag = 'smem constant byte address 0x48 - assertion arg 1']
  #allocation25 [shape = 's32[]', space=sflag, size = 0x4, offset = 0, fixed_abs, tag = 'sflag constant byte address 0x0 - dummy sync flag']
  #allocation26 [shape = 's32[]', space=sflag, size = 0x4, offset = 0, fixed_abs, tag = 'sflag constant byte address 0x0 - dummy sync flag']
  %s0 = inlined_call_operand.vmem [shape: s32[8,1], index: 0, kind: input, shape index: {}]
  %s1 = inlined_call_operand.hbm [shape: f32[10,128], index: 1, kind: input, shape index: {}]
  %s2 = inlined_call_operand.vmem [shape: f32[8,32], index: 2, kind: input, shape index: {}]
  %s3 = inlined_call_operand.hbm [shape: bf16[32,128], index: 3, kind: input, shape index: {}]
  %s4 = inlined_call_operand.hbm [shape: f32[1,128], index: 4, kind: input, shape index: {}]
  %s5 = inlined_call_operand.hbm [shape: f32[1,128], index: 5, kind: input, shape index: {}]
  %s6 = inlined_call_operand.hbm [shape: bf16[128,256], index: 6, kind: input, shape index: {}]
  %s7 = inlined_call_operand.hbm [shape: f32[1,256], index: 7, kind: input, shape index: {}]
  %s8 = inlined_call_operand.hbm [shape: f32[1,256], index: 8, kind: input, shape index: {}]
  %s9 = inlined_call_operand.hbm [shape: bf16[256,512], index: 9, kind: input, shape index: {}]
  %s10 = inlined_call_operand.hbm [shape: f32[1,512], index: 10, kind: input, shape index: {}]
  %s11 = inlined_call_operand.vmem [shape: f32[1,512], index: 11, kind: input, shape index: {}]
  %s12 = inlined_call_operand.hbm [shape: bf16[512,1024], index: 12, kind: input, shape index: {}]
  %s13 = inlined_call_operand.vmem [shape: f32[1,1024], index: 13, kind: input, shape index: {}]
  %s14 = inlined_call_operand.vmem [shape: f32[1,1024], index: 14, kind: input, shape index: {}]
  %s15 = inlined_call_operand.hbm [shape: bf16[1024,256], index: 15, kind: input, shape index: {}]
  %s16 = inlined_call_operand.vmem [shape: f32[1,256], index: 16, kind: input, shape index: {}]
  %s17 = inlined_call_operand.hbm [shape: f32[8,256], index: 17, kind: output, shape index: {}]
  %s18 = sld [smem:[#allocation0]]
  $region114: #{tpu_custom_call.1} parent=0
    _
  %s20 = ssub.s32 1, %s18
  %s21 = scalar_select 0, %s20, %s18
  $region1: #{tpu_custom_call.1} parent=0
    #allocation5 [shape = 'u8[8192]{0}', space=vmem, size = 0x2000, scoped, tag = 'input window, operand 1, single buffered']
    #allocation6 [shape = 's32[1]{0}', space=sflag, size = 0x4, scoped, tag = 'scoped memory for tpu_custom_call.1']
    #allocation7 [shape = 's32[1]{0}', space=sflag, size = 0x4, scoped, tag = 'scoped memory for tpu_custom_call.1']
    #allocation8 [shape = 'u8[8192]{0}', space=vmem, size = 0x2000, scoped, tag = 'input window, operand 3, single buffered']
    #allocation9 [shape = 's32[1]{0}', space=sflag, size = 0x4, scoped, tag = 'scoped memory for tpu_custom_call.1']
    #allocation10 [shape = 'u8[512]{0}', space=vmem, size = 0x400, scoped, tag = 'input window, operand 4, single buffered']
    #allocation11 [shape = 'u8[512]{0}', space=vmem, size = 0x400, scoped, tag = 'input window, operand 5, single buffered']
    #allocation12 [shape = 's32[1]{0}', space=sflag, size = 0x4, scoped, tag = 'scoped memory for tpu_custom_call.1']
    #allocation13 [shape = 'u8[65536]{0}', space=vmem, size = 0x10000, scoped, tag = 'input window, operand 6, single buffered']
    #allocation14 [shape = 'u8[1024]{0}', space=vmem, size = 0x400, scoped, tag = 'input window, operand 7, single buffered']
    #allocation15 [shape = 's32[1]{0}', space=sflag, size = 0x4, scoped, tag = 'scoped memory for tpu_custom_call.1']
    #allocation16 [shape = 'u8[1024]{0}', space=vmem, size = 0x400, scoped, tag = 'input window, operand 8, single buffered']
    #allocation17 [shape = 'u8[262144]{0}', space=vmem, size = 0x40000, scoped, tag = 'input window, operand 9, single buffered']
    #allocation18 [shape = 's32[1]{0}', space=sflag, size = 0x4, scoped, tag = 'scoped memory for tpu_custom_call.1']
    #allocation19 [shape = 'u8[2048]{0}', space=vmem, size = 0x800, scoped, tag = 'input window, operand 10, single buffered']
    #allocation20 [shape = 'u8[8192]{0}', space=vmem, size = 0x2000, scoped, tag = 'output window, operand 0, single buffered']
    %22 = vsyncpa [#allocation6], 0
    %23 = vsyncpa [#allocation9], 0
    %24 = vsyncpa [#allocation12], 0
    %25 = vsyncpa [#allocation15], 0
    %26 = vsyncpa [#allocation18], 0
    %27 = vsyncpa [#allocation7], 0
    // Predicated region
    $region2: #{tpu_custom_call.1} parent=1 // pred_check
      _
    $region3: #{tpu_custom_call.1} parent=1 // pred_check_branch
      %29 = sbr.rel (0) target = $region5
    $region4: #{tpu_custom_call.1} parent=1 // pred_region
      _
    $region5: #{tpu_custom_call.1} parent=1 // pred_fallthru
      _
    // Predicated region
    $region6: #{tpu_custom_call.1} parent=1 // pred_check
      _
    $region7: #{tpu_custom_call.1} parent=1 // pred_check_branch
      %31 = sbr.rel (0) target = $region9
    $region8: #{tpu_custom_call.1} parent=1 // pred_region
      %s33 = ssub.s32 256, 256
      %34 = vsyncadd [#allocation6], %s33
      %s35 = sshll.u32 [#allocation5], 4
      %s36 = int_to_ptr.vmem [resolvable:$true] %s35
      %41 = dma.hbm_to_vmem [thread:$0]  %s1, 256, %s36, [#allocation6], 128, 128, 8
    $region9: #{tpu_custom_call.1} parent=1 // pred_fallthru
      _
    // Predicated region
    $region10: #{tpu_custom_call.1} parent=1 // pred_check
      _
    $region11: #{tpu_custom_call.1} parent=1 // pred_check_branch
      %43 = sbr.rel (0) target = $region13
    $region12: #{tpu_custom_call.1} parent=1 // pred_region
      _
    $region13: #{tpu_custom_call.1} parent=1 // pred_fallthru
      _
    // Predicated region
    $region14: #{tpu_custom_call.1} parent=1 // pred_check
      _
    $region15: #{tpu_custom_call.1} parent=1 // pred_check_branch
      %45 = sbr.rel (0) target = $region17
    $region16: #{tpu_custom_call.1} parent=1 // pred_region
      %s47 = ssub.s32 256, 256
      %48 = vsyncadd [#allocation9], %s47
      %s49 = sshll.u32 [#allocation8], 4
      %s50 = int_to_ptr.vmem [resolvable:$true] %s49
      %55 = dma.hbm_to_vmem [thread:$0]  %s3, 256, %s50, [#allocation9], 64, 64, 4
    $region17: #{tpu_custom_call.1} parent=1 // pred_fallthru
      _
    // Predicated region
    $region18: #{tpu_custom_call.1} parent=1 // pred_check
      _
    $region19: #{tpu_custom_call.1} parent=1 // pred_check_branch
      %57 = sbr.rel (0) target = $region21
    $region20: #{tpu_custom_call.1} parent=1 // pred_region
      %s59 = ssub.s32 16, 16
      %60 = vsyncadd [#allocation9], %s59
      %s62 = sshll.u32 [#allocation10], 4
      %s63 = int_to_ptr.vmem [resolvable:$true] %s62
      %65 = dma.hbm_to_vmem [thread:$0]  %s4, 16, %s63, [#allocation9]
    $region21: #{tpu_custom_call.1} parent=1 // pred_fallthru
      _
    // Predicated region
    $region22: #{tpu_custom_call.1} parent=1 // pred_check
      _
    $region23: #{tpu_custom_call.1} parent=1 // pred_check_branch
      %67 = sbr.rel (0) target = $region25
    $region24: #{tpu_custom_call.1} parent=1 // pred_region
      %s69 = ssub.s32 16, 16
      %70 = vsyncadd [#allocation12], %s69
      %s72 = sshll.u32 [#allocation11], 4
      %s73 = int_to_ptr.vmem [resolvable:$true] %s72
      %75 = dma.hbm_to_vmem [thread:$0]  %s5, 16, %s73, [#allocation12]
    $region25: #{tpu_custom_call.1} parent=1 // pred_fallthru
      _
    // Predicated region
    $region26: #{tpu_custom_call.1} parent=1 // pred_check
      _
    $region27: #{tpu_custom_call.1} parent=1 // pred_check_branch
      %77 = sbr.rel (0) target = $region29
    $region28: #{tpu_custom_call.1} parent=1 // pred_region
      %s79 = ssub.s32 2048, 2048
      %80 = vsyncadd [#allocation12], %s79
      %s81 = sshll.u32 [#allocation13], 4
      %s82 = int_to_ptr.vmem [resolvable:$true] %s81
      %87 = dma.hbm_to_vmem [thread:$0]  %s6, 2048, %s82, [#allocation12], 128, 128, 8
    $region29: #{tpu_custom_call.1} parent=1 // pred_fallthru
      _
    // Predicated region
    $region30: #{tpu_custom_call.1} parent=1 // pred_check
      _
    $region31: #{tpu_custom_call.1} parent=1 // pred_check_branch
      %89 = sbr.rel (0) target = $region33
    $region32: #{tpu_custom_call.1} parent=1 // pred_region
      %s91 = ssub.s32 32, 32
      %92 = vsyncadd [#allocation15], %s91
      %s94 = sshll.u32 [#allocation14], 4
      %s95 = int_to_ptr.vmem [resolvable:$true] %s94
      %97 = dma.hbm_to_vmem [thread:$0]  %s7, 32, %s95, [#allocation15]
    $region33: #{tpu_custom_call.1} parent=1 // pred_fallthru
      _
    // Predicated region
    $region34: #{tpu_custom_call.1} parent=1 // pred_check
      _
    $region35: #{tpu_custom_call.1} parent=1 // pred_check_branch
      %99 = sbr.rel (0) target = $region37
    $region36: #{tpu_custom_call.1} parent=1 // pred_region
      %s101 = ssub.s32 32, 32
      %102 = vsyncadd [#allocation15], %s101
      %s104 = sshll.u32 [#allocation16], 4
      %s105 = int_to_ptr.vmem [resolvable:$true] %s104
      %107 = dma.hbm_to_vmem [thread:$0]  %s8, 32, %s105, [#allocation15]
    $region37: #{tpu_custom_call.1} parent=1 // pred_fallthru
      _
    // Predicated region
    $region38: #{tpu_custom_call.1} parent=1 // pred_check
      _
    $region39: #{tpu_custom_call.1} parent=1 // pred_check_branch
      %109 = sbr.rel (0) target = $region41
    $region40: #{tpu_custom_call.1} parent=1 // pred_region
      %s111 = ssub.s32 8192, 8192
      %112 = vsyncadd [#allocation18], %s111
      %s113 = sshll.u32 [#allocation17], 4
      %s114 = int_to_ptr.vmem [resolvable:$true] %s113
      %119 = dma.hbm_to_vmem [thread:$0]  %s9, 8192, %s114, [#allocation18], 256, 256, 16
    $region41: #{tpu_custom_call.1} parent=1 // pred_fallthru
      _
    // Predicated region
    $region42: #{tpu_custom_call.1} parent=1 // pred_check
      _
    $region43: #{tpu_custom_call.1} parent=1 // pred_check_branch
      %121 = sbr.rel (0) target = $region45
    $region44: #{tpu_custom_call.1} parent=1 // pred_region
      %s123 = ssub.s32 64, 64
      %124 = vsyncadd [#allocation18], %s123
      %s126 = sshll.u32 [#allocation19], 4
      %s127 = int_to_ptr.vmem [resolvable:$true] %s126
      %129 = dma.hbm_to_vmem [thread:$0]  %s10, 64, %s127, [#allocation18]
    $region45: #{tpu_custom_call.1} parent=1 // pred_fallthru
      _
    // Predicated region
    $region46: #{tpu_custom_call.1} parent=1 // pred_check
      _
    $region47: #{tpu_custom_call.1} parent=1 // pred_check_branch
      %131 = sbr.rel (0) target = $region49
    $region48: #{tpu_custom_call.1} parent=1 // pred_region
      _
    $region49: #{tpu_custom_call.1} parent=1 // pred_fallthru
      _
    // Predicated region
    $region50: #{tpu_custom_call.1} parent=1 // pred_check
      _
    $region51: #{tpu_custom_call.1} parent=1 // pred_check_branch
      %133 = sbr.rel (0) target = $region53
    $region52: #{tpu_custom_call.1} parent=1 // pred_region
      _
    $region53: #{tpu_custom_call.1} parent=1 // pred_fallthru
      _
    // Predicated region
    $region54: #{tpu_custom_call.1} parent=1 // pred_check
      _
    $region55: #{tpu_custom_call.1} parent=1 // pred_check_branch
      %135 = sbr.rel (0) target = $region57
    $region56: #{tpu_custom_call.1} parent=1 // pred_region
      _
    $region57: #{tpu_custom_call.1} parent=1 // pred_fallthru
      _
    // Predicated region
    $region58: #{tpu_custom_call.1} parent=1 // pred_check
      _
    $region59: #{tpu_custom_call.1} parent=1 // pred_check_branch
      %137 = sbr.rel (0) target = $region61
    $region60: #{tpu_custom_call.1} parent=1 // pred_region
      _
    $region61: #{tpu_custom_call.1} parent=1 // pred_fallthru
      _
    // Predicated region
    $region62: #{tpu_custom_call.1} parent=1 // pred_check
      _
    $region63: #{tpu_custom_call.1} parent=1 // pred_check_branch
      %139 = sbr.rel (0) target = $region65
    $region64: #{tpu_custom_call.1} parent=1 // pred_region
      %140 = dma.done [#allocation6], 256
    $region65: #{tpu_custom_call.1} parent=1 // pred_fallthru
      _
    // Predicated region
    $region66: #{tpu_custom_call.1} parent=1 // pred_check
      _
    $region67: #{tpu_custom_call.1} parent=1 // pred_check_branch
      %142 = sbr.rel (0) target = $region69
    $region68: #{tpu_custom_call.1} parent=1 // pred_region
      %143 = dma.done [#allocation9], 256
    $region69: #{tpu_custom_call.1} parent=1 // pred_fallthru
      _
    // Predicated region
    $region70: #{tpu_custom_call.1} parent=1 // pred_check
      _
    $region71: #{tpu_custom_call.1} parent=1 // pred_check_branch
      %145 = sbr.rel (0) target = $region73
    $region72: #{tpu_custom_call.1} parent=1 // pred_region
      %146 = dma.done [#allocation9], 16
    $region73: #{tpu_custom_call.1} parent=1 // pred_fallthru
      _
    // Predicated region
    $region74: #{tpu_custom_call.1} parent=1 // pred_check
      _
    $region75: #{tpu_custom_call.1} parent=1 // pred_check_branch
      %148 = sbr.rel (0) target = $region77
    $region76: #{tpu_custom_call.1} parent=1 // pred_region
      %149 = dma.done [#allocation12], 16
    $region77: #{tpu_custom_call.1} parent=1 // pred_fallthru
      _
    // Predicated region
    $region78: #{tpu_custom_call.1} parent=1 // pred_check
      _
    $region79: #{tpu_custom_call.1} parent=1 // pred_check_branch
      %151 = sbr.rel (0) target = $region81
    $region80: #{tpu_custom_call.1} parent=1 // pred_region
      %152 = dma.done [#allocation12], 2048
    $region81: #{tpu_custom_call.1} parent=1 // pred_fallthru
      _
    // Predicated region
    $region82: #{tpu_custom_call.1} parent=1 // pred_check
      _
    $region83: #{tpu_custom_call.1} parent=1 // pred_check_branch
      %154 = sbr.rel (0) target = $region85
    $region84: #{tpu_custom_call.1} parent=1 // pred_region
      %155 = dma.done [#allocation15], 32
    $region85: #{tpu_custom_call.1} parent=1 // pred_fallthru
      _
    // Predicated region
    $region86: #{tpu_custom_call.1} parent=1 // pred_check
      _
    $region87: #{tpu_custom_call.1} parent=1 // pred_check_branch
      %157 = sbr.rel (0) target = $region89
    $region88: #{tpu_custom_call.1} parent=1 // pred_region
      %158 = dma.done [#allocation15], 32
    $region89: #{tpu_custom_call.1} parent=1 // pred_fallthru
      _
    // Predicated region
    $region90: #{tpu_custom_call.1} parent=1 // pred_check
      _
    $region91: #{tpu_custom_call.1} parent=1 // pred_check_branch
      %160 = sbr.rel (0) target = $region93
    $region92: #{tpu_custom_call.1} parent=1 // pred_region
      %161 = dma.done [#allocation18], 8192
    $region93: #{tpu_custom_call.1} parent=1 // pred_fallthru
      _
    // Predicated region
    $region94: #{tpu_custom_call.1} parent=1 // pred_check
      _
    $region95: #{tpu_custom_call.1} parent=1 // pred_check_branch
      %163 = sbr.rel (0) target = $region97
    $region96: #{tpu_custom_call.1} parent=1 // pred_region
      %164 = dma.done [#allocation18], 64
    $region97: #{tpu_custom_call.1} parent=1 // pred_fallthru
      _
    // Predicated region
    $region98: #{tpu_custom_call.1} parent=1 // pred_check
      _
    $region99: #{tpu_custom_call.1} parent=1 // pred_check_branch
      %167 = sbr.rel target = $region101
    $region100: #{tpu_custom_call.1} parent=1 // pred_region
      %168 = sst [smem:[#allocation23]] [#allocation22]
      %169 = sst [smem:[#allocation24]] [#allocation21]
    $region101: #{tpu_custom_call.1} parent=1 // pred_fallthru
      _
    %171 = shalt.err (0)
    %s173 = sshll.u32 [#allocation2], 4
    %s174 = int_to_ptr.vmem [resolvable:$true] %s173
    %176 = dma.hbm_to_vmem [thread:$0]  %s12, 32768, %s174, [#allocation4]
    %s177 = scalar_lea.sflag [#allocation4], 1
    // Predicated region
    $region102: #{tpu_custom_call.1} parent=1 // pred_check
      _
    $region103: #{tpu_custom_call.1} parent=1 // pred_check_branch
      %179 = sbr.rel target = $region105
    $region104: #{tpu_custom_call.1} parent=1 // pred_region
      %180 = sst [smem:[#allocation23]] [#allocation26]
      %181 = sst [smem:[#allocation24]] [#allocation25]
    $region105: #{tpu_custom_call.1} parent=1 // pred_fallthru
      _
    %183 = shalt.err (0)
    %s185 = sshll.u32 [#allocation3], 4
    %s186 = int_to_ptr.vmem [resolvable:$true] %s185
    %188 = dma.hbm_to_vmem [thread:$0]  %s15, 16384, %s186, %s177
    %v189 = vlaneseq
    %v190 = vand.u32 %v189, 127
    %v191 = vld [vmem:[%s0] sm:$0xff]
    %192 = vset.pattern.permute.xlu0 0
    %193 = vperm.xlu0 %192, %v191
    %v194 = vpop.permute.xlu0 %193
    %vm195 = vcmp.eq.s32.totalorder %v194, %v190
    %v196 = vsel %vm195, 1, 0
    %v197 = vcvt.s32.f32 %v196
    %v198 = vld [vmem:[#allocation5] sm:$0xff]
    %v199 = vld [vmem:[#allocation5 + $0x8] sm:$0x3]
    %v200 = vld [vmem:[%s2] sm:$0xff]
    %v201 = vld [vmem:[#allocation8] sm:$0xf]
    %v202 = vld [vmem:[#allocation8 + $0x4] sm:$0xf]
    %v203 = vld [vmem:[#allocation8 + $0x8] sm:$0xf]
    %v204 = vld [vmem:[#allocation8 + $0xc] sm:$0xf]
    %v205 = vpack.c.bf16 %v200, %v200
    %v210 = vunpack.c.l.b16 %v201
    %v211 = vunpack.c.l.b16 %v202
    %v212 = vunpack.c.l.b16 %v203
    %v213 = vunpack.c.l.b16 %v204
    %v214 = vpack.c.b16 %v211, %v210
    %v215 = vpack.c.b16 %v213, %v212
    %vm218 = vcmask 261120
    %v220 = vsel %vm218, %v205, 0
    %222 = vmatprep.subr.bf16.mxu0 0
    %223 = vmatpush1.bf16.msra.mxu0 0
    %224 = vmatprep.subr.bf16.mxu0 0
    %225 = vmatpush1.bf16.msra.mxu0 0
    %226 = vmatprep.subr.bf16.mxu0 0
    %227 = vmatpush1.bf16.msra.mxu0 0
    %228 = vmatprep.subr.bf16.mxu0 0
    %229 = vmatpush1.bf16.msra.mxu0 0
    %230 = vmatprep.subr.bf16.mxu0 0
    %231 = vmatpush1.bf16.msra.mxu0 0
    %232 = vmatprep.subr.bf16.mxu0 0
    %233 = vmatpush1.bf16.msra.mxu0 0
    %234 = vmatprep.subr.bf16.mxu0 0
    %235 = vmatpush1.bf16.msra.mxu0 %v215
    %236 = vmatprep.subr.bf16.mxu0 0
    %237 = vmatpush1.bf16.msra.mxu0 %v214
    %238 = vmatprep.subr.bf16.mxu0 0
    %239 = vmatpush2.bf16.msra.mxu0 0
    %240 = vmatprep.subr.bf16.mxu0 0
    %241 = vmatpush2.bf16.msra.mxu0 0
    %242 = vmatprep.subr.bf16.mxu0 0
    %243 = vmatpush2.bf16.msra.mxu0 0
    %244 = vmatprep.subr.bf16.mxu0 0
    %245 = vmatpush2.bf16.msra.mxu0 0
    %246 = vmatprep.subr.bf16.mxu0 0
    %247 = vmatpush2.bf16.msra.mxu0 0
    %248 = vmatprep.subr.bf16.mxu0 0
    %249 = vmatpush2.bf16.msra.mxu0 0
    %250 = vmatprep.subr.bf16.mxu0 0
    %251 = vmatpush2.bf16.msra.mxu0 0
    %252 = vmatprep.subr.bf16.mxu0 0
    %253 = vmatpush2.bf16.msra.mxu0 0
    %254 = vmatprep.mubr.bf16.mxu0 0
    %255 = vmatmul.mubr.bf16.gmra.mxu0 %v220
    %v256 = vpop.f32.mrf.mxu0
    %v257 = vadd.f32 0.0, %v256
    %v258 = vpop.f32.mrf.mxu0
    %v259 = vpop.f32.mrf.mxu0
    %v260 = vpop.f32.mrf.mxu0
    %261 = vdwg.mxu0
    %vm262 = vcmask 80896
    %v264 = vsel %vm262, %v197, 0
    %vm266 = vcmask 1041408
    %v268 = vsel %vm266, %v199, 0
    %270 = vmatprep.subr.mxu0 0.0
    %271 = vmatpush1.msra.mxu0 0.0
    %272 = vmatprep.subr.mxu0 0.0
    %273 = vmatpush1.msra.mxu0 0.0
    %274 = vmatprep.subr.mxu0 0.0
    %275 = vmatpush1.msra.mxu0 0.0
    %276 = vmatprep.subr.mxu0 0.0
    %277 = vmatpush1.msra.mxu0 0.0
    %278 = vmatprep.subr.mxu0 0.0
    %279 = vmatpush1.msra.mxu0 0.0
    %280 = vmatprep.subr.mxu0 0.0
    %281 = vmatpush1.msra.mxu0 0.0
    %282 = vmatprep.subr.mxu0 0.0
    %283 = vmatpush1.msra.mxu0 0.0
    %284 = vmatprep.subr.mxu0 0.0
    %285 = vmatpush1.msra.mxu0 0.0
    %286 = vmatprep.subr.mxu0 0.0
    %287 = vmatpush1.msra.mxu0 0.0
    %288 = vmatprep.subr.mxu0 0.0
    %289 = vmatpush1.msra.mxu0 0.0
    %290 = vmatprep.subr.mxu0 0.0
    %291 = vmatpush1.msra.mxu0 0.0
    %292 = vmatprep.subr.mxu0 0.0
    %293 = vmatpush1.msra.mxu0 0.0
    %294 = vmatprep.subr.mxu0 0.0
    %295 = vmatpush1.msra.mxu0 0.0
    %296 = vmatprep.subr.mxu0 0.0
    %297 = vmatpush1.msra.mxu0 0.0
    %298 = vmatprep.subr.mxu0 0.0
    %299 = vmatpush1.msra.mxu0 %v268
    %300 = vmatprep.subr.mxu0 0.0
    %301 = vmatpush1.msra.mxu0 %v198
    %302 = vmatprep.subr.mxu0 0.0
    %303 = vmatpush2.msra.mxu0 0.0
    %304 = vmatprep.subr.mxu0 0.0
    %305 = vmatpush2.msra.mxu0 0.0
    %306 = vmatprep.subr.mxu0 0.0
    %307 = vmatpush2.msra.mxu0 0.0
    %308 = vmatprep.subr.mxu0 0.0
    %309 = vmatpush2.msra.mxu0 0.0
    %310 = vmatprep.subr.mxu0 0.0
    %311 = vmatpush2.msra.mxu0 0.0
    %312 = vmatprep.subr.mxu0 0.0
    %313 = vmatpush2.msra.mxu0 0.0
    %314 = vmatprep.subr.mxu0 0.0
    %315 = vmatpush2.msra.mxu0 0.0
    %316 = vmatprep.subr.mxu0 0.0
    %317 = vmatpush2.msra.mxu0 0.0
    %318 = vmatprep.subr.mxu0 0.0
    %319 = vmatpush2.msra.mxu0 0.0
    %320 = vmatprep.subr.mxu0 0.0
    %321 = vmatpush2.msra.mxu0 0.0
    %322 = vmatprep.subr.mxu0 0.0
    %323 = vmatpush2.msra.mxu0 0.0
    %324 = vmatprep.subr.mxu0 0.0
    %325 = vmatpush2.msra.mxu0 0.0
    %326 = vmatprep.subr.mxu0 0.0
    %327 = vmatpush2.msra.mxu0 0.0
    %328 = vmatprep.subr.mxu0 0.0
    %329 = vmatpush2.msra.mxu0 0.0
    %330 = vmatprep.subr.mxu0 0.0
    %331 = vmatpush2.msra.mxu0 0.0
    %332 = vmatprep.subr.mxu0 0.0
    %333 = vmatpush2.msra.mxu0 0.0
    %334 = vmatprep.mubr.f32.mxu0 0.0
    %335 = vmatmul.mubr.f32.gmra.mxu0 %v264
    %v336 = vpop.f32.mrf.mxu0
    %v337 = vadd.f32 %v257, %v336
    %v338 = vpop.f32.mrf.mxu0
    %339 = vdwg.mxu0
    %v340 = vld [vmem:[#allocation10] sm:$0x1]
    %v341 = vld [vmem:[#allocation11] sm:$0x1]
    %v342 = vrot.slane %v337, 4
    %v343 = vadd.f32 %v337, %v342
    %v344 = vrot.slane %v343, 2
    %v345 = vadd.f32 %v343, %v344
    %v346 = vrot.slane %v345, 1
    %v347 = vadd.f32 %v345, %v346
    %v348 = vrcp.pop 8.0
    %v349 = vmul.f32 %v347, %v348
    %v350 = vmul.f32 %v337, %v337
    %v351 = vrot.slane %v350, 4
    %v352 = vadd.f32 %v350, %v351
    %v353 = vrot.slane %v352, 2
    %v354 = vadd.f32 %v352, %v353
    %v355 = vrot.slane %v354, 1
    %v356 = vadd.f32 %v354, %v355
    %v357 = vmul.f32 %v356, %v348
    %v358 = vmul.f32 %v349, %v349
    %v359 = vsub.f32 %v357, %v358
    %v360 = vmax.f32 %v359, 0.0
    %v361 = vadd.f32 %v360, 0.8
    %v362 = vrsqrt.pop %v361
    %v363 = vmul.f32 %v340, %v362
    %v365 = vlaneseq
    %v366 = vshrl.u32 %v365, 7
    %v367 = vsub.s32 0, %v366
    %v368 = vrot.slane %v363, %v367
    %v370 = vmul.f32 %v337, %v368
    %v371 = vmul.f32 %v349, %v363
    %v372 = vsub.f32 %v341, %v371
    %v374 = vlaneseq
    %v375 = vshrl.u32 %v374, 7
    %v376 = vsub.s32 0, %v375
    %v377 = vrot.slane %v372, %v376
    %v379 = vadd.f32 %v370, %v377
    %vm380 = vcmp.ge.f32.partialorder %v379, 0.0
    %v381 = vmul.f32 %v379, 0.2
    %v382 = vsel %vm380, %v379, %v381
    %v383 = vld [vmem:[#allocation13] sm:$0xff]
    %v384 = vld [vmem:[#allocation13 + $0x8] sm:$0xff]
    %v385 = vld [vmem:[#allocation13 + $0x10] sm:$0xff]
    %v386 = vld [vmem:[#allocation13 + $0x18] sm:$0xff]
    %v387 = vld [vmem:[#allocation13 + $0x20] sm:$0xff]
    %v388 = vld [vmem:[#allocation13 + $0x28] sm:$0xff]
    %v389 = vld [vmem:[#allocation13 + $0x30] sm:$0xff]
    %v390 = vld [vmem:[#allocation13 + $0x38] sm:$0xff]
    %v391 = vld [vmem:[#allocation13 + $0x40] sm:$0xff]
    %v392 = vld [vmem:[#allocation13 + $0x48] sm:$0xff]
    %v393 = vld [vmem:[#allocation13 + $0x50] sm:$0xff]
    %v394 = vld [vmem:[#allocation13 + $0x58] sm:$0xff]
    %v395 = vld [vmem:[#allocation13 + $0x60] sm:$0xff]
    %v396 = vld [vmem:[#allocation13 + $0x68] sm:$0xff]
    %v397 = vld [vmem:[#allocation13 + $0x70] sm:$0xff]
    %v398 = vld [vmem:[#allocation13 + $0x78] sm:$0xff]
    %v399 = vpack.c.bf16 %v382, %v382
    %v416 = vunpack.c.l.b16 %v383
    %v417 = vunpack.c.h.b16 %v383
    %v418 = vunpack.c.l.b16 %v384
    %v419 = vunpack.c.h.b16 %v384
    %v420 = vunpack.c.l.b16 %v385
    %v421 = vunpack.c.h.b16 %v385
    %v422 = vunpack.c.l.b16 %v386
    %v423 = vunpack.c.h.b16 %v386
    %v424 = vunpack.c.l.b16 %v387
    %v425 = vunpack.c.h.b16 %v387
    %v426 = vunpack.c.l.b16 %v388
    %v427 = vunpack.c.h.b16 %v388
    %v428 = vunpack.c.l.b16 %v389
    %v429 = vunpack.c.h.b16 %v389
    %v430 = vunpack.c.l.b16 %v390
    %v431 = vunpack.c.h.b16 %v390
    %v432 = vunpack.c.l.b16 %v391
    %v433 = vunpack.c.h.b16 %v391
    %v434 = vunpack.c.l.b16 %v392
    %v435 = vunpack.c.h.b16 %v392
    %v436 = vunpack.c.l.b16 %v393
    %v437 = vunpack.c.h.b16 %v393
    %v438 = vunpack.c.l.b16 %v394
    %v439 = vunpack.c.h.b16 %v394
    %v440 = vunpack.c.l.b16 %v395
    %v441 = vunpack.c.h.b16 %v395
    %v442 = vunpack.c.l.b16 %v396
    %v443 = vunpack.c.h.b16 %v396
    %v444 = vunpack.c.l.b16 %v397
    %v445 = vunpack.c.h.b16 %v397
    %v446 = vunpack.c.l.b16 %v398
    %v447 = vunpack.c.h.b16 %v398
    %v448 = vpack.c.b16 %v418, %v416
    %v449 = vpack.c.b16 %v419, %v417
    %v450 = vpack.c.b16 %v422, %v420
    %v451 = vpack.c.b16 %v423, %v421
    %v452 = vpack.c.b16 %v426, %v424
    %v453 = vpack.c.b16 %v427, %v425
    %v454 = vpack.c.b16 %v430, %v428
    %v455 = vpack.c.b16 %v431, %v429
    %v456 = vpack.c.b16 %v434, %v432
    %v457 = vpack.c.b16 %v435, %v433
    %v458 = vpack.c.b16 %v438, %v436
    %v459 = vpack.c.b16 %v439, %v437
    %v460 = vpack.c.b16 %v442, %v440
    %v461 = vpack.c.b16 %v443, %v441
    %v462 = vpack.c.b16 %v446, %v444
    %v463 = vpack.c.b16 %v447, %v445
    %480 = vmatprep.subr.bf16.mxu0 %v463
    %481 = vmatpush1.bf16.msra.mxu0 %v462
    %482 = vmatprep.subr.bf16.mxu0 %v461
    %483 = vmatpush1.bf16.msra.mxu0 %v460
    %484 = vmatprep.subr.bf16.mxu0 %v459
    %485 = vmatpush1.bf16.msra.mxu0 %v458
    %486 = vmatprep.subr.bf16.mxu0 %v457
    %487 = vmatpush1.bf16.msra.mxu0 %v456
    %488 = vmatprep.subr.bf16.mxu0 %v455
    %489 = vmatpush1.bf16.msra.mxu0 %v454
    %490 = vmatprep.subr.bf16.mxu0 %v453
    %491 = vmatpush1.bf16.msra.mxu0 %v452
    %492 = vmatprep.subr.bf16.mxu0 %v451
    %493 = vmatpush1.bf16.msra.mxu0 %v450
    %494 = vmatprep.subr.bf16.mxu0 %v449
    %495 = vmatpush1.bf16.msra.mxu0 %v448
    %496 = vmatprep.subr.bf16.mxu0 0
    %497 = vmatpush2.bf16.msra.mxu0 0
    %498 = vmatprep.subr.bf16.mxu0 0
    %499 = vmatpush2.bf16.msra.mxu0 0
    %500 = vmatprep.subr.bf16.mxu0 0
    %501 = vmatpush2.bf16.msra.mxu0 0
    %502 = vmatprep.subr.bf16.mxu0 0
    %503 = vmatpush2.bf16.msra.mxu0 0
    %504 = vmatprep.subr.bf16.mxu0 0
    %505 = vmatpush2.bf16.msra.mxu0 0
    %506 = vmatprep.subr.bf16.mxu0 0
    %507 = vmatpush2.bf16.msra.mxu0 0
    %508 = vmatprep.subr.bf16.mxu0 0
    %509 = vmatpush2.bf16.msra.mxu0 0
    %510 = vmatprep.subr.bf16.mxu0 0
    %511 = vmatpush2.bf16.msra.mxu0 0
    %512 = vmatprep.mubr.bf16.mxu0 0
    %513 = vmatmul.mubr.bf16.gmra.mxu0 %v399
    %v514 = vpop.f32.mrf.mxu0
    %v515 = vadd.f32 0.0, %v514
    %v516 = vpop.f32.mrf.mxu0
    %v517 = vadd.f32 0.0, %v516
    %v518 = vpop.f32.mrf.mxu0
    %v519 = vpop.f32.mrf.mxu0
    %520 = vdwg.mxu0
    %v521 = vld [vmem:[#allocation14] sm:$0x3]
    %v522 = vld [vmem:[#allocation16] sm:$0x3]
    %v523 = vrot.slane %v515, 4
    %v524 = vadd.f32 %v515, %v523
    %v525 = vrot.slane %v524, 2
    %v526 = vadd.f32 %v524, %v525
    %v527 = vrot.slane %v526, 1
    %v528 = vadd.f32 %v526, %v527
    %v529 = vrot.slane %v517, 4
    %v530 = vadd.f32 %v517, %v529
    %v531 = vrot.slane %v530, 2
    %v532 = vadd.f32 %v530, %v531
    %v533 = vrot.slane %v532, 1
    %v534 = vadd.f32 %v532, %v533
    %v535 = vmul.f32 %v528, %v348
    %v536 = vmul.f32 %v534, %v348
    %v537 = vmul.f32 %v515, %v515
    %v538 = vmul.f32 %v517, %v517
    %v539 = vrot.slane %v537, 4
    %v540 = vadd.f32 %v537, %v539
    %v541 = vrot.slane %v540, 2
    %v542 = vadd.f32 %v540, %v541
    %v543 = vrot.slane %v542, 1
    %v544 = vadd.f32 %v542, %v543
    %v545 = vrot.slane %v538, 4
    %v546 = vadd.f32 %v538, %v545
    %v547 = vrot.slane %v546, 2
    %v548 = vadd.f32 %v546, %v547
    %v549 = vrot.slane %v548, 1
    %v550 = vadd.f32 %v548, %v549
    %v551 = vmul.f32 %v544, %v348
    %v552 = vmul.f32 %v550, %v348
    %v553 = vmul.f32 %v535, %v535
    %v554 = vmul.f32 %v536, %v536
    %v555 = vsub.f32 %v551, %v553
    %v556 = vsub.f32 %v552, %v554
    %v557 = vmax.f32 %v555, 0.0
    %v558 = vmax.f32 %v556, 0.0
    %v559 = vadd.f32 %v557, 0.8
    %v560 = vadd.f32 %v558, 0.8
    %v561 = vrsqrt.pop %v559
    %v562 = vrsqrt.pop %v560
    %v565 = vcombine.low %v561, %v562
    %v567 = vunpack.c.l.s4 1966171168
    %v568 = vunpack.c.0.s8 %v567
    %v569 = vlaneseq
    %v570 = vshrl.u32 %v569, 7
    %v571 = vsub.s32 %v568, %v570
    %v572 = vrot.slane %v565, %v571
    %v574 = vunpack.c.l.s4 1966171168
    %v575 = vunpack.c.0.s8 %v574
    %v576 = vlaneseq
    %v577 = vshrl.u32 %v576, 7
    %v578 = vsub.s32 %v575, %v577
    %v579 = vrot.slane %v572, %v578
    %v581 = vmul.f32 %v521, %v579
    %v583 = vlaneseq
    %v584 = vshrl.u32 %v583, 7
    %v585 = vsub.s32 0, %v584
    %v586 = vrot.slane %v581, %v585
    %v587 = vlaneseq
    %v588 = vshrl.u32 %v587, 7
    %v589 = vsub.s32 1, %v588
    %v590 = vrot.slane %v581, %v589
    %v593 = vmul.f32 %v515, %v586
    %v594 = vmul.f32 %v517, %v590
    %v595 = vmul.f32 %v535, %v586
    %v596 = vmul.f32 %v536, %v590
    %v599 = vcombine.low %v595, %v596
    %v601 = vunpack.c.l.s4 1966171168
    %v602 = vunpack.c.0.s8 %v601
    %v603 = vlaneseq
    %v604 = vshrl.u32 %v603, 7
    %v605 = vsub.s32 %v602, %v604
    %v606 = vrot.slane %v599, %v605
    %v608 = vunpack.c.l.s4 1966171168
    %v609 = vunpack.c.0.s8 %v608
    %v610 = vlaneseq
    %v611 = vshrl.u32 %v610, 7
    %v612 = vsub.s32 %v609, %v611
    %v613 = vrot.slane %v606, %v612
    %v615 = vsub.f32 %v522, %v613
    %v617 = vlaneseq
    %v618 = vshrl.u32 %v617, 7
    %v619 = vsub.s32 0, %v618
    %v620 = vrot.slane %v615, %v619
    %v621 = vlaneseq
    %v622 = vshrl.u32 %v621, 7
    %v623 = vsub.s32 1, %v622
    %v624 = vrot.slane %v615, %v623
    %v627 = vadd.f32 %v593, %v620
    %v628 = vadd.f32 %v594, %v624
    %vm629 = vcmp.ge.f32.partialorder %v627, 0.0
    %vm630 = vcmp.ge.f32.partialorder %v628, 0.0
    %v631 = vmul.f32 %v627, 0.2
    %v632 = vmul.f32 %v628, 0.2
    %v633 = vsel %vm629, %v627, %v631
    %v634 = vsel %vm630, %v628, %v632
    %v635 = vld [vmem:[#allocation17] sm:$0xff]
    %v636 = vld [vmem:[#allocation17 + $0x8] sm:$0xff]
    %v637 = vld [vmem:[#allocation17 + $0x10] sm:$0xff]
    %v638 = vld [vmem:[#allocation17 + $0x18] sm:$0xff]
    %v639 = vld [vmem:[#allocation17 + $0x20] sm:$0xff]
    %v640 = vld [vmem:[#allocation17 + $0x28] sm:$0xff]
    %v641 = vld [vmem:[#allocation17 + $0x30] sm:$0xff]
    %v642 = vld [vmem:[#allocation17 + $0x38] sm:$0xff]
    %v643 = vld [vmem:[#allocation17 + $0x40] sm:$0xff]
    %v644 = vld [vmem:[#allocation17 + $0x48] sm:$0xff]
    %v645 = vld [vmem:[#allocation17 + $0x50] sm:$0xff]
    %v646 = vld [vmem:[#allocation17 + $0x58] sm:$0xff]
    %v647 = vld [vmem:[#allocation17 + $0x60] sm:$0xff]
    %v648 = vld [vmem:[#allocation17 + $0x68] sm:$0xff]
    %v649 = vld [vmem:[#allocation17 + $0x70] sm:$0xff]
    %v650 = vld [vmem:[#allocation17 + $0x78] sm:$0xff]
    %v651 = vld [vmem:[#allocation17 + $0x80] sm:$0xff]
    %v652 = vld [vmem:[#allocation17 + $0x88] sm:$0xff]
    %v653 = vld [vmem:[#allocation17 + $0x90] sm:$0xff]
    %v654 = vld [vmem:[#allocation17 + $0x98] sm:$0xff]
    %v655 = vld [vmem:[#allocation17 + $0xa0] sm:$0xff]
    %v656 = vld [vmem:[#allocation17 + $0xa8] sm:$0xff]
    %v657 = vld [vmem:[#allocation17 + $0xb0] sm:$0xff]
    %v658 = vld [vmem:[#allocation17 + $0xb8] sm:$0xff]
    %v659 = vld [vmem:[#allocation17 + $0xc0] sm:$0xff]
    %v660 = vld [vmem:[#allocation17 + $0xc8] sm:$0xff]
    %v661 = vld [vmem:[#allocation17 + $0xd0] sm:$0xff]
    %v662 = vld [vmem:[#allocation17 + $0xd8] sm:$0xff]
    %v663 = vld [vmem:[#allocation17 + $0xe0] sm:$0xff]
    %v664 = vld [vmem:[#allocation17 + $0xe8] sm:$0xff]
    %v665 = vld [vmem:[#allocation17 + $0xf0] sm:$0xff]
    %v666 = vld [vmem:[#allocation17 + $0xf8] sm:$0xff]
    %v667 = vld [vmem:[#allocation17 + $0x100] sm:$0xff]
    %v668 = vld [vmem:[#allocation17 + $0x108] sm:$0xff]
    %v669 = vld [vmem:[#allocation17 + $0x110] sm:$0xff]
    %v670 = vld [vmem:[#allocation17 + $0x118] sm:$0xff]
    %v671 = vld [vmem:[#allocation17 + $0x120] sm:$0xff]
    %v672 = vld [vmem:[#allocation17 + $0x128] sm:$0xff]
    %v673 = vld [vmem:[#allocation17 + $0x130] sm:$0xff]
    %v674 = vld [vmem:[#allocation17 + $0x138] sm:$0xff]
    %v675 = vld [vmem:[#allocation17 + $0x140] sm:$0xff]
    %v676 = vld [vmem:[#allocation17 + $0x148] sm:$0xff]
    %v677 = vld [vmem:[#allocation17 + $0x150] sm:$0xff]
    %v678 = vld [vmem:[#allocation17 + $0x158] sm:$0xff]
    %v679 = vld [vmem:[#allocation17 + $0x160] sm:$0xff]
    %v680 = vld [vmem:[#allocation17 + $0x168] sm:$0xff]
    %v681 = vld [vmem:[#allocation17 + $0x170] sm:$0xff]
    %v682 = vld [vmem:[#allocation17 + $0x178] sm:$0xff]
    %v683 = vld [vmem:[#allocation17 + $0x180] sm:$0xff]
    %v684 = vld [vmem:[#allocation17 + $0x188] sm:$0xff]
    %v685 = vld [vmem:[#allocation17 + $0x190] sm:$0xff]
    %v686 = vld [vmem:[#allocation17 + $0x198] sm:$0xff]
    %v687 = vld [vmem:[#allocation17 + $0x1a0] sm:$0xff]
    %v688 = vld [vmem:[#allocation17 + $0x1a8] sm:$0xff]
    %v689 = vld [vmem:[#allocation17 + $0x1b0] sm:$0xff]
    %v690 = vld [vmem:[#allocation17 + $0x1b8] sm:$0xff]
    %v691 = vld [vmem:[#allocation17 + $0x1c0] sm:$0xff]
    %v692 = vld [vmem:[#allocation17 + $0x1c8] sm:$0xff]
    %v693 = vld [vmem:[#allocation17 + $0x1d0] sm:$0xff]
    %v694 = vld [vmem:[#allocation17 + $0x1d8] sm:$0xff]
    %v695 = vld [vmem:[#allocation17 + $0x1e0] sm:$0xff]
    %v696 = vld [vmem:[#allocation17 + $0x1e8] sm:$0xff]
    %v697 = vld [vmem:[#allocation17 + $0x1f0] sm:$0xff]
    %v698 = vld [vmem:[#allocation17 + $0x1f8] sm:$0xff]
    %v699 = vpack.c.bf16 %v633, %v633
    %v700 = vpack.c.bf16 %v634, %v634
    %v765 = vunpack.c.l.b16 %v635
    %v766 = vunpack.c.h.b16 %v635
    %v767 = vunpack.c.l.b16 %v636
    %v768 = vunpack.c.h.b16 %v636
    %v769 = vunpack.c.l.b16 %v637
    %v770 = vunpack.c.h.b16 %v637
    %v771 = vunpack.c.l.b16 %v638
    %v772 = vunpack.c.h.b16 %v638
    %v773 = vunpack.c.l.b16 %v639
    %v774 = vunpack.c.h.b16 %v639
    %v775 = vunpack.c.l.b16 %v640
    %v776 = vunpack.c.h.b16 %v640
    %v777 = vunpack.c.l.b16 %v641
    %v778 = vunpack.c.h.b16 %v641
    %v779 = vunpack.c.l.b16 %v642
    %v780 = vunpack.c.h.b16 %v642
    %v781 = vunpack.c.l.b16 %v643
    %v782 = vunpack.c.h.b16 %v643
    %v783 = vunpack.c.l.b16 %v644
    %v784 = vunpack.c.h.b16 %v644
    %v785 = vunpack.c.l.b16 %v645
    %v786 = vunpack.c.h.b16 %v645
    %v787 = vunpack.c.l.b16 %v646
    %v788 = vunpack.c.h.b16 %v646
    %v789 = vunpack.c.l.b16 %v647
    %v790 = vunpack.c.h.b16 %v647
    %v791 = vunpack.c.l.b16 %v648
    %v792 = vunpack.c.h.b16 %v648
    %v793 = vunpack.c.l.b16 %v649
    %v794 = vunpack.c.h.b16 %v649
    %v795 = vunpack.c.l.b16 %v650
    %v796 = vunpack.c.h.b16 %v650
    %v797 = vunpack.c.l.b16 %v651
    %v798 = vunpack.c.h.b16 %v651
    %v799 = vunpack.c.l.b16 %v652
    %v800 = vunpack.c.h.b16 %v652
    %v801 = vunpack.c.l.b16 %v653
    %v802 = vunpack.c.h.b16 %v653
    %v803 = vunpack.c.l.b16 %v654
    %v804 = vunpack.c.h.b16 %v654
    %v805 = vunpack.c.l.b16 %v655
    %v806 = vunpack.c.h.b16 %v655
    %v807 = vunpack.c.l.b16 %v656
    %v808 = vunpack.c.h.b16 %v656
    %v809 = vunpack.c.l.b16 %v657
    %v810 = vunpack.c.h.b16 %v657
    %v811 = vunpack.c.l.b16 %v658
    %v812 = vunpack.c.h.b16 %v658
    %v813 = vunpack.c.l.b16 %v659
    %v814 = vunpack.c.h.b16 %v659
    %v815 = vunpack.c.l.b16 %v660
    %v816 = vunpack.c.h.b16 %v660
    %v817 = vunpack.c.l.b16 %v661
    %v818 = vunpack.c.h.b16 %v661
    %v819 = vunpack.c.l.b16 %v662
    %v820 = vunpack.c.h.b16 %v662
    %v821 = vunpack.c.l.b16 %v663
    %v822 = vunpack.c.h.b16 %v663
    %v823 = vunpack.c.l.b16 %v664
    %v824 = vunpack.c.h.b16 %v664
    %v825 = vunpack.c.l.b16 %v665
    %v826 = vunpack.c.h.b16 %v665
    %v827 = vunpack.c.l.b16 %v666
    %v828 = vunpack.c.h.b16 %v666
    %v829 = vunpack.c.l.b16 %v667
    %v830 = vunpack.c.h.b16 %v667
    %v831 = vunpack.c.l.b16 %v668
    %v832 = vunpack.c.h.b16 %v668
    %v833 = vunpack.c.l.b16 %v669
    %v834 = vunpack.c.h.b16 %v669
    %v835 = vunpack.c.l.b16 %v670
    %v836 = vunpack.c.h.b16 %v670
    %v837 = vunpack.c.l.b16 %v671
    %v838 = vunpack.c.h.b16 %v671
    %v839 = vunpack.c.l.b16 %v672
    %v840 = vunpack.c.h.b16 %v672
    %v841 = vunpack.c.l.b16 %v673
    %v842 = vunpack.c.h.b16 %v673
    %v843 = vunpack.c.l.b16 %v674
    %v844 = vunpack.c.h.b16 %v674
    %v845 = vunpack.c.l.b16 %v675
    %v846 = vunpack.c.h.b16 %v675
    %v847 = vunpack.c.l.b16 %v676
    %v848 = vunpack.c.h.b16 %v676
    %v849 = vunpack.c.l.b16 %v677
    %v850 = vunpack.c.h.b16 %v677
    %v851 = vunpack.c.l.b16 %v678
    %v852 = vunpack.c.h.b16 %v678
    %v853 = vunpack.c.l.b16 %v679
    %v854 = vunpack.c.h.b16 %v679
    %v855 = vunpack.c.l.b16 %v680
    %v856 = vunpack.c.h.b16 %v680
    %v857 = vunpack.c.l.b16 %v681
    %v858 = vunpack.c.h.b16 %v681
    %v859 = vunpack.c.l.b16 %v682
    %v860 = vunpack.c.h.b16 %v682
    %v861 = vunpack.c.l.b16 %v683
    %v862 = vunpack.c.h.b16 %v683
    %v863 = vunpack.c.l.b16 %v684
    %v864 = vunpack.c.h.b16 %v684
    %v865 = vunpack.c.l.b16 %v685
    %v866 = vunpack.c.h.b16 %v685
    %v867 = vunpack.c.l.b16 %v686
    %v868 = vunpack.c.h.b16 %v686
    %v869 = vunpack.c.l.b16 %v687
    %v870 = vunpack.c.h.b16 %v687
    %v871 = vunpack.c.l.b16 %v688
    %v872 = vunpack.c.h.b16 %v688
    %v873 = vunpack.c.l.b16 %v689
    %v874 = vunpack.c.h.b16 %v689
    %v875 = vunpack.c.l.b16 %v690
    %v876 = vunpack.c.h.b16 %v690
    %v877 = vunpack.c.l.b16 %v691
    %v878 = vunpack.c.h.b16 %v691
    %v879 = vunpack.c.l.b16 %v692
    %v880 = vunpack.c.h.b16 %v692
    %v881 = vunpack.c.l.b16 %v693
    %v882 = vunpack.c.h.b16 %v693
    %v883 = vunpack.c.l.b16 %v694
    %v884 = vunpack.c.h.b16 %v694
    %v885 = vunpack.c.l.b16 %v695
    %v886 = vunpack.c.h.b16 %v695
    %v887 = vunpack.c.l.b16 %v696
    %v888 = vunpack.c.h.b16 %v696
    %v889 = vunpack.c.l.b16 %v697
    %v890 = vunpack.c.h.b16 %v697
    %v891 = vunpack.c.l.b16 %v698
    %v892 = vunpack.c.h.b16 %v698
    %v893 = vpack.c.b16 %v769, %v765
    %v894 = vpack.c.b16 %v770, %v766
    %v895 = vpack.c.b16 %v771, %v767
    %v896 = vpack.c.b16 %v772, %v768
    %v897 = vpack.c.b16 %v777, %v773
    %v898 = vpack.c.b16 %v778, %v774
    %v899 = vpack.c.b16 %v779, %v775
    %v900 = vpack.c.b16 %v780, %v776
    %v901 = vpack.c.b16 %v785, %v781
    %v902 = vpack.c.b16 %v786, %v782
    %v903 = vpack.c.b16 %v787, %v783
    %v904 = vpack.c.b16 %v788, %v784
    %v905 = vpack.c.b16 %v793, %v789
    %v906 = vpack.c.b16 %v794, %v790
    %v907 = vpack.c.b16 %v795, %v791
    %v908 = vpack.c.b16 %v796, %v792
    %v909 = vpack.c.b16 %v801, %v797
    %v910 = vpack.c.b16 %v802, %v798
    %v911 = vpack.c.b16 %v803, %v799
    %v912 = vpack.c.b16 %v804, %v800
    %v913 = vpack.c.b16 %v809, %v805
    %v914 = vpack.c.b16 %v810, %v806
    %v915 = vpack.c.b16 %v811, %v807
    %v916 = vpack.c.b16 %v812, %v808
    %v917 = vpack.c.b16 %v817, %v813
    %v918 = vpack.c.b16 %v818, %v814
    %v919 = vpack.c.b16 %v819, %v815
    %v920 = vpack.c.b16 %v820, %v816
    %v921 = vpack.c.b16 %v825, %v821
    %v922 = vpack.c.b16 %v826, %v822
    %v923 = vpack.c.b16 %v827, %v823
    %v924 = vpack.c.b16 %v828, %v824
    %v925 = vpack.c.b16 %v833, %v829
    %v926 = vpack.c.b16 %v834, %v830
    %v927 = vpack.c.b16 %v835, %v831
    %v928 = vpack.c.b16 %v836, %v832
    %v929 = vpack.c.b16 %v841, %v837
    %v930 = vpack.c.b16 %v842, %v838
    %v931 = vpack.c.b16 %v843, %v839
    %v932 = vpack.c.b16 %v844, %v840
    %v933 = vpack.c.b16 %v849, %v845
    %v934 = vpack.c.b16 %v850, %v846
    %v935 = vpack.c.b16 %v851, %v847
    %v936 = vpack.c.b16 %v852, %v848
    %v937 = vpack.c.b16 %v857, %v853
    %v938 = vpack.c.b16 %v858, %v854
    %v939 = vpack.c.b16 %v859, %v855
    %v940 = vpack.c.b16 %v860, %v856
    %v941 = vpack.c.b16 %v865, %v861
    %v942 = vpack.c.b16 %v866, %v862
    %v943 = vpack.c.b16 %v867, %v863
    %v944 = vpack.c.b16 %v868, %v864
    %v945 = vpack.c.b16 %v873, %v869
    %v946 = vpack.c.b16 %v874, %v870
    %v947 = vpack.c.b16 %v875, %v871
    %v948 = vpack.c.b16 %v876, %v872
    %v949 = vpack.c.b16 %v881, %v877
    %v950 = vpack.c.b16 %v882, %v878
    %v951 = vpack.c.b16 %v883, %v879
    %v952 = vpack.c.b16 %v884, %v880
    %v953 = vpack.c.b16 %v889, %v885
    %v954 = vpack.c.b16 %v890, %v886
    %v955 = vpack.c.b16 %v891, %v887
    %v956 = vpack.c.b16 %v892, %v888
    %1021 = vmatprep.subr.bf16.mxu0 %v922
    %1022 = vmatpush1.bf16.msra.mxu0 %v921
    %1023 = vmatprep.subr.bf16.mxu0 %v918
    %1024 = vmatpush1.bf16.msra.mxu0 %v917
    %1025 = vmatprep.subr.bf16.mxu0 %v914
    %1026 = vmatpush1.bf16.msra.mxu0 %v913
    %1027 = vmatprep.subr.bf16.mxu0 %v910
    %1028 = vmatpush1.bf16.msra.mxu0 %v909
    %1029 = vmatprep.subr.bf16.mxu0 %v906
    %1030 = vmatpush1.bf16.msra.mxu0 %v905
    %1031 = vmatprep.subr.bf16.mxu0 %v902
    %1032 = vmatpush1.bf16.msra.mxu0 %v901
    %1033 = vmatprep.subr.bf16.mxu0 %v898
    %1034 = vmatpush1.bf16.msra.mxu0 %v897
    %1035 = vmatprep.subr.bf16.mxu0 %v894
    %1036 = vmatpush1.bf16.msra.mxu0 %v893
    %1037 = vmatprep.subr.bf16.mxu0 %v954
    %1038 = vmatpush2.bf16.msra.mxu0 %v953
    %1039 = vmatprep.subr.bf16.mxu0 %v950
    %1040 = vmatpush2.bf16.msra.mxu0 %v949
    %1041 = vmatprep.subr.bf16.mxu0 %v946
    %1042 = vmatpush2.bf16.msra.mxu0 %v945
    %1043 = vmatprep.subr.bf16.mxu0 %v942
    %1044 = vmatpush2.bf16.msra.mxu0 %v941
    %1045 = vmatprep.subr.bf16.mxu0 %v938
    %1046 = vmatpush2.bf16.msra.mxu0 %v937
    %1047 = vmatprep.subr.bf16.mxu0 %v934
    %1048 = vmatpush2.bf16.msra.mxu0 %v933
    %1049 = vmatprep.subr.bf16.mxu0 %v930
    %1050 = vmatpush2.bf16.msra.mxu0 %v929
    %1051 = vmatprep.subr.bf16.mxu0 %v926
    %1052 = vmatpush2.bf16.msra.mxu0 %v925
    %1053 = vmatprep.mubr.bf16.mxu0 %v700
    %1054 = vmatmul.mubr.bf16.gmra.mxu0 %v699
    %v1055 = vpop.f32.mrf.mxu0
    %v1056 = vadd.f32 0.0, %v1055
    %v1057 = vpop.f32.mrf.mxu0
    %v1058 = vadd.f32 0.0, %v1057
    %v1059 = vpop.f32.mrf.mxu0
    %v1060 = vpop.f32.mrf.mxu0
    %1061 = vdwg.mxu0
    %1062 = vmatprep.subr.bf16.mxu0 %v924
    %1063 = vmatpush1.bf16.msra.mxu0 %v923
    %1064 = vmatprep.subr.bf16.mxu0 %v920
    %1065 = vmatpush1.bf16.msra.mxu0 %v919
    %1066 = vmatprep.subr.bf16.mxu0 %v916
    %1067 = vmatpush1.bf16.msra.mxu0 %v915
    %1068 = vmatprep.subr.bf16.mxu0 %v912
    %1069 = vmatpush1.bf16.msra.mxu0 %v911
    %1070 = vmatprep.subr.bf16.mxu0 %v908
    %1071 = vmatpush1.bf16.msra.mxu0 %v907
    %1072 = vmatprep.subr.bf16.mxu0 %v904
    %1073 = vmatpush1.bf16.msra.mxu0 %v903
    %1074 = vmatprep.subr.bf16.mxu0 %v900
    %1075 = vmatpush1.bf16.msra.mxu0 %v899
    %1076 = vmatprep.subr.bf16.mxu0 %v896
    %1077 = vmatpush1.bf16.msra.mxu0 %v895
    %1078 = vmatprep.subr.bf16.mxu0 %v956
    %1079 = vmatpush2.bf16.msra.mxu0 %v955
    %1080 = vmatprep.subr.bf16.mxu0 %v952
    %1081 = vmatpush2.bf16.msra.mxu0 %v951
    %1082 = vmatprep.subr.bf16.mxu0 %v948
    %1083 = vmatpush2.bf16.msra.mxu0 %v947
    %1084 = vmatprep.subr.bf16.mxu0 %v944
    %1085 = vmatpush2.bf16.msra.mxu0 %v943
    %1086 = vmatprep.subr.bf16.mxu0 %v940
    %1087 = vmatpush2.bf16.msra.mxu0 %v939
    %1088 = vmatprep.subr.bf16.mxu0 %v936
    %1089 = vmatpush2.bf16.msra.mxu0 %v935
    %1090 = vmatprep.subr.bf16.mxu0 %v932
    %1091 = vmatpush2.bf16.msra.mxu0 %v931
    %1092 = vmatprep.subr.bf16.mxu0 %v928
    %1093 = vmatpush2.bf16.msra.mxu0 %v927
    %1094 = vmatprep.mubr.bf16.mxu0 %v700
    %1095 = vmatmul.mubr.bf16.gmra.mxu0 %v699
    %v1096 = vpop.f32.mrf.mxu0
    %v1097 = vadd.f32 0.0, %v1096
    %v1098 = vpop.f32.mrf.mxu0
    %v1099 = vadd.f32 0.0, %v1098
    %v1100 = vpop.f32.mrf.mxu0
    %v1101 = vpop.f32.mrf.mxu0
    %1102 = vdwg.mxu0
    %v1103 = vld [vmem:[#allocation19] sm:$0xf]
    %v1104 = vld [vmem:[%s11] sm:$0xf]
    %v1105 = vrot.slane %v1056, 4
    %v1106 = vadd.f32 %v1056, %v1105
    %v1107 = vrot.slane %v1106, 2
    %v1108 = vadd.f32 %v1106, %v1107
    %v1109 = vrot.slane %v1108, 1
    %v1110 = vadd.f32 %v1108, %v1109
    %v1111 = vrot.slane %v1058, 4
    %v1112 = vadd.f32 %v1058, %v1111
    %v1113 = vrot.slane %v1112, 2
    %v1114 = vadd.f32 %v1112, %v1113
    %v1115 = vrot.slane %v1114, 1
    %v1116 = vadd.f32 %v1114, %v1115
    %v1117 = vrot.slane %v1097, 4
    %v1118 = vadd.f32 %v1097, %v1117
    %v1119 = vrot.slane %v1118, 2
    %v1120 = vadd.f32 %v1118, %v1119
    %v1121 = vrot.slane %v1120, 1
    %v1122 = vadd.f32 %v1120, %v1121
    %v1123 = vrot.slane %v1099, 4
    %v1124 = vadd.f32 %v1099, %v1123
    %v1125 = vrot.slane %v1124, 2
    %v1126 = vadd.f32 %v1124, %v1125
    %v1127 = vrot.slane %v1126, 1
    %v1128 = vadd.f32 %v1126, %v1127
    %v1129 = vmul.f32 %v1110, %v348
    %v1130 = vmul.f32 %v1116, %v348
    %v1131 = vmul.f32 %v1122, %v348
    %v1132 = vmul.f32 %v1128, %v348
    %v1133 = vmul.f32 %v1056, %v1056
    %v1134 = vmul.f32 %v1058, %v1058
    %v1135 = vmul.f32 %v1097, %v1097
    %v1136 = vmul.f32 %v1099, %v1099
    %v1137 = vrot.slane %v1133, 4
    %v1138 = vadd.f32 %v1133, %v1137
    %v1139 = vrot.slane %v1138, 2
    %v1140 = vadd.f32 %v1138, %v1139
    %v1141 = vrot.slane %v1140, 1
    %v1142 = vadd.f32 %v1140, %v1141
    %v1143 = vrot.slane %v1134, 4
    %v1144 = vadd.f32 %v1134, %v1143
    %v1145 = vrot.slane %v1144, 2
    %v1146 = vadd.f32 %v1144, %v1145
    %v1147 = vrot.slane %v1146, 1
    %v1148 = vadd.f32 %v1146, %v1147
    %v1149 = vrot.slane %v1135, 4
    %v1150 = vadd.f32 %v1135, %v1149
    %v1151 = vrot.slane %v1150, 2
    %v1152 = vadd.f32 %v1150, %v1151
    %v1153 = vrot.slane %v1152, 1
    %v1154 = vadd.f32 %v1152, %v1153
    %v1155 = vrot.slane %v1136, 4
    %v1156 = vadd.f32 %v1136, %v1155
    %v1157 = vrot.slane %v1156, 2
    %v1158 = vadd.f32 %v1156, %v1157
    %v1159 = vrot.slane %v1158, 1
    %v1160 = vadd.f32 %v1158, %v1159
    %v1161 = vmul.f32 %v1142, %v348
    %v1162 = vmul.f32 %v1148, %v348
    %v1163 = vmul.f32 %v1154, %v348
    %v1164 = vmul.f32 %v1160, %v348
    %v1165 = vmul.f32 %v1129, %v1129
    %v1166 = vmul.f32 %v1130, %v1130
    %v1167 = vmul.f32 %v1131, %v1131
    %v1168 = vmul.f32 %v1132, %v1132
    %v1169 = vsub.f32 %v1161, %v1165
    %v1170 = vsub.f32 %v1162, %v1166
    %v1171 = vsub.f32 %v1163, %v1167
    %v1172 = vsub.f32 %v1164, %v1168
    %v1173 = vmax.f32 %v1169, 0.0
    %v1174 = vmax.f32 %v1170, 0.0
    %v1175 = vmax.f32 %v1171, 0.0
    %v1176 = vmax.f32 %v1172, 0.0
    %v1177 = vadd.f32 %v1173, 0.8
    %v1178 = vadd.f32 %v1174, 0.8
    %v1179 = vadd.f32 %v1175, 0.8
    %v1180 = vadd.f32 %v1176, 0.8
    %v1181 = vrsqrt.pop %v1177
    %v1182 = vrsqrt.pop %v1178
    %v1183 = vrsqrt.pop %v1179
    %v1184 = vrsqrt.pop %v1180
    %v1189 = vcombine.low %v1181, %v1182
    %v1190 = vcombine.low %v1183, %v1184
    %v1192 = vunpack.c.l.s4 1966171168
    %v1193 = vunpack.c.0.s8 %v1192
    %v1194 = vlaneseq
    %v1195 = vshrl.u32 %v1194, 7
    %v1196 = vsub.s32 %v1193, %v1195
    %v1197 = vrot.slane %v1189, %v1196
    %v1199 = vunpack.c.l.s4 1966171168
    %v1200 = vunpack.c.0.s8 %v1199
    %v1201 = vlaneseq
    %v1202 = vshrl.u32 %v1201, 7
    %v1203 = vsub.s32 %v1200, %v1202
    %v1204 = vrot.slane %v1190, %v1203
    %v1205 = vcombine.low %v1197, %v1204
    %v1207 = vunpack.c.l.s4 1966171168
    %v1208 = vunpack.c.0.s8 %v1207
    %v1209 = vlaneseq
    %v1210 = vshrl.u32 %v1209, 7
    %v1211 = vsub.s32 %v1208, %v1210
    %v1212 = vrot.slane %v1205, %v1211
    %v1214 = vmul.f32 %v1103, %v1212
    %v1216 = vlaneseq
    %v1217 = vshrl.u32 %v1216, 7
    %v1218 = vsub.s32 0, %v1217
    %v1219 = vrot.slane %v1214, %v1218
    %v1220 = vlaneseq
    %v1221 = vshrl.u32 %v1220, 7
    %v1222 = vsub.s32 1, %v1221
    %v1223 = vrot.slane %v1214, %v1222
    %v1224 = vlaneseq
    %v1225 = vshrl.u32 %v1224, 7
    %v1226 = vsub.s32 2, %v1225
    %v1227 = vrot.slane %v1214, %v1226
    %v1228 = vlaneseq
    %v1229 = vshrl.u32 %v1228, 7
    %v1230 = vsub.s32 3, %v1229
    %v1231 = vrot.slane %v1214, %v1230
    %v1236 = vmul.f32 %v1056, %v1219
    %v1237 = vmul.f32 %v1058, %v1223
    %v1238 = vmul.f32 %v1097, %v1227
    %v1239 = vmul.f32 %v1099, %v1231
    %v1240 = vmul.f32 %v1129, %v1219
    %v1241 = vmul.f32 %v1130, %v1223
    %v1242 = vmul.f32 %v1131, %v1227
    %v1243 = vmul.f32 %v1132, %v1231
    %v1248 = vcombine.low %v1240, %v1241
    %v1249 = vcombine.low %v1242, %v1243
    %v1251 = vunpack.c.l.s4 1966171168
    %v1252 = vunpack.c.0.s8 %v1251
    %v1253 = vlaneseq
    %v1254 = vshrl.u32 %v1253, 7
    %v1255 = vsub.s32 %v1252, %v1254
    %v1256 = vrot.slane %v1248, %v1255
    %v1258 = vunpack.c.l.s4 1966171168
    %v1259 = vunpack.c.0.s8 %v1258
    %v1260 = vlaneseq
    %v1261 = vshrl.u32 %v1260, 7
    %v1262 = vsub.s32 %v1259, %v1261
    %v1263 = vrot.slane %v1249, %v1262
    %v1264 = vcombine.low %v1256, %v1263
    %v1266 = vunpack.c.l.s4 1966171168
    %v1267 = vunpack.c.0.s8 %v1266
    %v1268 = vlaneseq
    %v1269 = vshrl.u32 %v1268, 7
    %v1270 = vsub.s32 %v1267, %v1269
    %v1271 = vrot.slane %v1264, %v1270
    %v1273 = vsub.f32 %v1104, %v1271
    %v1275 = vlaneseq
    %v1276 = vshrl.u32 %v1275, 7
    %v1277 = vsub.s32 0, %v1276
    %v1278 = vrot.slane %v1273, %v1277
    %v1279 = vlaneseq
    %v1280 = vshrl.u32 %v1279, 7
    %v1281 = vsub.s32 1, %v1280
    %v1282 = vrot.slane %v1273, %v1281
    %v1283 = vlaneseq
    %v1284 = vshrl.u32 %v1283, 7
    %v1285 = vsub.s32 2, %v1284
    %v1286 = vrot.slane %v1273, %v1285
    %v1287 = vlaneseq
    %v1288 = vshrl.u32 %v1287, 7
    %v1289 = vsub.s32 3, %v1288
    %v1290 = vrot.slane %v1273, %v1289
    %v1295 = vadd.f32 %v1236, %v1278
    %v1296 = vadd.f32 %v1237, %v1282
    %v1297 = vadd.f32 %v1238, %v1286
    %v1298 = vadd.f32 %v1239, %v1290
    %vm1299 = vcmp.ge.f32.partialorder %v1295, 0.0
    %vm1300 = vcmp.ge.f32.partialorder %v1296, 0.0
    %vm1301 = vcmp.ge.f32.partialorder %v1297, 0.0
    %vm1302 = vcmp.ge.f32.partialorder %v1298, 0.0
    %v1303 = vmul.f32 %v1295, 0.2
    %v1304 = vmul.f32 %v1296, 0.2
    %v1305 = vmul.f32 %v1297, 0.2
    %v1306 = vmul.f32 %v1298, 0.2
    %v1307 = vsel %vm1299, %v1295, %v1303
    %v1308 = vsel %vm1300, %v1296, %v1304
    %v1309 = vsel %vm1301, %v1297, %v1305
    %v1310 = vsel %vm1302, %v1298, %v1306
    %s1311 = smul.u32 4, 64
    %s1312 = smul.u32 %s1311, 8
    %s1313 = sshll.u32 %s1312, 4
    %1314 = dma.done [#allocation4], %s1313
    %v1315 = vld [vmem:[#allocation2] sm:$0xff]
    %v1316 = vld [vmem:[#allocation2 + $0x8] sm:$0xff]
    %v1317 = vld [vmem:[#allocation2 + $0x10] sm:$0xff]
    %v1318 = vld [vmem:[#allocation2 + $0x18] sm:$0xff]
    %v1319 = vld [vmem:[#allocation2 + $0x20] sm:$0xff]
    %v1320 = vld [vmem:[#allocation2 + $0x28] sm:$0xff]
    %v1321 = vld [vmem:[#allocation2 + $0x30] sm:$0xff]
    %v1322 = vld [vmem:[#allocation2 + $0x38] sm:$0xff]
    %v1323 = vld [vmem:[#allocation2 + $0x40] sm:$0xff]
    %v1324 = vld [vmem:[#allocation2 + $0x48] sm:$0xff]
    %v1325 = vld [vmem:[#allocation2 + $0x50] sm:$0xff]
    %v1326 = vld [vmem:[#allocation2 + $0x58] sm:$0xff]
    %v1327 = vld [vmem:[#allocation2 + $0x60] sm:$0xff]
    %v1328 = vld [vmem:[#allocation2 + $0x68] sm:$0xff]
    %v1329 = vld [vmem:[#allocation2 + $0x70] sm:$0xff]
    %v1330 = vld [vmem:[#allocation2 + $0x78] sm:$0xff]
    %v1331 = vld [vmem:[#allocation2 + $0x80] sm:$0xff]
    %v1332 = vld [vmem:[#allocation2 + $0x88] sm:$0xff]
    %v1333 = vld [vmem:[#allocation2 + $0x90] sm:$0xff]
    %v1334 = vld [vmem:[#allocation2 + $0x98] sm:$0xff]
    %v1335 = vld [vmem:[#allocation2 + $0xa0] sm:$0xff]
    %v1336 = vld [vmem:[#allocation2 + $0xa8] sm:$0xff]
    %v1337 = vld [vmem:[#allocation2 + $0xb0] sm:$0xff]
    %v1338 = vld [vmem:[#allocation2 + $0xb8] sm:$0xff]
    %v1339 = vld [vmem:[#allocation2 + $0xc0] sm:$0xff]
    %v1340 = vld [vmem:[#allocation2 + $0xc8] sm:$0xff]
    %v1341 = vld [vmem:[#allocation2 + $0xd0] sm:$0xff]
    %v1342 = vld [vmem:[#allocation2 + $0xd8] sm:$0xff]
    %v1343 = vld [vmem:[#allocation2 + $0xe0] sm:$0xff]
    %v1344 = vld [vmem:[#allocation2 + $0xe8] sm:$0xff]
    %v1345 = vld [vmem:[#allocation2 + $0xf0] sm:$0xff]
    %v1346 = vld [vmem:[#allocation2 + $0xf8] sm:$0xff]
    %v1347 = vld [vmem:[#allocation2 + $0x100] sm:$0xff]
    %v1348 = vld [vmem:[#allocation2 + $0x108] sm:$0xff]
    %v1349 = vld [vmem:[#allocation2 + $0x110] sm:$0xff]
    %v1350 = vld [vmem:[#allocation2 + $0x118] sm:$0xff]
    %v1351 = vld [vmem:[#allocation2 + $0x120] sm:$0xff]
    %v1352 = vld [vmem:[#allocation2 + $0x128] sm:$0xff]
    %v1353 = vld [vmem:[#allocation2 + $0x130] sm:$0xff]
    %v1354 = vld [vmem:[#allocation2 + $0x138] sm:$0xff]
    %v1355 = vld [vmem:[#allocation2 + $0x140] sm:$0xff]
    %v1356 = vld [vmem:[#allocation2 + $0x148] sm:$0xff]
    %v1357 = vld [vmem:[#allocation2 + $0x150] sm:$0xff]
    %v1358 = vld [vmem:[#allocation2 + $0x158] sm:$0xff]
    %v1359 = vld [vmem:[#allocation2 + $0x160] sm:$0xff]
    %v1360 = vld [vmem:[#allocation2 + $0x168] sm:$0xff]
    %v1361 = vld [vmem:[#allocation2 + $0x170] sm:$0xff]
    %v1362 = vld [vmem:[#allocation2 + $0x178] sm:$0xff]
    %v1363 = vld [vmem:[#allocation2 + $0x180] sm:$0xff]
    %v1364 = vld [vmem:[#allocation2 + $0x188] sm:$0xff]
    %v1365 = vld [vmem:[#allocation2 + $0x190] sm:$0xff]
    %v1366 = vld [vmem:[#allocation2 + $0x198] sm:$0xff]
    %v1367 = vld [vmem:[#allocation2 + $0x1a0] sm:$0xff]
    %v1368 = vld [vmem:[#allocation2 + $0x1a8] sm:$0xff]
    %v1369 = vld [vmem:[#allocation2 + $0x1b0] sm:$0xff]
    %v1370 = vld [vmem:[#allocation2 + $0x1b8] sm:$0xff]
    %v1371 = vld [vmem:[#allocation2 + $0x1c0] sm:$0xff]
    %v1372 = vld [vmem:[#allocation2 + $0x1c8] sm:$0xff]
    %v1373 = vld [vmem:[#allocation2 + $0x1d0] sm:$0xff]
    %v1374 = vld [vmem:[#allocation2 + $0x1d8] sm:$0xff]
    %v1375 = vld [vmem:[#allocation2 + $0x1e0] sm:$0xff]
    %v1376 = vld [vmem:[#allocation2 + $0x1e8] sm:$0xff]
    %v1377 = vld [vmem:[#allocation2 + $0x1f0] sm:$0xff]
    %v1378 = vld [vmem:[#allocation2 + $0x1f8] sm:$0xff]
    %v1379 = vld [vmem:[#allocation2 + $0x200] sm:$0xff]
    %v1380 = vld [vmem:[#allocation2 + $0x208] sm:$0xff]
    %v1381 = vld [vmem:[#allocation2 + $0x210] sm:$0xff]
    %v1382 = vld [vmem:[#allocation2 + $0x218] sm:$0xff]
    %v1383 = vld [vmem:[#allocation2 + $0x220] sm:$0xff]
    %v1384 = vld [vmem:[#allocation2 + $0x228] sm:$0xff]
    %v1385 = vld [vmem:[#allocation2 + $0x230] sm:$0xff]
    %v1386 = vld [vmem:[#allocation2 + $0x238] sm:$0xff]
    %v1387 = vld [vmem:[#allocation2 + $0x240] sm:$0xff]
    %v1388 = vld [vmem:[#allocation2 + $0x248] sm:$0xff]
    %v1389 = vld [vmem:[#allocation2 + $0x250] sm:$0xff]
    %v1390 = vld [vmem:[#allocation2 + $0x258] sm:$0xff]
    %v1391 = vld [vmem:[#allocation2 + $0x260] sm:$0xff]
    %v1392 = vld [vmem:[#allocation2 + $0x268] sm:$0xff]
    %v1393 = vld [vmem:[#allocation2 + $0x270] sm:$0xff]
    %v1394 = vld [vmem:[#allocation2 + $0x278] sm:$0xff]
    %v1395 = vld [vmem:[#allocation2 + $0x280] sm:$0xff]
    %v1396 = vld [vmem:[#allocation2 + $0x288] sm:$0xff]
    %v1397 = vld [vmem:[#allocation2 + $0x290] sm:$0xff]
    %v1398 = vld [vmem:[#allocation2 + $0x298] sm:$0xff]
    %v1399 = vld [vmem:[#allocation2 + $0x2a0] sm:$0xff]
    %v1400 = vld [vmem:[#allocation2 + $0x2a8] sm:$0xff]
    %v1401 = vld [vmem:[#allocation2 + $0x2b0] sm:$0xff]
    %v1402 = vld [vmem:[#allocation2 + $0x2b8] sm:$0xff]
    %v1403 = vld [vmem:[#allocation2 + $0x2c0] sm:$0xff]
    %v1404 = vld [vmem:[#allocation2 + $0x2c8] sm:$0xff]
    %v1405 = vld [vmem:[#allocation2 + $0x2d0] sm:$0xff]
    %v1406 = vld [vmem:[#allocation2 + $0x2d8] sm:$0xff]
    %v1407 = vld [vmem:[#allocation2 + $0x2e0] sm:$0xff]
    %v1408 = vld [vmem:[#allocation2 + $0x2e8] sm:$0xff]
    %v1409 = vld [vmem:[#allocation2 + $0x2f0] sm:$0xff]
    %v1410 = vld [vmem:[#allocation2 + $0x2f8] sm:$0xff]
    %v1411 = vld [vmem:[#allocation2 + $0x300] sm:$0xff]
    %v1412 = vld [vmem:[#allocation2 + $0x308] sm:$0xff]
    %v1413 = vld [vmem:[#allocation2 + $0x310] sm:$0xff]
    %v1414 = vld [vmem:[#allocation2 + $0x318] sm:$0xff]
    %v1415 = vld [vmem:[#allocation2 + $0x320] sm:$0xff]
    %v1416 = vld [vmem:[#allocation2 + $0x328] sm:$0xff]
    %v1417 = vld [vmem:[#allocation2 + $0x330] sm:$0xff]
    %v1418 = vld [vmem:[#allocation2 + $0x338] sm:$0xff]
    %v1419 = vld [vmem:[#allocation2 + $0x340] sm:$0xff]
    %v1420 = vld [vmem:[#allocation2 + $0x348] sm:$0xff]
    %v1421 = vld [vmem:[#allocation2 + $0x350] sm:$0xff]
    %v1422 = vld [vmem:[#allocation2 + $0x358] sm:$0xff]
    %v1423 = vld [vmem:[#allocation2 + $0x360] sm:$0xff]
    %v1424 = vld [vmem:[#allocation2 + $0x368] sm:$0xff]
    %v1425 = vld [vmem:[#allocation2 + $0x370] sm:$0xff]
    %v1426 = vld [vmem:[#allocation2 + $0x378] sm:$0xff]
    %v1427 = vld [vmem:[#allocation2 + $0x380] sm:$0xff]
    %v1428 = vld [vmem:[#allocation2 + $0x388] sm:$0xff]
    %v1429 = vld [vmem:[#allocation2 + $0x390] sm:$0xff]
    %v1430 = vld [vmem:[#allocation2 + $0x398] sm:$0xff]
    %v1431 = vld [vmem:[#allocation2 + $0x3a0] sm:$0xff]
    %v1432 = vld [vmem:[#allocation2 + $0x3a8] sm:$0xff]
    %v1433 = vld [vmem:[#allocation2 + $0x3b0] sm:$0xff]
    %v1434 = vld [vmem:[#allocation2 + $0x3b8] sm:$0xff]
    %v1435 = vld [vmem:[#allocation2 + $0x3c0] sm:$0xff]
    %v1436 = vld [vmem:[#allocation2 + $0x3c8] sm:$0xff]
    %v1437 = vld [vmem:[#allocation2 + $0x3d0] sm:$0xff]
    %v1438 = vld [vmem:[#allocation2 + $0x3d8] sm:$0xff]
    %v1439 = vld [vmem:[#allocation2 + $0x3e0] sm:$0xff]
    %v1440 = vld [vmem:[#allocation2 + $0x3e8] sm:$0xff]
    %v1441 = vld [vmem:[#allocation2 + $0x3f0] sm:$0xff]
    %v1442 = vld [vmem:[#allocation2 + $0x3f8] sm:$0xff]
    %v1443 = vld [vmem:[#allocation2 + $0x400] sm:$0xff]
    %v1444 = vld [vmem:[#allocation2 + $0x408] sm:$0xff]
    %v1445 = vld [vmem:[#allocation2 + $0x410] sm:$0xff]
    %v1446 = vld [vmem:[#allocation2 + $0x418] sm:$0xff]
    %v1447 = vld [vmem:[#allocation2 + $0x420] sm:$0xff]
    %v1448 = vld [vmem:[#allocation2 + $0x428] sm:$0xff]
    %v1449 = vld [vmem:[#allocation2 + $0x430] sm:$0xff]
    %v1450 = vld [vmem:[#allocation2 + $0x438] sm:$0xff]
    %v1451 = vld [vmem:[#allocation2 + $0x440] sm:$0xff]
    %v1452 = vld [vmem:[#allocation2 + $0x448] sm:$0xff]
    %v1453 = vld [vmem:[#allocation2 + $0x450] sm:$0xff]
    %v1454 = vld [vmem:[#allocation2 + $0x458] sm:$0xff]
    %v1455 = vld [vmem:[#allocation2 + $0x460] sm:$0xff]
    %v1456 = vld [vmem:[#allocation2 + $0x468] sm:$0xff]
    %v1457 = vld [vmem:[#allocation2 + $0x470] sm:$0xff]
    %v1458 = vld [vmem:[#allocation2 + $0x478] sm:$0xff]
    %v1459 = vld [vmem:[#allocation2 + $0x480] sm:$0xff]
    %v1460 = vld [vmem:[#allocation2 + $0x488] sm:$0xff]
    %v1461 = vld [vmem:[#allocation2 + $0x490] sm:$0xff]
    %v1462 = vld [vmem:[#allocation2 + $0x498] sm:$0xff]
    %v1463 = vld [vmem:[#allocation2 + $0x4a0] sm:$0xff]
    %v1464 = vld [vmem:[#allocation2 + $0x4a8] sm:$0xff]
    %v1465 = vld [vmem:[#allocation2 + $0x4b0] sm:$0xff]
    %v1466 = vld [vmem:[#allocation2 + $0x4b8] sm:$0xff]
    %v1467 = vld [vmem:[#allocation2 + $0x4c0] sm:$0xff]
    %v1468 = vld [vmem:[#allocation2 + $0x4c8] sm:$0xff]
    %v1469 = vld [vmem:[#allocation2 + $0x4d0] sm:$0xff]
    %v1470 = vld [vmem:[#allocation2 + $0x4d8] sm:$0xff]
    %v1471 = vld [vmem:[#allocation2 + $0x4e0] sm:$0xff]
    %v1472 = vld [vmem:[#allocation2 + $0x4e8] sm:$0xff]
    %v1473 = vld [vmem:[#allocation2 + $0x4f0] sm:$0xff]
    %v1474 = vld [vmem:[#allocation2 + $0x4f8] sm:$0xff]
    %v1475 = vld [vmem:[#allocation2 + $0x500] sm:$0xff]
    %v1476 = vld [vmem:[#allocation2 + $0x508] sm:$0xff]
    %v1477 = vld [vmem:[#allocation2 + $0x510] sm:$0xff]
    %v1478 = vld [vmem:[#allocation2 + $0x518] sm:$0xff]
    %v1479 = vld [vmem:[#allocation2 + $0x520] sm:$0xff]
    %v1480 = vld [vmem:[#allocation2 + $0x528] sm:$0xff]
    %v1481 = vld [vmem:[#allocation2 + $0x530] sm:$0xff]
    %v1482 = vld [vmem:[#allocation2 + $0x538] sm:$0xff]
    %v1483 = vld [vmem:[#allocation2 + $0x540] sm:$0xff]
    %v1484 = vld [vmem:[#allocation2 + $0x548] sm:$0xff]
    %v1485 = vld [vmem:[#allocation2 + $0x550] sm:$0xff]
    %v1486 = vld [vmem:[#allocation2 + $0x558] sm:$0xff]
    %v1487 = vld [vmem:[#allocation2 + $0x560] sm:$0xff]
    %v1488 = vld [vmem:[#allocation2 + $0x568] sm:$0xff]
    %v1489 = vld [vmem:[#allocation2 + $0x570] sm:$0xff]
    %v1490 = vld [vmem:[#allocation2 + $0x578] sm:$0xff]
    %v1491 = vld [vmem:[#allocation2 + $0x580] sm:$0xff]
    %v1492 = vld [vmem:[#allocation2 + $0x588] sm:$0xff]
    %v1493 = vld [vmem:[#allocation2 + $0x590] sm:$0xff]
    %v1494 = vld [vmem:[#allocation2 + $0x598] sm:$0xff]
    %v1495 = vld [vmem:[#allocation2 + $0x5a0] sm:$0xff]
    %v1496 = vld [vmem:[#allocation2 + $0x5a8] sm:$0xff]
    %v1497 = vld [vmem:[#allocation2 + $0x5b0] sm:$0xff]
    %v1498 = vld [vmem:[#allocation2 + $0x5b8] sm:$0xff]
    %v1499 = vld [vmem:[#allocation2 + $0x5c0] sm:$0xff]
    %v1500 = vld [vmem:[#allocation2 + $0x5c8] sm:$0xff]
    %v1501 = vld [vmem:[#allocation2 + $0x5d0] sm:$0xff]
    %v1502 = vld [vmem:[#allocation2 + $0x5d8] sm:$0xff]
    %v1503 = vld [vmem:[#allocation2 + $0x5e0] sm:$0xff]
    %v1504 = vld [vmem:[#allocation2 + $0x5e8] sm:$0xff]
    %v1505 = vld [vmem:[#allocation2 + $0x5f0] sm:$0xff]
    %v1506 = vld [vmem:[#allocation2 + $0x5f8] sm:$0xff]
    %v1507 = vld [vmem:[#allocation2 + $0x600] sm:$0xff]
    %v1508 = vld [vmem:[#allocation2 + $0x608] sm:$0xff]
    %v1509 = vld [vmem:[#allocation2 + $0x610] sm:$0xff]
    %v1510 = vld [vmem:[#allocation2 + $0x618] sm:$0xff]
    %v1511 = vld [vmem:[#allocation2 + $0x620] sm:$0xff]
    %v1512 = vld [vmem:[#allocation2 + $0x628] sm:$0xff]
    %v1513 = vld [vmem:[#allocation2 + $0x630] sm:$0xff]
    %v1514 = vld [vmem:[#allocation2 + $0x638] sm:$0xff]
    %v1515 = vld [vmem:[#allocation2 + $0x640] sm:$0xff]
    %v1516 = vld [vmem:[#allocation2 + $0x648] sm:$0xff]
    %v1517 = vld [vmem:[#allocation2 + $0x650] sm:$0xff]
    %v1518 = vld [vmem:[#allocation2 + $0x658] sm:$0xff]
    %v1519 = vld [vmem:[#allocation2 + $0x660] sm:$0xff]
    %v1520 = vld [vmem:[#allocation2 + $0x668] sm:$0xff]
    %v1521 = vld [vmem:[#allocation2 + $0x670] sm:$0xff]
    %v1522 = vld [vmem:[#allocation2 + $0x678] sm:$0xff]
    %v1523 = vld [vmem:[#allocation2 + $0x680] sm:$0xff]
    %v1524 = vld [vmem:[#allocation2 + $0x688] sm:$0xff]
    %v1525 = vld [vmem:[#allocation2 + $0x690] sm:$0xff]
    %v1526 = vld [vmem:[#allocation2 + $0x698] sm:$0xff]
    %v1527 = vld [vmem:[#allocation2 + $0x6a0] sm:$0xff]
    %v1528 = vld [vmem:[#allocation2 + $0x6a8] sm:$0xff]
    %v1529 = vld [vmem:[#allocation2 + $0x6b0] sm:$0xff]
    %v1530 = vld [vmem:[#allocation2 + $0x6b8] sm:$0xff]
    %v1531 = vld [vmem:[#allocation2 + $0x6c0] sm:$0xff]
    %v1532 = vld [vmem:[#allocation2 + $0x6c8] sm:$0xff]
    %v1533 = vld [vmem:[#allocation2 + $0x6d0] sm:$0xff]
    %v1534 = vld [vmem:[#allocation2 + $0x6d8] sm:$0xff]
    %v1535 = vld [vmem:[#allocation2 + $0x6e0] sm:$0xff]
    %v1536 = vld [vmem:[#allocation2 + $0x6e8] sm:$0xff]
    %v1537 = vld [vmem:[#allocation2 + $0x6f0] sm:$0xff]
    %v1538 = vld [vmem:[#allocation2 + $0x6f8] sm:$0xff]
    %v1539 = vld [vmem:[#allocation2 + $0x700] sm:$0xff]
    %v1540 = vld [vmem:[#allocation2 + $0x708] sm:$0xff]
    %v1541 = vld [vmem:[#allocation2 + $0x710] sm:$0xff]
    %v1542 = vld [vmem:[#allocation2 + $0x718] sm:$0xff]
    %v1543 = vld [vmem:[#allocation2 + $0x720] sm:$0xff]
    %v1544 = vld [vmem:[#allocation2 + $0x728] sm:$0xff]
    %v1545 = vld [vmem:[#allocation2 + $0x730] sm:$0xff]
    %v1546 = vld [vmem:[#allocation2 + $0x738] sm:$0xff]
    %v1547 = vld [vmem:[#allocation2 + $0x740] sm:$0xff]
    %v1548 = vld [vmem:[#allocation2 + $0x748] sm:$0xff]
    %v1549 = vld [vmem:[#allocation2 + $0x750] sm:$0xff]
    %v1550 = vld [vmem:[#allocation2 + $0x758] sm:$0xff]
    %v1551 = vld [vmem:[#allocation2 + $0x760] sm:$0xff]
    %v1552 = vld [vmem:[#allocation2 + $0x768] sm:$0xff]
    %v1553 = vld [vmem:[#allocation2 + $0x770] sm:$0xff]
    %v1554 = vld [vmem:[#allocation2 + $0x778] sm:$0xff]
    %v1555 = vld [vmem:[#allocation2 + $0x780] sm:$0xff]
    %v1556 = vld [vmem:[#allocation2 + $0x788] sm:$0xff]
    %v1557 = vld [vmem:[#allocation2 + $0x790] sm:$0xff]
    %v1558 = vld [vmem:[#allocation2 + $0x798] sm:$0xff]
    %v1559 = vld [vmem:[#allocation2 + $0x7a0] sm:$0xff]
    %v1560 = vld [vmem:[#allocation2 + $0x7a8] sm:$0xff]
    %v1561 = vld [vmem:[#allocation2 + $0x7b0] sm:$0xff]
    %v1562 = vld [vmem:[#allocation2 + $0x7b8] sm:$0xff]
    %v1563 = vld [vmem:[#allocation2 + $0x7c0] sm:$0xff]
    %v1564 = vld [vmem:[#allocation2 + $0x7c8] sm:$0xff]
    %v1565 = vld [vmem:[#allocation2 + $0x7d0] sm:$0xff]
    %v1566 = vld [vmem:[#allocation2 + $0x7d8] sm:$0xff]
    %v1567 = vld [vmem:[#allocation2 + $0x7e0] sm:$0xff]
    %v1568 = vld [vmem:[#allocation2 + $0x7e8] sm:$0xff]
    %v1569 = vld [vmem:[#allocation2 + $0x7f0] sm:$0xff]
    %v1570 = vld [vmem:[#allocation2 + $0x7f8] sm:$0xff]
    %v1571 = vpack.c.bf16 %v1307, %v1307
    %v1572 = vpack.c.bf16 %v1308, %v1308
    %v1573 = vpack.c.bf16 %v1309, %v1309
    %v1574 = vpack.c.bf16 %v1310, %v1310
    %v1831 = vunpack.c.l.b16 %v1315
    %v1832 = vunpack.c.h.b16 %v1315
    %v1833 = vunpack.c.l.b16 %v1316
    %v1834 = vunpack.c.h.b16 %v1316
    %v1835 = vunpack.c.l.b16 %v1317
    %v1836 = vunpack.c.h.b16 %v1317
    %v1837 = vunpack.c.l.b16 %v1318
    %v1838 = vunpack.c.h.b16 %v1318
    %v1839 = vunpack.c.l.b16 %v1319
    %v1840 = vunpack.c.h.b16 %v1319
    %v1841 = vunpack.c.l.b16 %v1320
    %v1842 = vunpack.c.h.b16 %v1320
    %v1843 = vunpack.c.l.b16 %v1321
    %v1844 = vunpack.c.h.b16 %v1321
    %v1845 = vunpack.c.l.b16 %v1322
    %v1846 = vunpack.c.h.b16 %v1322
    %v1847 = vunpack.c.l.b16 %v1323
    %v1848 = vunpack.c.h.b16 %v1323
    %v1849 = vunpack.c.l.b16 %v1324
    %v1850 = vunpack.c.h.b16 %v1324
    %v1851 = vunpack.c.l.b16 %v1325
    %v1852 = vunpack.c.h.b16 %v1325
    %v1853 = vunpack.c.l.b16 %v1326
    %v1854 = vunpack.c.h.b16 %v1326
    %v1855 = vunpack.c.l.b16 %v1327
    %v1856 = vunpack.c.h.b16 %v1327
    %v1857 = vunpack.c.l.b16 %v1328
    %v1858 = vunpack.c.h.b16 %v1328
    %v1859 = vunpack.c.l.b16 %v1329
    %v1860 = vunpack.c.h.b16 %v1329
    %v1861 = vunpack.c.l.b16 %v1330
    %v1862 = vunpack.c.h.b16 %v1330
    %v1863 = vunpack.c.l.b16 %v1331
    %v1864 = vunpack.c.h.b16 %v1331
    %v1865 = vunpack.c.l.b16 %v1332
    %v1866 = vunpack.c.h.b16 %v1332
    %v1867 = vunpack.c.l.b16 %v1333
    %v1868 = vunpack.c.h.b16 %v1333
    %v1869 = vunpack.c.l.b16 %v1334
    %v1870 = vunpack.c.h.b16 %v1334
    %v1871 = vunpack.c.l.b16 %v1335
    %v1872 = vunpack.c.h.b16 %v1335
    %v1873 = vunpack.c.l.b16 %v1336
    %v1874 = vunpack.c.h.b16 %v1336
    %v1875 = vunpack.c.l.b16 %v1337
    %v1876 = vunpack.c.h.b16 %v1337
    %v1877 = vunpack.c.l.b16 %v1338
    %v1878 = vunpack.c.h.b16 %v1338
    %v1879 = vunpack.c.l.b16 %v1339
    %v1880 = vunpack.c.h.b16 %v1339
    %v1881 = vunpack.c.l.b16 %v1340
    %v1882 = vunpack.c.h.b16 %v1340
    %v1883 = vunpack.c.l.b16 %v1341
    %v1884 = vunpack.c.h.b16 %v1341
    %v1885 = vunpack.c.l.b16 %v1342
    %v1886 = vunpack.c.h.b16 %v1342
    %v1887 = vunpack.c.l.b16 %v1343
    %v1888 = vunpack.c.h.b16 %v1343
    %v1889 = vunpack.c.l.b16 %v1344
    %v1890 = vunpack.c.h.b16 %v1344
    %v1891 = vunpack.c.l.b16 %v1345
    %v1892 = vunpack.c.h.b16 %v1345
    %v1893 = vunpack.c.l.b16 %v1346
    %v1894 = vunpack.c.h.b16 %v1346
    %v1895 = vunpack.c.l.b16 %v1347
    %v1896 = vunpack.c.h.b16 %v1347
    %v1897 = vunpack.c.l.b16 %v1348
    %v1898 = vunpack.c.h.b16 %v1348
    %v1899 = vunpack.c.l.b16 %v1349
    %v1900 = vunpack.c.h.b16 %v1349
    %v1901 = vunpack.c.l.b16 %v1350
    %v1902 = vunpack.c.h.b16 %v1350
    %v1903 = vunpack.c.l.b16 %v1351
    %v1904 = vunpack.c.h.b16 %v1351
    %v1905 = vunpack.c.l.b16 %v1352
    %v1906 = vunpack.c.h.b16 %v1352
    %v1907 = vunpack.c.l.b16 %v1353
    %v1908 = vunpack.c.h.b16 %v1353
    %v1909 = vunpack.c.l.b16 %v1354
    %v1910 = vunpack.c.h.b16 %v1354
    %v1911 = vunpack.c.l.b16 %v1355
    %v1912 = vunpack.c.h.b16 %v1355
    %v1913 = vunpack.c.l.b16 %v1356
    %v1914 = vunpack.c.h.b16 %v1356
    %v1915 = vunpack.c.l.b16 %v1357
    %v1916 = vunpack.c.h.b16 %v1357
    %v1917 = vunpack.c.l.b16 %v1358
    %v1918 = vunpack.c.h.b16 %v1358
    %v1919 = vunpack.c.l.b16 %v1359
    %v1920 = vunpack.c.h.b16 %v1359
    %v1921 = vunpack.c.l.b16 %v1360
    %v1922 = vunpack.c.h.b16 %v1360
    %v1923 = vunpack.c.l.b16 %v1361
    %v1924 = vunpack.c.h.b16 %v1361
    %v1925 = vunpack.c.l.b16 %v1362
    %v1926 = vunpack.c.h.b16 %v1362
    %v1927 = vunpack.c.l.b16 %v1363
    %v1928 = vunpack.c.h.b16 %v1363
    %v1929 = vunpack.c.l.b16 %v1364
    %v1930 = vunpack.c.h.b16 %v1364
    %v1931 = vunpack.c.l.b16 %v1365
    %v1932 = vunpack.c.h.b16 %v1365
    %v1933 = vunpack.c.l.b16 %v1366
    %v1934 = vunpack.c.h.b16 %v1366
    %v1935 = vunpack.c.l.b16 %v1367
    %v1936 = vunpack.c.h.b16 %v1367
    %v1937 = vunpack.c.l.b16 %v1368
    %v1938 = vunpack.c.h.b16 %v1368
    %v1939 = vunpack.c.l.b16 %v1369
    %v1940 = vunpack.c.h.b16 %v1369
    %v1941 = vunpack.c.l.b16 %v1370
    %v1942 = vunpack.c.h.b16 %v1370
    %v1943 = vunpack.c.l.b16 %v1371
    %v1944 = vunpack.c.h.b16 %v1371
    %v1945 = vunpack.c.l.b16 %v1372
    %v1946 = vunpack.c.h.b16 %v1372
    %v1947 = vunpack.c.l.b16 %v1373
    %v1948 = vunpack.c.h.b16 %v1373
    %v1949 = vunpack.c.l.b16 %v1374
    %v1950 = vunpack.c.h.b16 %v1374
    %v1951 = vunpack.c.l.b16 %v1375
    %v1952 = vunpack.c.h.b16 %v1375
    %v1953 = vunpack.c.l.b16 %v1376
    %v1954 = vunpack.c.h.b16 %v1376
    %v1955 = vunpack.c.l.b16 %v1377
    %v1956 = vunpack.c.h.b16 %v1377
    %v1957 = vunpack.c.l.b16 %v1378
    %v1958 = vunpack.c.h.b16 %v1378
    %v1959 = vunpack.c.l.b16 %v1379
    %v1960 = vunpack.c.h.b16 %v1379
    %v1961 = vunpack.c.l.b16 %v1380
    %v1962 = vunpack.c.h.b16 %v1380
    %v1963 = vunpack.c.l.b16 %v1381
    %v1964 = vunpack.c.h.b16 %v1381
    %v1965 = vunpack.c.l.b16 %v1382
    %v1966 = vunpack.c.h.b16 %v1382
    %v1967 = vunpack.c.l.b16 %v1383
    %v1968 = vunpack.c.h.b16 %v1383
    %v1969 = vunpack.c.l.b16 %v1384
    %v1970 = vunpack.c.h.b16 %v1384
    %v1971 = vunpack.c.l.b16 %v1385
    %v1972 = vunpack.c.h.b16 %v1385
    %v1973 = vunpack.c.l.b16 %v1386
    %v1974 = vunpack.c.h.b16 %v1386
    %v1975 = vunpack.c.l.b16 %v1387
    %v1976 = vunpack.c.h.b16 %v1387
    %v1977 = vunpack.c.l.b16 %v1388
    %v1978 = vunpack.c.h.b16 %v1388
    %v1979 = vunpack.c.l.b16 %v1389
    %v1980 = vunpack.c.h.b16 %v1389
    %v1981 = vunpack.c.l.b16 %v1390
    %v1982 = vunpack.c.h.b16 %v1390
    %v1983 = vunpack.c.l.b16 %v1391
    %v1984 = vunpack.c.h.b16 %v1391
    %v1985 = vunpack.c.l.b16 %v1392
    %v1986 = vunpack.c.h.b16 %v1392
    %v1987 = vunpack.c.l.b16 %v1393
    %v1988 = vunpack.c.h.b16 %v1393
    %v1989 = vunpack.c.l.b16 %v1394
    %v1990 = vunpack.c.h.b16 %v1394
    %v1991 = vunpack.c.l.b16 %v1395
    %v1992 = vunpack.c.h.b16 %v1395
    %v1993 = vunpack.c.l.b16 %v1396
    %v1994 = vunpack.c.h.b16 %v1396
    %v1995 = vunpack.c.l.b16 %v1397
    %v1996 = vunpack.c.h.b16 %v1397
    %v1997 = vunpack.c.l.b16 %v1398
    %v1998 = vunpack.c.h.b16 %v1398
    %v1999 = vunpack.c.l.b16 %v1399
    %v2000 = vunpack.c.h.b16 %v1399
    %v2001 = vunpack.c.l.b16 %v1400
    %v2002 = vunpack.c.h.b16 %v1400
    %v2003 = vunpack.c.l.b16 %v1401
    %v2004 = vunpack.c.h.b16 %v1401
    %v2005 = vunpack.c.l.b16 %v1402
    %v2006 = vunpack.c.h.b16 %v1402
    %v2007 = vunpack.c.l.b16 %v1403
    %v2008 = vunpack.c.h.b16 %v1403
    %v2009 = vunpack.c.l.b16 %v1404
    %v2010 = vunpack.c.h.b16 %v1404
    %v2011 = vunpack.c.l.b16 %v1405
    %v2012 = vunpack.c.h.b16 %v1405
    %v2013 = vunpack.c.l.b16 %v1406
    %v2014 = vunpack.c.h.b16 %v1406
    %v2015 = vunpack.c.l.b16 %v1407
    %v2016 = vunpack.c.h.b16 %v1407
    %v2017 = vunpack.c.l.b16 %v1408
    %v2018 = vunpack.c.h.b16 %v1408
    %v2019 = vunpack.c.l.b16 %v1409
    %v2020 = vunpack.c.h.b16 %v1409
    %v2021 = vunpack.c.l.b16 %v1410
    %v2022 = vunpack.c.h.b16 %v1410
    %v2023 = vunpack.c.l.b16 %v1411
    %v2024 = vunpack.c.h.b16 %v1411
    %v2025 = vunpack.c.l.b16 %v1412
    %v2026 = vunpack.c.h.b16 %v1412
    %v2027 = vunpack.c.l.b16 %v1413
    %v2028 = vunpack.c.h.b16 %v1413
    %v2029 = vunpack.c.l.b16 %v1414
    %v2030 = vunpack.c.h.b16 %v1414
    %v2031 = vunpack.c.l.b16 %v1415
    %v2032 = vunpack.c.h.b16 %v1415
    %v2033 = vunpack.c.l.b16 %v1416
    %v2034 = vunpack.c.h.b16 %v1416
    %v2035 = vunpack.c.l.b16 %v1417
    %v2036 = vunpack.c.h.b16 %v1417
    %v2037 = vunpack.c.l.b16 %v1418
    %v2038 = vunpack.c.h.b16 %v1418
    %v2039 = vunpack.c.l.b16 %v1419
    %v2040 = vunpack.c.h.b16 %v1419
    %v2041 = vunpack.c.l.b16 %v1420
    %v2042 = vunpack.c.h.b16 %v1420
    %v2043 = vunpack.c.l.b16 %v1421
    %v2044 = vunpack.c.h.b16 %v1421
    %v2045 = vunpack.c.l.b16 %v1422
    %v2046 = vunpack.c.h.b16 %v1422
    %v2047 = vunpack.c.l.b16 %v1423
    %v2048 = vunpack.c.h.b16 %v1423
    %v2049 = vunpack.c.l.b16 %v1424
    %v2050 = vunpack.c.h.b16 %v1424
    %v2051 = vunpack.c.l.b16 %v1425
    %v2052 = vunpack.c.h.b16 %v1425
    %v2053 = vunpack.c.l.b16 %v1426
    %v2054 = vunpack.c.h.b16 %v1426
    %v2055 = vunpack.c.l.b16 %v1427
    %v2056 = vunpack.c.h.b16 %v1427
    %v2057 = vunpack.c.l.b16 %v1428
    %v2058 = vunpack.c.h.b16 %v1428
    %v2059 = vunpack.c.l.b16 %v1429
    %v2060 = vunpack.c.h.b16 %v1429
    %v2061 = vunpack.c.l.b16 %v1430
    %v2062 = vunpack.c.h.b16 %v1430
    %v2063 = vunpack.c.l.b16 %v1431
    %v2064 = vunpack.c.h.b16 %v1431
    %v2065 = vunpack.c.l.b16 %v1432
    %v2066 = vunpack.c.h.b16 %v1432
    %v2067 = vunpack.c.l.b16 %v1433
    %v2068 = vunpack.c.h.b16 %v1433
    %v2069 = vunpack.c.l.b16 %v1434
    %v2070 = vunpack.c.h.b16 %v1434
    %v2071 = vunpack.c.l.b16 %v1435
    %v2072 = vunpack.c.h.b16 %v1435
    %v2073 = vunpack.c.l.b16 %v1436
    %v2074 = vunpack.c.h.b16 %v1436
    %v2075 = vunpack.c.l.b16 %v1437
    %v2076 = vunpack.c.h.b16 %v1437
    %v2077 = vunpack.c.l.b16 %v1438
    %v2078 = vunpack.c.h.b16 %v1438
    %v2079 = vunpack.c.l.b16 %v1439
    %v2080 = vunpack.c.h.b16 %v1439
    %v2081 = vunpack.c.l.b16 %v1440
    %v2082 = vunpack.c.h.b16 %v1440
    %v2083 = vunpack.c.l.b16 %v1441
    %v2084 = vunpack.c.h.b16 %v1441
    %v2085 = vunpack.c.l.b16 %v1442
    %v2086 = vunpack.c.h.b16 %v1442
    %v2087 = vunpack.c.l.b16 %v1443
    %v2088 = vunpack.c.h.b16 %v1443
    %v2089 = vunpack.c.l.b16 %v1444
    %v2090 = vunpack.c.h.b16 %v1444
    %v2091 = vunpack.c.l.b16 %v1445
    %v2092 = vunpack.c.h.b16 %v1445
    %v2093 = vunpack.c.l.b16 %v1446
    %v2094 = vunpack.c.h.b16 %v1446
    %v2095 = vunpack.c.l.b16 %v1447
    %v2096 = vunpack.c.h.b16 %v1447
    %v2097 = vunpack.c.l.b16 %v1448
    %v2098 = vunpack.c.h.b16 %v1448
    %v2099 = vunpack.c.l.b16 %v1449
    %v2100 = vunpack.c.h.b16 %v1449
    %v2101 = vunpack.c.l.b16 %v1450
    %v2102 = vunpack.c.h.b16 %v1450
    %v2103 = vunpack.c.l.b16 %v1451
    %v2104 = vunpack.c.h.b16 %v1451
    %v2105 = vunpack.c.l.b16 %v1452
    %v2106 = vunpack.c.h.b16 %v1452
    %v2107 = vunpack.c.l.b16 %v1453
    %v2108 = vunpack.c.h.b16 %v1453
    %v2109 = vunpack.c.l.b16 %v1454
    %v2110 = vunpack.c.h.b16 %v1454
    %v2111 = vunpack.c.l.b16 %v1455
    %v2112 = vunpack.c.h.b16 %v1455
    %v2113 = vunpack.c.l.b16 %v1456
    %v2114 = vunpack.c.h.b16 %v1456
    %v2115 = vunpack.c.l.b16 %v1457
    %v2116 = vunpack.c.h.b16 %v1457
    %v2117 = vunpack.c.l.b16 %v1458
    %v2118 = vunpack.c.h.b16 %v1458
    %v2119 = vunpack.c.l.b16 %v1459
    %v2120 = vunpack.c.h.b16 %v1459
    %v2121 = vunpack.c.l.b16 %v1460
    %v2122 = vunpack.c.h.b16 %v1460
    %v2123 = vunpack.c.l.b16 %v1461
    %v2124 = vunpack.c.h.b16 %v1461
    %v2125 = vunpack.c.l.b16 %v1462
    %v2126 = vunpack.c.h.b16 %v1462
    %v2127 = vunpack.c.l.b16 %v1463
    %v2128 = vunpack.c.h.b16 %v1463
    %v2129 = vunpack.c.l.b16 %v1464
    %v2130 = vunpack.c.h.b16 %v1464
    %v2131 = vunpack.c.l.b16 %v1465
    %v2132 = vunpack.c.h.b16 %v1465
    %v2133 = vunpack.c.l.b16 %v1466
    %v2134 = vunpack.c.h.b16 %v1466
    %v2135 = vunpack.c.l.b16 %v1467
    %v2136 = vunpack.c.h.b16 %v1467
    %v2137 = vunpack.c.l.b16 %v1468
    %v2138 = vunpack.c.h.b16 %v1468
    %v2139 = vunpack.c.l.b16 %v1469
    %v2140 = vunpack.c.h.b16 %v1469
    %v2141 = vunpack.c.l.b16 %v1470
    %v2142 = vunpack.c.h.b16 %v1470
    %v2143 = vunpack.c.l.b16 %v1471
    %v2144 = vunpack.c.h.b16 %v1471
    %v2145 = vunpack.c.l.b16 %v1472
    %v2146 = vunpack.c.h.b16 %v1472
    %v2147 = vunpack.c.l.b16 %v1473
    %v2148 = vunpack.c.h.b16 %v1473
    %v2149 = vunpack.c.l.b16 %v1474
    %v2150 = vunpack.c.h.b16 %v1474
    %v2151 = vunpack.c.l.b16 %v1475
    %v2152 = vunpack.c.h.b16 %v1475
    %v2153 = vunpack.c.l.b16 %v1476
    %v2154 = vunpack.c.h.b16 %v1476
    %v2155 = vunpack.c.l.b16 %v1477
    %v2156 = vunpack.c.h.b16 %v1477
    %v2157 = vunpack.c.l.b16 %v1478
    %v2158 = vunpack.c.h.b16 %v1478
    %v2159 = vunpack.c.l.b16 %v1479
    %v2160 = vunpack.c.h.b16 %v1479
    %v2161 = vunpack.c.l.b16 %v1480
    %v2162 = vunpack.c.h.b16 %v1480
    %v2163 = vunpack.c.l.b16 %v1481
    %v2164 = vunpack.c.h.b16 %v1481
    %v2165 = vunpack.c.l.b16 %v1482
    %v2166 = vunpack.c.h.b16 %v1482
    %v2167 = vunpack.c.l.b16 %v1483
    %v2168 = vunpack.c.h.b16 %v1483
    %v2169 = vunpack.c.l.b16 %v1484
    %v2170 = vunpack.c.h.b16 %v1484
    %v2171 = vunpack.c.l.b16 %v1485
    %v2172 = vunpack.c.h.b16 %v1485
    %v2173 = vunpack.c.l.b16 %v1486
    %v2174 = vunpack.c.h.b16 %v1486
    %v2175 = vunpack.c.l.b16 %v1487
    %v2176 = vunpack.c.h.b16 %v1487
    %v2177 = vunpack.c.l.b16 %v1488
    %v2178 = vunpack.c.h.b16 %v1488
    %v2179 = vunpack.c.l.b16 %v1489
    %v2180 = vunpack.c.h.b16 %v1489
    %v2181 = vunpack.c.l.b16 %v1490
    %v2182 = vunpack.c.h.b16 %v1490
    %v2183 = vunpack.c.l.b16 %v1491
    %v2184 = vunpack.c.h.b16 %v1491
    %v2185 = vunpack.c.l.b16 %v1492
    %v2186 = vunpack.c.h.b16 %v1492
    %v2187 = vunpack.c.l.b16 %v1493
    %v2188 = vunpack.c.h.b16 %v1493
    %v2189 = vunpack.c.l.b16 %v1494
    %v2190 = vunpack.c.h.b16 %v1494
    %v2191 = vunpack.c.l.b16 %v1495
    %v2192 = vunpack.c.h.b16 %v1495
    %v2193 = vunpack.c.l.b16 %v1496
    %v2194 = vunpack.c.h.b16 %v1496
    %v2195 = vunpack.c.l.b16 %v1497
    %v2196 = vunpack.c.h.b16 %v1497
    %v2197 = vunpack.c.l.b16 %v1498
    %v2198 = vunpack.c.h.b16 %v1498
    %v2199 = vunpack.c.l.b16 %v1499
    %v2200 = vunpack.c.h.b16 %v1499
    %v2201 = vunpack.c.l.b16 %v1500
    %v2202 = vunpack.c.h.b16 %v1500
    %v2203 = vunpack.c.l.b16 %v1501
    %v2204 = vunpack.c.h.b16 %v1501
    %v2205 = vunpack.c.l.b16 %v1502
    %v2206 = vunpack.c.h.b16 %v1502
    %v2207 = vunpack.c.l.b16 %v1503
    %v2208 = vunpack.c.h.b16 %v1503
    %v2209 = vunpack.c.l.b16 %v1504
    %v2210 = vunpack.c.h.b16 %v1504
    %v2211 = vunpack.c.l.b16 %v1505
    %v2212 = vunpack.c.h.b16 %v1505
    %v2213 = vunpack.c.l.b16 %v1506
    %v2214 = vunpack.c.h.b16 %v1506
    %v2215 = vunpack.c.l.b16 %v1507
    %v2216 = vunpack.c.h.b16 %v1507
    %v2217 = vunpack.c.l.b16 %v1508
    %v2218 = vunpack.c.h.b16 %v1508
    %v2219 = vunpack.c.l.b16 %v1509
    %v2220 = vunpack.c.h.b16 %v1509
    %v2221 = vunpack.c.l.b16 %v1510
    %v2222 = vunpack.c.h.b16 %v1510
    %v2223 = vunpack.c.l.b16 %v1511
    %v2224 = vunpack.c.h.b16 %v1511
    %v2225 = vunpack.c.l.b16 %v1512
    %v2226 = vunpack.c.h.b16 %v1512
    %v2227 = vunpack.c.l.b16 %v1513
    %v2228 = vunpack.c.h.b16 %v1513
    %v2229 = vunpack.c.l.b16 %v1514
    %v2230 = vunpack.c.h.b16 %v1514
    %v2231 = vunpack.c.l.b16 %v1515
    %v2232 = vunpack.c.h.b16 %v1515
    %v2233 = vunpack.c.l.b16 %v1516
    %v2234 = vunpack.c.h.b16 %v1516
    %v2235 = vunpack.c.l.b16 %v1517
    %v2236 = vunpack.c.h.b16 %v1517
    %v2237 = vunpack.c.l.b16 %v1518
    %v2238 = vunpack.c.h.b16 %v1518
    %v2239 = vunpack.c.l.b16 %v1519
    %v2240 = vunpack.c.h.b16 %v1519
    %v2241 = vunpack.c.l.b16 %v1520
    %v2242 = vunpack.c.h.b16 %v1520
    %v2243 = vunpack.c.l.b16 %v1521
    %v2244 = vunpack.c.h.b16 %v1521
    %v2245 = vunpack.c.l.b16 %v1522
    %v2246 = vunpack.c.h.b16 %v1522
    %v2247 = vunpack.c.l.b16 %v1523
    %v2248 = vunpack.c.h.b16 %v1523
    %v2249 = vunpack.c.l.b16 %v1524
    %v2250 = vunpack.c.h.b16 %v1524
    %v2251 = vunpack.c.l.b16 %v1525
    %v2252 = vunpack.c.h.b16 %v1525
    %v2253 = vunpack.c.l.b16 %v1526
    %v2254 = vunpack.c.h.b16 %v1526
    %v2255 = vunpack.c.l.b16 %v1527
    %v2256 = vunpack.c.h.b16 %v1527
    %v2257 = vunpack.c.l.b16 %v1528
    %v2258 = vunpack.c.h.b16 %v1528
    %v2259 = vunpack.c.l.b16 %v1529
    %v2260 = vunpack.c.h.b16 %v1529
    %v2261 = vunpack.c.l.b16 %v1530
    %v2262 = vunpack.c.h.b16 %v1530
    %v2263 = vunpack.c.l.b16 %v1531
    %v2264 = vunpack.c.h.b16 %v1531
    %v2265 = vunpack.c.l.b16 %v1532
    %v2266 = vunpack.c.h.b16 %v1532
    %v2267 = vunpack.c.l.b16 %v1533
    %v2268 = vunpack.c.h.b16 %v1533
    %v2269 = vunpack.c.l.b16 %v1534
    %v2270 = vunpack.c.h.b16 %v1534
    %v2271 = vunpack.c.l.b16 %v1535
    %v2272 = vunpack.c.h.b16 %v1535
    %v2273 = vunpack.c.l.b16 %v1536
    %v2274 = vunpack.c.h.b16 %v1536
    %v2275 = vunpack.c.l.b16 %v1537
    %v2276 = vunpack.c.h.b16 %v1537
    %v2277 = vunpack.c.l.b16 %v1538
    %v2278 = vunpack.c.h.b16 %v1538
    %v2279 = vunpack.c.l.b16 %v1539
    %v2280 = vunpack.c.h.b16 %v1539
    %v2281 = vunpack.c.l.b16 %v1540
    %v2282 = vunpack.c.h.b16 %v1540
    %v2283 = vunpack.c.l.b16 %v1541
    %v2284 = vunpack.c.h.b16 %v1541
    %v2285 = vunpack.c.l.b16 %v1542
    %v2286 = vunpack.c.h.b16 %v1542
    %v2287 = vunpack.c.l.b16 %v1543
    %v2288 = vunpack.c.h.b16 %v1543
    %v2289 = vunpack.c.l.b16 %v1544
    %v2290 = vunpack.c.h.b16 %v1544
    %v2291 = vunpack.c.l.b16 %v1545
    %v2292 = vunpack.c.h.b16 %v1545
    %v2293 = vunpack.c.l.b16 %v1546
    %v2294 = vunpack.c.h.b16 %v1546
    %v2295 = vunpack.c.l.b16 %v1547
    %v2296 = vunpack.c.h.b16 %v1547
    %v2297 = vunpack.c.l.b16 %v1548
    %v2298 = vunpack.c.h.b16 %v1548
    %v2299 = vunpack.c.l.b16 %v1549
    %v2300 = vunpack.c.h.b16 %v1549
    %v2301 = vunpack.c.l.b16 %v1550
    %v2302 = vunpack.c.h.b16 %v1550
    %v2303 = vunpack.c.l.b16 %v1551
    %v2304 = vunpack.c.h.b16 %v1551
    %v2305 = vunpack.c.l.b16 %v1552
    %v2306 = vunpack.c.h.b16 %v1552
    %v2307 = vunpack.c.l.b16 %v1553
    %v2308 = vunpack.c.h.b16 %v1553
    %v2309 = vunpack.c.l.b16 %v1554
    %v2310 = vunpack.c.h.b16 %v1554
    %v2311 = vunpack.c.l.b16 %v1555
    %v2312 = vunpack.c.h.b16 %v1555
    %v2313 = vunpack.c.l.b16 %v1556
    %v2314 = vunpack.c.h.b16 %v1556
    %v2315 = vunpack.c.l.b16 %v1557
    %v2316 = vunpack.c.h.b16 %v1557
    %v2317 = vunpack.c.l.b16 %v1558
    %v2318 = vunpack.c.h.b16 %v1558
    %v2319 = vunpack.c.l.b16 %v1559
    %v2320 = vunpack.c.h.b16 %v1559
    %v2321 = vunpack.c.l.b16 %v1560
    %v2322 = vunpack.c.h.b16 %v1560
    %v2323 = vunpack.c.l.b16 %v1561
    %v2324 = vunpack.c.h.b16 %v1561
    %v2325 = vunpack.c.l.b16 %v1562
    %v2326 = vunpack.c.h.b16 %v1562
    %v2327 = vunpack.c.l.b16 %v1563
    %v2328 = vunpack.c.h.b16 %v1563
    %v2329 = vunpack.c.l.b16 %v1564
    %v2330 = vunpack.c.h.b16 %v1564
    %v2331 = vunpack.c.l.b16 %v1565
    %v2332 = vunpack.c.h.b16 %v1565
    %v2333 = vunpack.c.l.b16 %v1566
    %v2334 = vunpack.c.h.b16 %v1566
    %v2335 = vunpack.c.l.b16 %v1567
    %v2336 = vunpack.c.h.b16 %v1567
    %v2337 = vunpack.c.l.b16 %v1568
    %v2338 = vunpack.c.h.b16 %v1568
    %v2339 = vunpack.c.l.b16 %v1569
    %v2340 = vunpack.c.h.b16 %v1569
    %v2341 = vunpack.c.l.b16 %v1570
    %v2342 = vunpack.c.h.b16 %v1570
    %v2343 = vpack.c.b16 %v1839, %v1831
    %v2344 = vpack.c.b16 %v1840, %v1832
    %v2345 = vpack.c.b16 %v1841, %v1833
    %v2346 = vpack.c.b16 %v1842, %v1834
    %v2347 = vpack.c.b16 %v1843, %v1835
    %v2348 = vpack.c.b16 %v1844, %v1836
    %v2349 = vpack.c.b16 %v1845, %v1837
    %v2350 = vpack.c.b16 %v1846, %v1838
    %v2351 = vpack.c.b16 %v1855, %v1847
    %v2352 = vpack.c.b16 %v1856, %v1848
    %v2353 = vpack.c.b16 %v1857, %v1849
    %v2354 = vpack.c.b16 %v1858, %v1850
    %v2355 = vpack.c.b16 %v1859, %v1851
    %v2356 = vpack.c.b16 %v1860, %v1852
    %v2357 = vpack.c.b16 %v1861, %v1853
    %v2358 = vpack.c.b16 %v1862, %v1854
    %v2359 = vpack.c.b16 %v1871, %v1863
    %v2360 = vpack.c.b16 %v1872, %v1864
    %v2361 = vpack.c.b16 %v1873, %v1865
    %v2362 = vpack.c.b16 %v1874, %v1866
    %v2363 = vpack.c.b16 %v1875, %v1867
    %v2364 = vpack.c.b16 %v1876, %v1868
    %v2365 = vpack.c.b16 %v1877, %v1869
    %v2366 = vpack.c.b16 %v1878, %v1870
    %v2367 = vpack.c.b16 %v1887, %v1879
    %v2368 = vpack.c.b16 %v1888, %v1880
    %v2369 = vpack.c.b16 %v1889, %v1881
    %v2370 = vpack.c.b16 %v1890, %v1882
    %v2371 = vpack.c.b16 %v1891, %v1883
    %v2372 = vpack.c.b16 %v1892, %v1884
    %v2373 = vpack.c.b16 %v1893, %v1885
    %v2374 = vpack.c.b16 %v1894, %v1886
    %v2375 = vpack.c.b16 %v1903, %v1895
    %v2376 = vpack.c.b16 %v1904, %v1896
    %v2377 = vpack.c.b16 %v1905, %v1897
    %v2378 = vpack.c.b16 %v1906, %v1898
    %v2379 = vpack.c.b16 %v1907, %v1899
    %v2380 = vpack.c.b16 %v1908, %v1900
    %v2381 = vpack.c.b16 %v1909, %v1901
    %v2382 = vpack.c.b16 %v1910, %v1902
    %v2383 = vpack.c.b16 %v1919, %v1911
    %v2384 = vpack.c.b16 %v1920, %v1912
    %v2385 = vpack.c.b16 %v1921, %v1913
    %v2386 = vpack.c.b16 %v1922, %v1914
    %v2387 = vpack.c.b16 %v1923, %v1915
    %v2388 = vpack.c.b16 %v1924, %v1916
    %v2389 = vpack.c.b16 %v1925, %v1917
    %v2390 = vpack.c.b16 %v1926, %v1918
    %v2391 = vpack.c.b16 %v1935, %v1927
    %v2392 = vpack.c.b16 %v1936, %v1928
    %v2393 = vpack.c.b16 %v1937, %v1929
    %v2394 = vpack.c.b16 %v1938, %v1930
    %v2395 = vpack.c.b16 %v1939, %v1931
    %v2396 = vpack.c.b16 %v1940, %v1932
    %v2397 = vpack.c.b16 %v1941, %v1933
    %v2398 = vpack.c.b16 %v1942, %v1934
    %v2399 = vpack.c.b16 %v1951, %v1943
    %v2400 = vpack.c.b16 %v1952, %v1944
    %v2401 = vpack.c.b16 %v1953, %v1945
    %v2402 = vpack.c.b16 %v1954, %v1946
    %v2403 = vpack.c.b16 %v1955, %v1947
    %v2404 = vpack.c.b16 %v1956, %v1948
    %v2405 = vpack.c.b16 %v1957, %v1949
    %v2406 = vpack.c.b16 %v1958, %v1950
    %v2407 = vpack.c.b16 %v1967, %v1959
    %v2408 = vpack.c.b16 %v1968, %v1960
    %v2409 = vpack.c.b16 %v1969, %v1961
    %v2410 = vpack.c.b16 %v1970, %v1962
    %v2411 = vpack.c.b16 %v1971, %v1963
    %v2412 = vpack.c.b16 %v1972, %v1964
    %v2413 = vpack.c.b16 %v1973, %v1965
    %v2414 = vpack.c.b16 %v1974, %v1966
    %v2415 = vpack.c.b16 %v1983, %v1975
    %v2416 = vpack.c.b16 %v1984, %v1976
    %v2417 = vpack.c.b16 %v1985, %v1977
    %v2418 = vpack.c.b16 %v1986, %v1978
    %v2419 = vpack.c.b16 %v1987, %v1979
    %v2420 = vpack.c.b16 %v1988, %v1980
    %v2421 = vpack.c.b16 %v1989, %v1981
    %v2422 = vpack.c.b16 %v1990, %v1982
    %v2423 = vpack.c.b16 %v1999, %v1991
    %v2424 = vpack.c.b16 %v2000, %v1992
    %v2425 = vpack.c.b16 %v2001, %v1993
    %v2426 = vpack.c.b16 %v2002, %v1994
    %v2427 = vpack.c.b16 %v2003, %v1995
    %v2428 = vpack.c.b16 %v2004, %v1996
    %v2429 = vpack.c.b16 %v2005, %v1997
    %v2430 = vpack.c.b16 %v2006, %v1998
    %v2431 = vpack.c.b16 %v2015, %v2007
    %v2432 = vpack.c.b16 %v2016, %v2008
    %v2433 = vpack.c.b16 %v2017, %v2009
    %v2434 = vpack.c.b16 %v2018, %v2010
    %v2435 = vpack.c.b16 %v2019, %v2011
    %v2436 = vpack.c.b16 %v2020, %v2012
    %v2437 = vpack.c.b16 %v2021, %v2013
    %v2438 = vpack.c.b16 %v2022, %v2014
    %v2439 = vpack.c.b16 %v2031, %v2023
    %v2440 = vpack.c.b16 %v2032, %v2024
    %v2441 = vpack.c.b16 %v2033, %v2025
    %v2442 = vpack.c.b16 %v2034, %v2026
    %v2443 = vpack.c.b16 %v2035, %v2027
    %v2444 = vpack.c.b16 %v2036, %v2028
    %v2445 = vpack.c.b16 %v2037, %v2029
    %v2446 = vpack.c.b16 %v2038, %v2030
    %v2447 = vpack.c.b16 %v2047, %v2039
    %v2448 = vpack.c.b16 %v2048, %v2040
    %v2449 = vpack.c.b16 %v2049, %v2041
    %v2450 = vpack.c.b16 %v2050, %v2042
    %v2451 = vpack.c.b16 %v2051, %v2043
    %v2452 = vpack.c.b16 %v2052, %v2044
    %v2453 = vpack.c.b16 %v2053, %v2045
    %v2454 = vpack.c.b16 %v2054, %v2046
    %v2455 = vpack.c.b16 %v2063, %v2055
    %v2456 = vpack.c.b16 %v2064, %v2056
    %v2457 = vpack.c.b16 %v2065, %v2057
    %v2458 = vpack.c.b16 %v2066, %v2058
    %v2459 = vpack.c.b16 %v2067, %v2059
    %v2460 = vpack.c.b16 %v2068, %v2060
    %v2461 = vpack.c.b16 %v2069, %v2061
    %v2462 = vpack.c.b16 %v2070, %v2062
    %v2463 = vpack.c.b16 %v2079, %v2071
    %v2464 = vpack.c.b16 %v2080, %v2072
    %v2465 = vpack.c.b16 %v2081, %v2073
    %v2466 = vpack.c.b16 %v2082, %v2074
    %v2467 = vpack.c.b16 %v2083, %v2075
    %v2468 = vpack.c.b16 %v2084, %v2076
    %v2469 = vpack.c.b16 %v2085, %v2077
    %v2470 = vpack.c.b16 %v2086, %v2078
    %v2471 = vpack.c.b16 %v2095, %v2087
    %v2472 = vpack.c.b16 %v2096, %v2088
    %v2473 = vpack.c.b16 %v2097, %v2089
    %v2474 = vpack.c.b16 %v2098, %v2090
    %v2475 = vpack.c.b16 %v2099, %v2091
    %v2476 = vpack.c.b16 %v2100, %v2092
    %v2477 = vpack.c.b16 %v2101, %v2093
    %v2478 = vpack.c.b16 %v2102, %v2094
    %v2479 = vpack.c.b16 %v2111, %v2103
    %v2480 = vpack.c.b16 %v2112, %v2104
    %v2481 = vpack.c.b16 %v2113, %v2105
    %v2482 = vpack.c.b16 %v2114, %v2106
    %v2483 = vpack.c.b16 %v2115, %v2107
    %v2484 = vpack.c.b16 %v2116, %v2108
    %v2485 = vpack.c.b16 %v2117, %v2109
    %v2486 = vpack.c.b16 %v2118, %v2110
    %v2487 = vpack.c.b16 %v2127, %v2119
    %v2488 = vpack.c.b16 %v2128, %v2120
    %v2489 = vpack.c.b16 %v2129, %v2121
    %v2490 = vpack.c.b16 %v2130, %v2122
    %v2491 = vpack.c.b16 %v2131, %v2123
    %v2492 = vpack.c.b16 %v2132, %v2124
    %v2493 = vpack.c.b16 %v2133, %v2125
    %v2494 = vpack.c.b16 %v2134, %v2126
    %v2495 = vpack.c.b16 %v2143, %v2135
    %v2496 = vpack.c.b16 %v2144, %v2136
    %v2497 = vpack.c.b16 %v2145, %v2137
    %v2498 = vpack.c.b16 %v2146, %v2138
    %v2499 = vpack.c.b16 %v2147, %v2139
    %v2500 = vpack.c.b16 %v2148, %v2140
    %v2501 = vpack.c.b16 %v2149, %v2141
    %v2502 = vpack.c.b16 %v2150, %v2142
    %v2503 = vpack.c.b16 %v2159, %v2151
    %v2504 = vpack.c.b16 %v2160, %v2152
    %v2505 = vpack.c.b16 %v2161, %v2153
    %v2506 = vpack.c.b16 %v2162, %v2154
    %v2507 = vpack.c.b16 %v2163, %v2155
    %v2508 = vpack.c.b16 %v2164, %v2156
    %v2509 = vpack.c.b16 %v2165, %v2157
    %v2510 = vpack.c.b16 %v2166, %v2158
    %v2511 = vpack.c.b16 %v2175, %v2167
    %v2512 = vpack.c.b16 %v2176, %v2168
    %v2513 = vpack.c.b16 %v2177, %v2169
    %v2514 = vpack.c.b16 %v2178, %v2170
    %v2515 = vpack.c.b16 %v2179, %v2171
    %v2516 = vpack.c.b16 %v2180, %v2172
    %v2517 = vpack.c.b16 %v2181, %v2173
    %v2518 = vpack.c.b16 %v2182, %v2174
    %v2519 = vpack.c.b16 %v2191, %v2183
    %v2520 = vpack.c.b16 %v2192, %v2184
    %v2521 = vpack.c.b16 %v2193, %v2185
    %v2522 = vpack.c.b16 %v2194, %v2186
    %v2523 = vpack.c.b16 %v2195, %v2187
    %v2524 = vpack.c.b16 %v2196, %v2188
    %v2525 = vpack.c.b16 %v2197, %v2189
    %v2526 = vpack.c.b16 %v2198, %v2190
    %v2527 = vpack.c.b16 %v2207, %v2199
    %v2528 = vpack.c.b16 %v2208, %v2200
    %v2529 = vpack.c.b16 %v2209, %v2201
    %v2530 = vpack.c.b16 %v2210, %v2202
    %v2531 = vpack.c.b16 %v2211, %v2203
    %v2532 = vpack.c.b16 %v2212, %v2204
    %v2533 = vpack.c.b16 %v2213, %v2205
    %v2534 = vpack.c.b16 %v2214, %v2206
    %v2535 = vpack.c.b16 %v2223, %v2215
    %v2536 = vpack.c.b16 %v2224, %v2216
    %v2537 = vpack.c.b16 %v2225, %v2217
    %v2538 = vpack.c.b16 %v2226, %v2218
    %v2539 = vpack.c.b16 %v2227, %v2219
    %v2540 = vpack.c.b16 %v2228, %v2220
    %v2541 = vpack.c.b16 %v2229, %v2221
    %v2542 = vpack.c.b16 %v2230, %v2222
    %v2543 = vpack.c.b16 %v2239, %v2231
    %v2544 = vpack.c.b16 %v2240, %v2232
    %v2545 = vpack.c.b16 %v2241, %v2233
    %v2546 = vpack.c.b16 %v2242, %v2234
    %v2547 = vpack.c.b16 %v2243, %v2235
    %v2548 = vpack.c.b16 %v2244, %v2236
    %v2549 = vpack.c.b16 %v2245, %v2237
    %v2550 = vpack.c.b16 %v2246, %v2238
    %v2551 = vpack.c.b16 %v2255, %v2247
    %v2552 = vpack.c.b16 %v2256, %v2248
    %v2553 = vpack.c.b16 %v2257, %v2249
    %v2554 = vpack.c.b16 %v2258, %v2250
    %v2555 = vpack.c.b16 %v2259, %v2251
    %v2556 = vpack.c.b16 %v2260, %v2252
    %v2557 = vpack.c.b16 %v2261, %v2253
    %v2558 = vpack.c.b16 %v2262, %v2254
    %v2559 = vpack.c.b16 %v2271, %v2263
    %v2560 = vpack.c.b16 %v2272, %v2264
    %v2561 = vpack.c.b16 %v2273, %v2265
    %v2562 = vpack.c.b16 %v2274, %v2266
    %v2563 = vpack.c.b16 %v2275, %v2267
    %v2564 = vpack.c.b16 %v2276, %v2268
    %v2565 = vpack.c.b16 %v2277, %v2269
    %v2566 = vpack.c.b16 %v2278, %v2270
    %v2567 = vpack.c.b16 %v2287, %v2279
    %v2568 = vpack.c.b16 %v2288, %v2280
    %v2569 = vpack.c.b16 %v2289, %v2281
    %v2570 = vpack.c.b16 %v2290, %v2282
    %v2571 = vpack.c.b16 %v2291, %v2283
    %v2572 = vpack.c.b16 %v2292, %v2284
    %v2573 = vpack.c.b16 %v2293, %v2285
    %v2574 = vpack.c.b16 %v2294, %v2286
    %v2575 = vpack.c.b16 %v2303, %v2295
    %v2576 = vpack.c.b16 %v2304, %v2296
    %v2577 = vpack.c.b16 %v2305, %v2297
    %v2578 = vpack.c.b16 %v2306, %v2298
    %v2579 = vpack.c.b16 %v2307, %v2299
    %v2580 = vpack.c.b16 %v2308, %v2300
    %v2581 = vpack.c.b16 %v2309, %v2301
    %v2582 = vpack.c.b16 %v2310, %v2302
    %v2583 = vpack.c.b16 %v2319, %v2311
    %v2584 = vpack.c.b16 %v2320, %v2312
    %v2585 = vpack.c.b16 %v2321, %v2313
    %v2586 = vpack.c.b16 %v2322, %v2314
    %v2587 = vpack.c.b16 %v2323, %v2315
    %v2588 = vpack.c.b16 %v2324, %v2316
    %v2589 = vpack.c.b16 %v2325, %v2317
    %v2590 = vpack.c.b16 %v2326, %v2318
    %v2591 = vpack.c.b16 %v2335, %v2327
    %v2592 = vpack.c.b16 %v2336, %v2328
    %v2593 = vpack.c.b16 %v2337, %v2329
    %v2594 = vpack.c.b16 %v2338, %v2330
    %v2595 = vpack.c.b16 %v2339, %v2331
    %v2596 = vpack.c.b16 %v2340, %v2332
    %v2597 = vpack.c.b16 %v2341, %v2333
    %v2598 = vpack.c.b16 %v2342, %v2334
    %2855 = vmatprep.subr.bf16.mxu0 %v2400
    %2856 = vmatpush1.bf16.msra.mxu0 %v2399
    %2857 = vmatprep.subr.bf16.mxu0 %v2392
    %2858 = vmatpush1.bf16.msra.mxu0 %v2391
    %2859 = vmatprep.subr.bf16.mxu0 %v2384
    %2860 = vmatpush1.bf16.msra.mxu0 %v2383
    %2861 = vmatprep.subr.bf16.mxu0 %v2376
    %2862 = vmatpush1.bf16.msra.mxu0 %v2375
    %2863 = vmatprep.subr.bf16.mxu0 %v2368
    %2864 = vmatpush1.bf16.msra.mxu0 %v2367
    %2865 = vmatprep.subr.bf16.mxu0 %v2360
    %2866 = vmatpush1.bf16.msra.mxu0 %v2359
    %2867 = vmatprep.subr.bf16.mxu0 %v2352
    %2868 = vmatpush1.bf16.msra.mxu0 %v2351
    %2869 = vmatprep.subr.bf16.mxu0 %v2344
    %2870 = vmatpush1.bf16.msra.mxu0 %v2343
    %2871 = vmatprep.subr.bf16.mxu0 %v2464
    %2872 = vmatpush2.bf16.msra.mxu0 %v2463
    %2873 = vmatprep.subr.bf16.mxu0 %v2456
    %2874 = vmatpush2.bf16.msra.mxu0 %v2455
    %2875 = vmatprep.subr.bf16.mxu0 %v2448
    %2876 = vmatpush2.bf16.msra.mxu0 %v2447
    %2877 = vmatprep.subr.bf16.mxu0 %v2440
    %2878 = vmatpush2.bf16.msra.mxu0 %v2439
    %2879 = vmatprep.subr.bf16.mxu0 %v2432
    %2880 = vmatpush2.bf16.msra.mxu0 %v2431
    %2881 = vmatprep.subr.bf16.mxu0 %v2424
    %2882 = vmatpush2.bf16.msra.mxu0 %v2423
    %2883 = vmatprep.subr.bf16.mxu0 %v2416
    %2884 = vmatpush2.bf16.msra.mxu0 %v2415
    %2885 = vmatprep.subr.bf16.mxu0 %v2408
    %2886 = vmatpush2.bf16.msra.mxu0 %v2407
    %2887 = vmatprep.mubr.bf16.mxu0 %v1572
    %2888 = vmatmul.mubr.bf16.gmra.mxu0 %v1571
    %v2889 = vpop.f32.mrf.mxu0
    %v2890 = vadd.f32 0.0, %v2889
    %v2891 = vpop.f32.mrf.mxu0
    %v2892 = vadd.f32 0.0, %v2891
    %v2893 = vpop.f32.mrf.mxu0
    %v2894 = vpop.f32.mrf.mxu0
    %2895 = vdwg.mxu0
    %2896 = vmatprep.subr.bf16.mxu0 %v2528
    %2897 = vmatpush1.bf16.msra.mxu0 %v2527
    %2898 = vmatprep.subr.bf16.mxu0 %v2520
    %2899 = vmatpush1.bf16.msra.mxu0 %v2519
    %2900 = vmatprep.subr.bf16.mxu0 %v2512
    %2901 = vmatpush1.bf16.msra.mxu0 %v2511
    %2902 = vmatprep.subr.bf16.mxu0 %v2504
    %2903 = vmatpush1.bf16.msra.mxu0 %v2503
    %2904 = vmatprep.subr.bf16.mxu0 %v2496
    %2905 = vmatpush1.bf16.msra.mxu0 %v2495
    %2906 = vmatprep.subr.bf16.mxu0 %v2488
    %2907 = vmatpush1.bf16.msra.mxu0 %v2487
    %2908 = vmatprep.subr.bf16.mxu0 %v2480
    %2909 = vmatpush1.bf16.msra.mxu0 %v2479
    %2910 = vmatprep.subr.bf16.mxu0 %v2472
    %2911 = vmatpush1.bf16.msra.mxu0 %v2471
    %2912 = vmatprep.subr.bf16.mxu0 %v2592
    %2913 = vmatpush2.bf16.msra.mxu0 %v2591
    %2914 = vmatprep.subr.bf16.mxu0 %v2584
    %2915 = vmatpush2.bf16.msra.mxu0 %v2583
    %2916 = vmatprep.subr.bf16.mxu0 %v2576
    %2917 = vmatpush2.bf16.msra.mxu0 %v2575
    %2918 = vmatprep.subr.bf16.mxu0 %v2568
    %2919 = vmatpush2.bf16.msra.mxu0 %v2567
    %2920 = vmatprep.subr.bf16.mxu0 %v2560
    %2921 = vmatpush2.bf16.msra.mxu0 %v2559
    %2922 = vmatprep.subr.bf16.mxu0 %v2552
    %2923 = vmatpush2.bf16.msra.mxu0 %v2551
    %2924 = vmatprep.subr.bf16.mxu0 %v2544
    %2925 = vmatpush2.bf16.msra.mxu0 %v2543
    %2926 = vmatprep.subr.bf16.mxu0 %v2536
    %2927 = vmatpush2.bf16.msra.mxu0 %v2535
    %2928 = vmatprep.mubr.bf16.mxu0 %v1574
    %2929 = vmatmul.mubr.bf16.gmra.mxu0 %v1573
    %v2930 = vpop.f32.mrf.mxu0
    %v2931 = vadd.f32 %v2890, %v2930
    %v2932 = vpop.f32.mrf.mxu0
    %v2933 = vadd.f32 %v2892, %v2932
    %v2934 = vpop.f32.mrf.mxu0
    %v2935 = vpop.f32.mrf.mxu0
    %2936 = vdwg.mxu0
    %2937 = vmatprep.subr.bf16.mxu0 %v2402
    %2938 = vmatpush1.bf16.msra.mxu0 %v2401
    %2939 = vmatprep.subr.bf16.mxu0 %v2394
    %2940 = vmatpush1.bf16.msra.mxu0 %v2393
    %2941 = vmatprep.subr.bf16.mxu0 %v2386
    %2942 = vmatpush1.bf16.msra.mxu0 %v2385
    %2943 = vmatprep.subr.bf16.mxu0 %v2378
    %2944 = vmatpush1.bf16.msra.mxu0 %v2377
    %2945 = vmatprep.subr.bf16.mxu0 %v2370
    %2946 = vmatpush1.bf16.msra.mxu0 %v2369
    %2947 = vmatprep.subr.bf16.mxu0 %v2362
    %2948 = vmatpush1.bf16.msra.mxu0 %v2361
    %2949 = vmatprep.subr.bf16.mxu0 %v2354
    %2950 = vmatpush1.bf16.msra.mxu0 %v2353
    %2951 = vmatprep.subr.bf16.mxu0 %v2346
    %2952 = vmatpush1.bf16.msra.mxu0 %v2345
    %2953 = vmatprep.subr.bf16.mxu0 %v2466
    %2954 = vmatpush2.bf16.msra.mxu0 %v2465
    %2955 = vmatprep.subr.bf16.mxu0 %v2458
    %2956 = vmatpush2.bf16.msra.mxu0 %v2457
    %2957 = vmatprep.subr.bf16.mxu0 %v2450
    %2958 = vmatpush2.bf16.msra.mxu0 %v2449
    %2959 = vmatprep.subr.bf16.mxu0 %v2442
    %2960 = vmatpush2.bf16.msra.mxu0 %v2441
    %2961 = vmatprep.subr.bf16.mxu0 %v2434
    %2962 = vmatpush2.bf16.msra.mxu0 %v2433
    %2963 = vmatprep.subr.bf16.mxu0 %v2426
    %2964 = vmatpush2.bf16.msra.mxu0 %v2425
    %2965 = vmatprep.subr.bf16.mxu0 %v2418
    %2966 = vmatpush2.bf16.msra.mxu0 %v2417
    %2967 = vmatprep.subr.bf16.mxu0 %v2410
    %2968 = vmatpush2.bf16.msra.mxu0 %v2409
    %2969 = vmatprep.mubr.bf16.mxu0 %v1572
    %2970 = vmatmul.mubr.bf16.gmra.mxu0 %v1571
    %v2971 = vpop.f32.mrf.mxu0
    %v2972 = vadd.f32 0.0, %v2971
    %v2973 = vpop.f32.mrf.mxu0
    %v2974 = vadd.f32 0.0, %v2973
    %v2975 = vpop.f32.mrf.mxu0
    %v2976 = vpop.f32.mrf.mxu0
    %2977 = vdwg.mxu0
    %2978 = vmatprep.subr.bf16.mxu0 %v2530
    %2979 = vmatpush1.bf16.msra.mxu0 %v2529
    %2980 = vmatprep.subr.bf16.mxu0 %v2522
    %2981 = vmatpush1.bf16.msra.mxu0 %v2521
    %2982 = vmatprep.subr.bf16.mxu0 %v2514
    %2983 = vmatpush1.bf16.msra.mxu0 %v2513
    %2984 = vmatprep.subr.bf16.mxu0 %v2506
    %2985 = vmatpush1.bf16.msra.mxu0 %v2505
    %2986 = vmatprep.subr.bf16.mxu0 %v2498
    %2987 = vmatpush1.bf16.msra.mxu0 %v2497
    %2988 = vmatprep.subr.bf16.mxu0 %v2490
    %2989 = vmatpush1.bf16.msra.mxu0 %v2489
    %2990 = vmatprep.subr.bf16.mxu0 %v2482
    %2991 = vmatpush1.bf16.msra.mxu0 %v2481
    %2992 = vmatprep.subr.bf16.mxu0 %v2474
    %2993 = vmatpush1.bf16.msra.mxu0 %v2473
    %2994 = vmatprep.subr.bf16.mxu0 %v2594
    %2995 = vmatpush2.bf16.msra.mxu0 %v2593
    %2996 = vmatprep.subr.bf16.mxu0 %v2586
    %2997 = vmatpush2.bf16.msra.mxu0 %v2585
    %2998 = vmatprep.subr.bf16.mxu0 %v2578
    %2999 = vmatpush2.bf16.msra.mxu0 %v2577
    %3000 = vmatprep.subr.bf16.mxu0 %v2570
    %3001 = vmatpush2.bf16.msra.mxu0 %v2569
    %3002 = vmatprep.subr.bf16.mxu0 %v2562
    %3003 = vmatpush2.bf16.msra.mxu0 %v2561
    %3004 = vmatprep.subr.bf16.mxu0 %v2554
    %3005 = vmatpush2.bf16.msra.mxu0 %v2553
    %3006 = vmatprep.subr.bf16.mxu0 %v2546
    %3007 = vmatpush2.bf16.msra.mxu0 %v2545
    %3008 = vmatprep.subr.bf16.mxu0 %v2538
    %3009 = vmatpush2.bf16.msra.mxu0 %v2537
    %3010 = vmatprep.mubr.bf16.mxu0 %v1574
    %3011 = vmatmul.mubr.bf16.gmra.mxu0 %v1573
    %v3012 = vpop.f32.mrf.mxu0
    %v3013 = vadd.f32 %v2972, %v3012
    %v3014 = vpop.f32.mrf.mxu0
    %v3015 = vadd.f32 %v2974, %v3014
    %v3016 = vpop.f32.mrf.mxu0
    %v3017 = vpop.f32.mrf.mxu0
    %3018 = vdwg.mxu0
    %3019 = vmatprep.subr.bf16.mxu0 %v2404
    %3020 = vmatpush1.bf16.msra.mxu0 %v2403
    %3021 = vmatprep.subr.bf16.mxu0 %v2396
    %3022 = vmatpush1.bf16.msra.mxu0 %v2395
    %3023 = vmatprep.subr.bf16.mxu0 %v2388
    %3024 = vmatpush1.bf16.msra.mxu0 %v2387
    %3025 = vmatprep.subr.bf16.mxu0 %v2380
    %3026 = vmatpush1.bf16.msra.mxu0 %v2379
    %3027 = vmatprep.subr.bf16.mxu0 %v2372
    %3028 = vmatpush1.bf16.msra.mxu0 %v2371
    %3029 = vmatprep.subr.bf16.mxu0 %v2364
    %3030 = vmatpush1.bf16.msra.mxu0 %v2363
    %3031 = vmatprep.subr.bf16.mxu0 %v2356
    %3032 = vmatpush1.bf16.msra.mxu0 %v2355
    %3033 = vmatprep.subr.bf16.mxu0 %v2348
    %3034 = vmatpush1.bf16.msra.mxu0 %v2347
    %3035 = vmatprep.subr.bf16.mxu0 %v2468
    %3036 = vmatpush2.bf16.msra.mxu0 %v2467
    %3037 = vmatprep.subr.bf16.mxu0 %v2460
    %3038 = vmatpush2.bf16.msra.mxu0 %v2459
    %3039 = vmatprep.subr.bf16.mxu0 %v2452
    %3040 = vmatpush2.bf16.msra.mxu0 %v2451
    %3041 = vmatprep.subr.bf16.mxu0 %v2444
    %3042 = vmatpush2.bf16.msra.mxu0 %v2443
    %3043 = vmatprep.subr.bf16.mxu0 %v2436
    %3044 = vmatpush2.bf16.msra.mxu0 %v2435
    %3045 = vmatprep.subr.bf16.mxu0 %v2428
    %3046 = vmatpush2.bf16.msra.mxu0 %v2427
    %3047 = vmatprep.subr.bf16.mxu0 %v2420
    %3048 = vmatpush2.bf16.msra.mxu0 %v2419
    %3049 = vmatprep.subr.bf16.mxu0 %v2412
    %3050 = vmatpush2.bf16.msra.mxu0 %v2411
    %3051 = vmatprep.mubr.bf16.mxu0 %v1572
    %3052 = vmatmul.mubr.bf16.gmra.mxu0 %v1571
    %v3053 = vpop.f32.mrf.mxu0
    %v3054 = vadd.f32 0.0, %v3053
    %v3055 = vpop.f32.mrf.mxu0
    %v3056 = vadd.f32 0.0, %v3055
    %v3057 = vpop.f32.mrf.mxu0
    %v3058 = vpop.f32.mrf.mxu0
    %3059 = vdwg.mxu0
    %3060 = vmatprep.subr.bf16.mxu0 %v2532
    %3061 = vmatpush1.bf16.msra.mxu0 %v2531
    %3062 = vmatprep.subr.bf16.mxu0 %v2524
    %3063 = vmatpush1.bf16.msra.mxu0 %v2523
    %3064 = vmatprep.subr.bf16.mxu0 %v2516
    %3065 = vmatpush1.bf16.msra.mxu0 %v2515
    %3066 = vmatprep.subr.bf16.mxu0 %v2508
    %3067 = vmatpush1.bf16.msra.mxu0 %v2507
    %3068 = vmatprep.subr.bf16.mxu0 %v2500
    %3069 = vmatpush1.bf16.msra.mxu0 %v2499
    %3070 = vmatprep.subr.bf16.mxu0 %v2492
    %3071 = vmatpush1.bf16.msra.mxu0 %v2491
    %3072 = vmatprep.subr.bf16.mxu0 %v2484
    %3073 = vmatpush1.bf16.msra.mxu0 %v2483
    %3074 = vmatprep.subr.bf16.mxu0 %v2476
    %3075 = vmatpush1.bf16.msra.mxu0 %v2475
    %3076 = vmatprep.subr.bf16.mxu0 %v2596
    %3077 = vmatpush2.bf16.msra.mxu0 %v2595
    %3078 = vmatprep.subr.bf16.mxu0 %v2588
    %3079 = vmatpush2.bf16.msra.mxu0 %v2587
    %3080 = vmatprep.subr.bf16.mxu0 %v2580
    %3081 = vmatpush2.bf16.msra.mxu0 %v2579
    %3082 = vmatprep.subr.bf16.mxu0 %v2572
    %3083 = vmatpush2.bf16.msra.mxu0 %v2571
    %3084 = vmatprep.subr.bf16.mxu0 %v2564
    %3085 = vmatpush2.bf16.msra.mxu0 %v2563
    %3086 = vmatprep.subr.bf16.mxu0 %v2556
    %3087 = vmatpush2.bf16.msra.mxu0 %v2555
    %3088 = vmatprep.subr.bf16.mxu0 %v2548
    %3089 = vmatpush2.bf16.msra.mxu0 %v2547
    %3090 = vmatprep.subr.bf16.mxu0 %v2540
    %3091 = vmatpush2.bf16.msra.mxu0 %v2539
    %3092 = vmatprep.mubr.bf16.mxu0 %v1574
    %3093 = vmatmul.mubr.bf16.gmra.mxu0 %v1573
    %v3094 = vpop.f32.mrf.mxu0
    %v3095 = vadd.f32 %v3054, %v3094
    %v3096 = vpop.f32.mrf.mxu0
    %v3097 = vadd.f32 %v3056, %v3096
    %v3098 = vpop.f32.mrf.mxu0
    %v3099 = vpop.f32.mrf.mxu0
    %3100 = vdwg.mxu0
    %3101 = vmatprep.subr.bf16.mxu0 %v2406
    %3102 = vmatpush1.bf16.msra.mxu0 %v2405
    %3103 = vmatprep.subr.bf16.mxu0 %v2398
    %3104 = vmatpush1.bf16.msra.mxu0 %v2397
    %3105 = vmatprep.subr.bf16.mxu0 %v2390
    %3106 = vmatpush1.bf16.msra.mxu0 %v2389
    %3107 = vmatprep.subr.bf16.mxu0 %v2382
    %3108 = vmatpush1.bf16.msra.mxu0 %v2381
    %3109 = vmatprep.subr.bf16.mxu0 %v2374
    %3110 = vmatpush1.bf16.msra.mxu0 %v2373
    %3111 = vmatprep.subr.bf16.mxu0 %v2366
    %3112 = vmatpush1.bf16.msra.mxu0 %v2365
    %3113 = vmatprep.subr.bf16.mxu0 %v2358
    %3114 = vmatpush1.bf16.msra.mxu0 %v2357
    %3115 = vmatprep.subr.bf16.mxu0 %v2350
    %3116 = vmatpush1.bf16.msra.mxu0 %v2349
    %3117 = vmatprep.subr.bf16.mxu0 %v2470
    %3118 = vmatpush2.bf16.msra.mxu0 %v2469
    %3119 = vmatprep.subr.bf16.mxu0 %v2462
    %3120 = vmatpush2.bf16.msra.mxu0 %v2461
    %3121 = vmatprep.subr.bf16.mxu0 %v2454
    %3122 = vmatpush2.bf16.msra.mxu0 %v2453
    %3123 = vmatprep.subr.bf16.mxu0 %v2446
    %3124 = vmatpush2.bf16.msra.mxu0 %v2445
    %3125 = vmatprep.subr.bf16.mxu0 %v2438
    %3126 = vmatpush2.bf16.msra.mxu0 %v2437
    %3127 = vmatprep.subr.bf16.mxu0 %v2430
    %3128 = vmatpush2.bf16.msra.mxu0 %v2429
    %3129 = vmatprep.subr.bf16.mxu0 %v2422
    %3130 = vmatpush2.bf16.msra.mxu0 %v2421
    %3131 = vmatprep.subr.bf16.mxu0 %v2414
    %3132 = vmatpush2.bf16.msra.mxu0 %v2413
    %3133 = vmatprep.mubr.bf16.mxu0 %v1572
    %3134 = vmatmul.mubr.bf16.gmra.mxu0 %v1571
    %v3135 = vpop.f32.mrf.mxu0
    %v3136 = vadd.f32 0.0, %v3135
    %v3137 = vpop.f32.mrf.mxu0
    %v3138 = vadd.f32 0.0, %v3137
    %v3139 = vpop.f32.mrf.mxu0
    %v3140 = vpop.f32.mrf.mxu0
    %3141 = vdwg.mxu0
    %3142 = vmatprep.subr.bf16.mxu0 %v2534
    %3143 = vmatpush1.bf16.msra.mxu0 %v2533
    %3144 = vmatprep.subr.bf16.mxu0 %v2526
    %3145 = vmatpush1.bf16.msra.mxu0 %v2525
    %3146 = vmatprep.subr.bf16.mxu0 %v2518
    %3147 = vmatpush1.bf16.msra.mxu0 %v2517
    %3148 = vmatprep.subr.bf16.mxu0 %v2510
    %3149 = vmatpush1.bf16.msra.mxu0 %v2509
    %3150 = vmatprep.subr.bf16.mxu0 %v2502
    %3151 = vmatpush1.bf16.msra.mxu0 %v2501
    %3152 = vmatprep.subr.bf16.mxu0 %v2494
    %3153 = vmatpush1.bf16.msra.mxu0 %v2493
    %3154 = vmatprep.subr.bf16.mxu0 %v2486
    %3155 = vmatpush1.bf16.msra.mxu0 %v2485
    %3156 = vmatprep.subr.bf16.mxu0 %v2478
    %3157 = vmatpush1.bf16.msra.mxu0 %v2477
    %3158 = vmatprep.subr.bf16.mxu0 %v2598
    %3159 = vmatpush2.bf16.msra.mxu0 %v2597
    %3160 = vmatprep.subr.bf16.mxu0 %v2590
    %3161 = vmatpush2.bf16.msra.mxu0 %v2589
    %3162 = vmatprep.subr.bf16.mxu0 %v2582
    %3163 = vmatpush2.bf16.msra.mxu0 %v2581
    %3164 = vmatprep.subr.bf16.mxu0 %v2574
    %3165 = vmatpush2.bf16.msra.mxu0 %v2573
    %3166 = vmatprep.subr.bf16.mxu0 %v2566
    %3167 = vmatpush2.bf16.msra.mxu0 %v2565
    %3168 = vmatprep.subr.bf16.mxu0 %v2558
    %3169 = vmatpush2.bf16.msra.mxu0 %v2557
    %3170 = vmatprep.subr.bf16.mxu0 %v2550
    %3171 = vmatpush2.bf16.msra.mxu0 %v2549
    %3172 = vmatprep.subr.bf16.mxu0 %v2542
    %3173 = vmatpush2.bf16.msra.mxu0 %v2541
    %3174 = vmatprep.mubr.bf16.mxu0 %v1574
    %3175 = vmatmul.mubr.bf16.gmra.mxu0 %v1573
    %v3176 = vpop.f32.mrf.mxu0
    %v3177 = vadd.f32 %v3136, %v3176
    %v3178 = vpop.f32.mrf.mxu0
    %v3179 = vadd.f32 %v3138, %v3178
    %v3180 = vpop.f32.mrf.mxu0
    %v3181 = vpop.f32.mrf.mxu0
    %3182 = vdwg.mxu0
    %v3183 = vld [vmem:[%s13] sm:$0xff]
    %v3184 = vld [vmem:[%s14] sm:$0xff]
    %v3185 = vrot.slane %v2931, 4
    %v3186 = vadd.f32 %v2931, %v3185
    %v3187 = vrot.slane %v3186, 2
    %v3188 = vadd.f32 %v3186, %v3187
    %v3189 = vrot.slane %v3188, 1
    %v3190 = vadd.f32 %v3188, %v3189
    %v3191 = vrot.slane %v2933, 4
    %v3192 = vadd.f32 %v2933, %v3191
    %v3193 = vrot.slane %v3192, 2
    %v3194 = vadd.f32 %v3192, %v3193
    %v3195 = vrot.slane %v3194, 1
    %v3196 = vadd.f32 %v3194, %v3195
    %v3197 = vrot.slane %v3013, 4
    %v3198 = vadd.f32 %v3013, %v3197
    %v3199 = vrot.slane %v3198, 2
    %v3200 = vadd.f32 %v3198, %v3199
    %v3201 = vrot.slane %v3200, 1
    %v3202 = vadd.f32 %v3200, %v3201
    %v3203 = vrot.slane %v3015, 4
    %v3204 = vadd.f32 %v3015, %v3203
    %v3205 = vrot.slane %v3204, 2
    %v3206 = vadd.f32 %v3204, %v3205
    %v3207 = vrot.slane %v3206, 1
    %v3208 = vadd.f32 %v3206, %v3207
    %v3209 = vrot.slane %v3095, 4
    %v3210 = vadd.f32 %v3095, %v3209
    %v3211 = vrot.slane %v3210, 2
    %v3212 = vadd.f32 %v3210, %v3211
    %v3213 = vrot.slane %v3212, 1
    %v3214 = vadd.f32 %v3212, %v3213
    %v3215 = vrot.slane %v3097, 4
    %v3216 = vadd.f32 %v3097, %v3215
    %v3217 = vrot.slane %v3216, 2
    %v3218 = vadd.f32 %v3216, %v3217
    %v3219 = vrot.slane %v3218, 1
    %v3220 = vadd.f32 %v3218, %v3219
    %v3221 = vrot.slane %v3177, 4
    %v3222 = vadd.f32 %v3177, %v3221
    %v3223 = vrot.slane %v3222, 2
    %v3224 = vadd.f32 %v3222, %v3223
    %v3225 = vrot.slane %v3224, 1
    %v3226 = vadd.f32 %v3224, %v3225
    %v3227 = vrot.slane %v3179, 4
    %v3228 = vadd.f32 %v3179, %v3227
    %v3229 = vrot.slane %v3228, 2
    %v3230 = vadd.f32 %v3228, %v3229
    %v3231 = vrot.slane %v3230, 1
    %v3232 = vadd.f32 %v3230, %v3231
    %v3233 = vmul.f32 %v3190, %v348
    %v3234 = vmul.f32 %v3196, %v348
    %v3235 = vmul.f32 %v3202, %v348
    %v3236 = vmul.f32 %v3208, %v348
    %v3237 = vmul.f32 %v3214, %v348
    %v3238 = vmul.f32 %v3220, %v348
    %v3239 = vmul.f32 %v3226, %v348
    %v3240 = vmul.f32 %v3232, %v348
    %v3241 = vmul.f32 %v2931, %v2931
    %v3242 = vmul.f32 %v2933, %v2933
    %v3243 = vmul.f32 %v3013, %v3013
    %v3244 = vmul.f32 %v3015, %v3015
    %v3245 = vmul.f32 %v3095, %v3095
    %v3246 = vmul.f32 %v3097, %v3097
    %v3247 = vmul.f32 %v3177, %v3177
    %v3248 = vmul.f32 %v3179, %v3179
    %v3249 = vrot.slane %v3241, 4
    %v3250 = vadd.f32 %v3241, %v3249
    %v3251 = vrot.slane %v3250, 2
    %v3252 = vadd.f32 %v3250, %v3251
    %v3253 = vrot.slane %v3252, 1
    %v3254 = vadd.f32 %v3252, %v3253
    %v3255 = vrot.slane %v3242, 4
    %v3256 = vadd.f32 %v3242, %v3255
    %v3257 = vrot.slane %v3256, 2
    %v3258 = vadd.f32 %v3256, %v3257
    %v3259 = vrot.slane %v3258, 1
    %v3260 = vadd.f32 %v3258, %v3259
    %v3261 = vrot.slane %v3243, 4
    %v3262 = vadd.f32 %v3243, %v3261
    %v3263 = vrot.slane %v3262, 2
    %v3264 = vadd.f32 %v3262, %v3263
    %v3265 = vrot.slane %v3264, 1
    %v3266 = vadd.f32 %v3264, %v3265
    %v3267 = vrot.slane %v3244, 4
    %v3268 = vadd.f32 %v3244, %v3267
    %v3269 = vrot.slane %v3268, 2
    %v3270 = vadd.f32 %v3268, %v3269
    %v3271 = vrot.slane %v3270, 1
    %v3272 = vadd.f32 %v3270, %v3271
    %v3273 = vrot.slane %v3245, 4
    %v3274 = vadd.f32 %v3245, %v3273
    %v3275 = vrot.slane %v3274, 2
    %v3276 = vadd.f32 %v3274, %v3275
    %v3277 = vrot.slane %v3276, 1
    %v3278 = vadd.f32 %v3276, %v3277
    %v3279 = vrot.slane %v3246, 4
    %v3280 = vadd.f32 %v3246, %v3279
    %v3281 = vrot.slane %v3280, 2
    %v3282 = vadd.f32 %v3280, %v3281
    %v3283 = vrot.slane %v3282, 1
    %v3284 = vadd.f32 %v3282, %v3283
    %v3285 = vrot.slane %v3247, 4
    %v3286 = vadd.f32 %v3247, %v3285
    %v3287 = vrot.slane %v3286, 2
    %v3288 = vadd.f32 %v3286, %v3287
    %v3289 = vrot.slane %v3288, 1
    %v3290 = vadd.f32 %v3288, %v3289
    %v3291 = vrot.slane %v3248, 4
    %v3292 = vadd.f32 %v3248, %v3291
    %v3293 = vrot.slane %v3292, 2
    %v3294 = vadd.f32 %v3292, %v3293
    %v3295 = vrot.slane %v3294, 1
    %v3296 = vadd.f32 %v3294, %v3295
    %v3297 = vmul.f32 %v3254, %v348
    %v3298 = vmul.f32 %v3260, %v348
    %v3299 = vmul.f32 %v3266, %v348
    %v3300 = vmul.f32 %v3272, %v348
    %v3301 = vmul.f32 %v3278, %v348
    %v3302 = vmul.f32 %v3284, %v348
    %v3303 = vmul.f32 %v3290, %v348
    %v3304 = vmul.f32 %v3296, %v348
    %v3305 = vmul.f32 %v3233, %v3233
    %v3306 = vmul.f32 %v3234, %v3234
    %v3307 = vmul.f32 %v3235, %v3235
    %v3308 = vmul.f32 %v3236, %v3236
    %v3309 = vmul.f32 %v3237, %v3237
    %v3310 = vmul.f32 %v3238, %v3238
    %v3311 = vmul.f32 %v3239, %v3239
    %v3312 = vmul.f32 %v3240, %v3240
    %v3313 = vsub.f32 %v3297, %v3305
    %v3314 = vsub.f32 %v3298, %v3306
    %v3315 = vsub.f32 %v3299, %v3307
    %v3316 = vsub.f32 %v3300, %v3308
    %v3317 = vsub.f32 %v3301, %v3309
    %v3318 = vsub.f32 %v3302, %v3310
    %v3319 = vsub.f32 %v3303, %v3311
    %v3320 = vsub.f32 %v3304, %v3312
    %v3321 = vmax.f32 %v3313, 0.0
    %v3322 = vmax.f32 %v3314, 0.0
    %v3323 = vmax.f32 %v3315, 0.0
    %v3324 = vmax.f32 %v3316, 0.0
    %v3325 = vmax.f32 %v3317, 0.0
    %v3326 = vmax.f32 %v3318, 0.0
    %v3327 = vmax.f32 %v3319, 0.0
    %v3328 = vmax.f32 %v3320, 0.0
    %v3329 = vadd.f32 %v3321, 0.8
    %v3330 = vadd.f32 %v3322, 0.8
    %v3331 = vadd.f32 %v3323, 0.8
    %v3332 = vadd.f32 %v3324, 0.8
    %v3333 = vadd.f32 %v3325, 0.8
    %v3334 = vadd.f32 %v3326, 0.8
    %v3335 = vadd.f32 %v3327, 0.8
    %v3336 = vadd.f32 %v3328, 0.8
    %v3337 = vrsqrt.pop %v3329
    %v3338 = vrsqrt.pop %v3330
    %v3339 = vrsqrt.pop %v3331
    %v3340 = vrsqrt.pop %v3332
    %v3341 = vrsqrt.pop %v3333
    %v3342 = vrsqrt.pop %v3334
    %v3343 = vrsqrt.pop %v3335
    %v3344 = vrsqrt.pop %v3336
    %v3353 = vcombine.low %v3337, %v3338
    %v3354 = vcombine.low %v3339, %v3340
    %v3355 = vcombine.low %v3341, %v3342
    %v3356 = vcombine.low %v3343, %v3344
    %v3358 = vunpack.c.l.s4 1966171168
    %v3359 = vunpack.c.0.s8 %v3358
    %v3360 = vlaneseq
    %v3361 = vshrl.u32 %v3360, 7
    %v3362 = vsub.s32 %v3359, %v3361
    %v3363 = vrot.slane %v3353, %v3362
    %v3365 = vunpack.c.l.s4 1966171168
    %v3366 = vunpack.c.0.s8 %v3365
    %v3367 = vlaneseq
    %v3368 = vshrl.u32 %v3367, 7
    %v3369 = vsub.s32 %v3366, %v3368
    %v3370 = vrot.slane %v3354, %v3369
    %v3372 = vunpack.c.l.s4 1966171168
    %v3373 = vunpack.c.0.s8 %v3372
    %v3374 = vlaneseq
    %v3375 = vshrl.u32 %v3374, 7
    %v3376 = vsub.s32 %v3373, %v3375
    %v3377 = vrot.slane %v3355, %v3376
    %v3379 = vunpack.c.l.s4 1966171168
    %v3380 = vunpack.c.0.s8 %v3379
    %v3381 = vlaneseq
    %v3382 = vshrl.u32 %v3381, 7
    %v3383 = vsub.s32 %v3380, %v3382
    %v3384 = vrot.slane %v3356, %v3383
    %v3385 = vcombine.low %v3363, %v3370
    %v3386 = vcombine.low %v3377, %v3384
    %v3388 = vunpack.c.l.s4 1966171168
    %v3389 = vunpack.c.0.s8 %v3388
    %v3390 = vlaneseq
    %v3391 = vshrl.u32 %v3390, 7
    %v3392 = vsub.s32 %v3389, %v3391
    %v3393 = vrot.slane %v3385, %v3392
    %v3395 = vunpack.c.l.s4 1966171168
    %v3396 = vunpack.c.0.s8 %v3395
    %v3397 = vlaneseq
    %v3398 = vshrl.u32 %v3397, 7
    %v3399 = vsub.s32 %v3396, %v3398
    %v3400 = vrot.slane %v3386, %v3399
    %v3401 = vcombine.low %v3393, %v3400
    %v3403 = vmul.f32 %v3183, %v3401
    %v3405 = vlaneseq
    %v3406 = vshrl.u32 %v3405, 7
    %v3407 = vsub.s32 0, %v3406
    %v3408 = vrot.slane %v3403, %v3407
    %v3409 = vlaneseq
    %v3410 = vshrl.u32 %v3409, 7
    %v3411 = vsub.s32 1, %v3410
    %v3412 = vrot.slane %v3403, %v3411
    %v3413 = vlaneseq
    %v3414 = vshrl.u32 %v3413, 7
    %v3415 = vsub.s32 2, %v3414
    %v3416 = vrot.slane %v3403, %v3415
    %v3417 = vlaneseq
    %v3418 = vshrl.u32 %v3417, 7
    %v3419 = vsub.s32 3, %v3418
    %v3420 = vrot.slane %v3403, %v3419
    %v3421 = vlaneseq
    %v3422 = vshrl.u32 %v3421, 7
    %v3423 = vsub.s32 4, %v3422
    %v3424 = vrot.slane %v3403, %v3423
    %v3425 = vlaneseq
    %v3426 = vshrl.u32 %v3425, 7
    %v3427 = vsub.s32 5, %v3426
    %v3428 = vrot.slane %v3403, %v3427
    %v3429 = vlaneseq
    %v3430 = vshrl.u32 %v3429, 7
    %v3431 = vsub.s32 6, %v3430
    %v3432 = vrot.slane %v3403, %v3431
    %v3433 = vlaneseq
    %v3434 = vshrl.u32 %v3433, 7
    %v3435 = vsub.s32 7, %v3434
    %v3436 = vrot.slane %v3403, %v3435
    %v3445 = vmul.f32 %v2931, %v3408
    %v3446 = vmul.f32 %v2933, %v3412
    %v3447 = vmul.f32 %v3013, %v3416
    %v3448 = vmul.f32 %v3015, %v3420
    %v3449 = vmul.f32 %v3095, %v3424
    %v3450 = vmul.f32 %v3097, %v3428
    %v3451 = vmul.f32 %v3177, %v3432
    %v3452 = vmul.f32 %v3179, %v3436
    %v3453 = vmul.f32 %v3233, %v3408
    %v3454 = vmul.f32 %v3234, %v3412
    %v3455 = vmul.f32 %v3235, %v3416
    %v3456 = vmul.f32 %v3236, %v3420
    %v3457 = vmul.f32 %v3237, %v3424
    %v3458 = vmul.f32 %v3238, %v3428
    %v3459 = vmul.f32 %v3239, %v3432
    %v3460 = vmul.f32 %v3240, %v3436
    %v3469 = vcombine.low %v3453, %v3454
    %v3470 = vcombine.low %v3455, %v3456
    %v3471 = vcombine.low %v3457, %v3458
    %v3472 = vcombine.low %v3459, %v3460
    %v3474 = vunpack.c.l.s4 1966171168
    %v3475 = vunpack.c.0.s8 %v3474
    %v3476 = vlaneseq
    %v3477 = vshrl.u32 %v3476, 7
    %v3478 = vsub.s32 %v3475, %v3477
    %v3479 = vrot.slane %v3469, %v3478
    %v3481 = vunpack.c.l.s4 1966171168
    %v3482 = vunpack.c.0.s8 %v3481
    %v3483 = vlaneseq
    %v3484 = vshrl.u32 %v3483, 7
    %v3485 = vsub.s32 %v3482, %v3484
    %v3486 = vrot.slane %v3470, %v3485
    %v3488 = vunpack.c.l.s4 1966171168
    %v3489 = vunpack.c.0.s8 %v3488
    %v3490 = vlaneseq
    %v3491 = vshrl.u32 %v3490, 7
    %v3492 = vsub.s32 %v3489, %v3491
    %v3493 = vrot.slane %v3471, %v3492
    %v3495 = vunpack.c.l.s4 1966171168
    %v3496 = vunpack.c.0.s8 %v3495
    %v3497 = vlaneseq
    %v3498 = vshrl.u32 %v3497, 7
    %v3499 = vsub.s32 %v3496, %v3498
    %v3500 = vrot.slane %v3472, %v3499
    %v3501 = vcombine.low %v3479, %v3486
    %v3502 = vcombine.low %v3493, %v3500
    %v3504 = vunpack.c.l.s4 1966171168
    %v3505 = vunpack.c.0.s8 %v3504
    %v3506 = vlaneseq
    %v3507 = vshrl.u32 %v3506, 7
    %v3508 = vsub.s32 %v3505, %v3507
    %v3509 = vrot.slane %v3501, %v3508
    %v3511 = vunpack.c.l.s4 1966171168
    %v3512 = vunpack.c.0.s8 %v3511
    %v3513 = vlaneseq
    %v3514 = vshrl.u32 %v3513, 7
    %v3515 = vsub.s32 %v3512, %v3514
    %v3516 = vrot.slane %v3502, %v3515
    %v3517 = vcombine.low %v3509, %v3516
    %v3519 = vsub.f32 %v3184, %v3517
    %v3521 = vlaneseq
    %v3522 = vshrl.u32 %v3521, 7
    %v3523 = vsub.s32 0, %v3522
    %v3524 = vrot.slane %v3519, %v3523
    %v3525 = vlaneseq
    %v3526 = vshrl.u32 %v3525, 7
    %v3527 = vsub.s32 1, %v3526
    %v3528 = vrot.slane %v3519, %v3527
    %v3529 = vlaneseq
    %v3530 = vshrl.u32 %v3529, 7
    %v3531 = vsub.s32 2, %v3530
    %v3532 = vrot.slane %v3519, %v3531
    %v3533 = vlaneseq
    %v3534 = vshrl.u32 %v3533, 7
    %v3535 = vsub.s32 3, %v3534
    %v3536 = vrot.slane %v3519, %v3535
    %v3537 = vlaneseq
    %v3538 = vshrl.u32 %v3537, 7
    %v3539 = vsub.s32 4, %v3538
    %v3540 = vrot.slane %v3519, %v3539
    %v3541 = vlaneseq
    %v3542 = vshrl.u32 %v3541, 7
    %v3543 = vsub.s32 5, %v3542
    %v3544 = vrot.slane %v3519, %v3543
    %v3545 = vlaneseq
    %v3546 = vshrl.u32 %v3545, 7
    %v3547 = vsub.s32 6, %v3546
    %v3548 = vrot.slane %v3519, %v3547
    %v3549 = vlaneseq
    %v3550 = vshrl.u32 %v3549, 7
    %v3551 = vsub.s32 7, %v3550
    %v3552 = vrot.slane %v3519, %v3551
    %v3561 = vadd.f32 %v3445, %v3524
    %v3562 = vadd.f32 %v3446, %v3528
    %v3563 = vadd.f32 %v3447, %v3532
    %v3564 = vadd.f32 %v3448, %v3536
    %v3565 = vadd.f32 %v3449, %v3540
    %v3566 = vadd.f32 %v3450, %v3544
    %v3567 = vadd.f32 %v3451, %v3548
    %v3568 = vadd.f32 %v3452, %v3552
    %vm3569 = vcmp.ge.f32.partialorder %v3561, 0.0
    %vm3570 = vcmp.ge.f32.partialorder %v3562, 0.0
    %vm3571 = vcmp.ge.f32.partialorder %v3563, 0.0
    %vm3572 = vcmp.ge.f32.partialorder %v3564, 0.0
    %vm3573 = vcmp.ge.f32.partialorder %v3565, 0.0
    %vm3574 = vcmp.ge.f32.partialorder %v3566, 0.0
    %vm3575 = vcmp.ge.f32.partialorder %v3567, 0.0
    %vm3576 = vcmp.ge.f32.partialorder %v3568, 0.0
    %v3577 = vmul.f32 %v3561, 0.2
    %v3578 = vmul.f32 %v3562, 0.2
    %v3579 = vmul.f32 %v3563, 0.2
    %v3580 = vmul.f32 %v3564, 0.2
    %v3581 = vmul.f32 %v3565, 0.2
    %v3582 = vmul.f32 %v3566, 0.2
    %v3583 = vmul.f32 %v3567, 0.2
    %v3584 = vmul.f32 %v3568, 0.2
    %v3585 = vsel %vm3569, %v3561, %v3577
    %v3586 = vsel %vm3570, %v3562, %v3578
    %v3587 = vsel %vm3571, %v3563, %v3579
    %v3588 = vsel %vm3572, %v3564, %v3580
    %v3589 = vsel %vm3573, %v3565, %v3581
    %v3590 = vsel %vm3574, %v3566, %v3582
    %v3591 = vsel %vm3575, %v3567, %v3583
    %v3592 = vsel %vm3576, %v3568, %v3584
    %s3593 = smul.u32 4, 128
    %s3594 = smul.u32 %s3593, 2
    %s3595 = sshll.u32 %s3594, 4
    %3596 = dma.done %s177, %s3595
    %v3597 = vld [vmem:[#allocation3] sm:$0xff]
    %v3598 = vld [vmem:[#allocation3 + $0x8] sm:$0xff]
    %v3599 = vld [vmem:[#allocation3 + $0x10] sm:$0xff]
    %v3600 = vld [vmem:[#allocation3 + $0x18] sm:$0xff]
    %v3601 = vld [vmem:[#allocation3 + $0x20] sm:$0xff]
    %v3602 = vld [vmem:[#allocation3 + $0x28] sm:$0xff]
    %v3603 = vld [vmem:[#allocation3 + $0x30] sm:$0xff]
    %v3604 = vld [vmem:[#allocation3 + $0x38] sm:$0xff]
    %v3605 = vld [vmem:[#allocation3 + $0x40] sm:$0xff]
    %v3606 = vld [vmem:[#allocation3 + $0x48] sm:$0xff]
    %v3607 = vld [vmem:[#allocation3 + $0x50] sm:$0xff]
    %v3608 = vld [vmem:[#allocation3 + $0x58] sm:$0xff]
    %v3609 = vld [vmem:[#allocation3 + $0x60] sm:$0xff]
    %v3610 = vld [vmem:[#allocation3 + $0x68] sm:$0xff]
    %v3611 = vld [vmem:[#allocation3 + $0x70] sm:$0xff]
    %v3612 = vld [vmem:[#allocation3 + $0x78] sm:$0xff]
    %v3613 = vld [vmem:[#allocation3 + $0x80] sm:$0xff]
    %v3614 = vld [vmem:[#allocation3 + $0x88] sm:$0xff]
    %v3615 = vld [vmem:[#allocation3 + $0x90] sm:$0xff]
    %v3616 = vld [vmem:[#allocation3 + $0x98] sm:$0xff]
    %v3617 = vld [vmem:[#allocation3 + $0xa0] sm:$0xff]
    %v3618 = vld [vmem:[#allocation3 + $0xa8] sm:$0xff]
    %v3619 = vld [vmem:[#allocation3 + $0xb0] sm:$0xff]
    %v3620 = vld [vmem:[#allocation3 + $0xb8] sm:$0xff]
    %v3621 = vld [vmem:[#allocation3 + $0xc0] sm:$0xff]
    %v3622 = vld [vmem:[#allocation3 + $0xc8] sm:$0xff]
    %v3623 = vld [vmem:[#allocation3 + $0xd0] sm:$0xff]
    %v3624 = vld [vmem:[#allocation3 + $0xd8] sm:$0xff]
    %v3625 = vld [vmem:[#allocation3 + $0xe0] sm:$0xff]
    %v3626 = vld [vmem:[#allocation3 + $0xe8] sm:$0xff]
    %v3627 = vld [vmem:[#allocation3 + $0xf0] sm:$0xff]
    %v3628 = vld [vmem:[#allocation3 + $0xf8] sm:$0xff]
    %v3629 = vld [vmem:[#allocation3 + $0x100] sm:$0xff]
    %v3630 = vld [vmem:[#allocation3 + $0x108] sm:$0xff]
    %v3631 = vld [vmem:[#allocation3 + $0x110] sm:$0xff]
    %v3632 = vld [vmem:[#allocation3 + $0x118] sm:$0xff]
    %v3633 = vld [vmem:[#allocation3 + $0x120] sm:$0xff]
    %v3634 = vld [vmem:[#allocation3 + $0x128] sm:$0xff]
    %v3635 = vld [vmem:[#allocation3 + $0x130] sm:$0xff]
    %v3636 = vld [vmem:[#allocation3 + $0x138] sm:$0xff]
    %v3637 = vld [vmem:[#allocation3 + $0x140] sm:$0xff]
    %v3638 = vld [vmem:[#allocation3 + $0x148] sm:$0xff]
    %v3639 = vld [vmem:[#allocation3 + $0x150] sm:$0xff]
    %v3640 = vld [vmem:[#allocation3 + $0x158] sm:$0xff]
    %v3641 = vld [vmem:[#allocation3 + $0x160] sm:$0xff]
    %v3642 = vld [vmem:[#allocation3 + $0x168] sm:$0xff]
    %v3643 = vld [vmem:[#allocation3 + $0x170] sm:$0xff]
    %v3644 = vld [vmem:[#allocation3 + $0x178] sm:$0xff]
    %v3645 = vld [vmem:[#allocation3 + $0x180] sm:$0xff]
    %v3646 = vld [vmem:[#allocation3 + $0x188] sm:$0xff]
    %v3647 = vld [vmem:[#allocation3 + $0x190] sm:$0xff]
    %v3648 = vld [vmem:[#allocation3 + $0x198] sm:$0xff]
    %v3649 = vld [vmem:[#allocation3 + $0x1a0] sm:$0xff]
    %v3650 = vld [vmem:[#allocation3 + $0x1a8] sm:$0xff]
    %v3651 = vld [vmem:[#allocation3 + $0x1b0] sm:$0xff]
    %v3652 = vld [vmem:[#allocation3 + $0x1b8] sm:$0xff]
    %v3653 = vld [vmem:[#allocation3 + $0x1c0] sm:$0xff]
    %v3654 = vld [vmem:[#allocation3 + $0x1c8] sm:$0xff]
    %v3655 = vld [vmem:[#allocation3 + $0x1d0] sm:$0xff]
    %v3656 = vld [vmem:[#allocation3 + $0x1d8] sm:$0xff]
    %v3657 = vld [vmem:[#allocation3 + $0x1e0] sm:$0xff]
    %v3658 = vld [vmem:[#allocation3 + $0x1e8] sm:$0xff]
    %v3659 = vld [vmem:[#allocation3 + $0x1f0] sm:$0xff]
    %v3660 = vld [vmem:[#allocation3 + $0x1f8] sm:$0xff]
    %v3661 = vld [vmem:[#allocation3 + $0x200] sm:$0xff]
    %v3662 = vld [vmem:[#allocation3 + $0x208] sm:$0xff]
    %v3663 = vld [vmem:[#allocation3 + $0x210] sm:$0xff]
    %v3664 = vld [vmem:[#allocation3 + $0x218] sm:$0xff]
    %v3665 = vld [vmem:[#allocation3 + $0x220] sm:$0xff]
    %v3666 = vld [vmem:[#allocation3 + $0x228] sm:$0xff]
    %v3667 = vld [vmem:[#allocation3 + $0x230] sm:$0xff]
    %v3668 = vld [vmem:[#allocation3 + $0x238] sm:$0xff]
    %v3669 = vld [vmem:[#allocation3 + $0x240] sm:$0xff]
    %v3670 = vld [vmem:[#allocation3 + $0x248] sm:$0xff]
    %v3671 = vld [vmem:[#allocation3 + $0x250] sm:$0xff]
    %v3672 = vld [vmem:[#allocation3 + $0x258] sm:$0xff]
    %v3673 = vld [vmem:[#allocation3 + $0x260] sm:$0xff]
    %v3674 = vld [vmem:[#allocation3 + $0x268] sm:$0xff]
    %v3675 = vld [vmem:[#allocation3 + $0x270] sm:$0xff]
    %v3676 = vld [vmem:[#allocation3 + $0x278] sm:$0xff]
    %v3677 = vld [vmem:[#allocation3 + $0x280] sm:$0xff]
    %v3678 = vld [vmem:[#allocation3 + $0x288] sm:$0xff]
    %v3679 = vld [vmem:[#allocation3 + $0x290] sm:$0xff]
    %v3680 = vld [vmem:[#allocation3 + $0x298] sm:$0xff]
    %v3681 = vld [vmem:[#allocation3 + $0x2a0] sm:$0xff]
    %v3682 = vld [vmem:[#allocation3 + $0x2a8] sm:$0xff]
    %v3683 = vld [vmem:[#allocation3 + $0x2b0] sm:$0xff]
    %v3684 = vld [vmem:[#allocation3 + $0x2b8] sm:$0xff]
    %v3685 = vld [vmem:[#allocation3 + $0x2c0] sm:$0xff]
    %v3686 = vld [vmem:[#allocation3 + $0x2c8] sm:$0xff]
    %v3687 = vld [vmem:[#allocation3 + $0x2d0] sm:$0xff]
    %v3688 = vld [vmem:[#allocation3 + $0x2d8] sm:$0xff]
    %v3689 = vld [vmem:[#allocation3 + $0x2e0] sm:$0xff]
    %v3690 = vld [vmem:[#allocation3 + $0x2e8] sm:$0xff]
    %v3691 = vld [vmem:[#allocation3 + $0x2f0] sm:$0xff]
    %v3692 = vld [vmem:[#allocation3 + $0x2f8] sm:$0xff]
    %v3693 = vld [vmem:[#allocation3 + $0x300] sm:$0xff]
    %v3694 = vld [vmem:[#allocation3 + $0x308] sm:$0xff]
    %v3695 = vld [vmem:[#allocation3 + $0x310] sm:$0xff]
    %v3696 = vld [vmem:[#allocation3 + $0x318] sm:$0xff]
    %v3697 = vld [vmem:[#allocation3 + $0x320] sm:$0xff]
    %v3698 = vld [vmem:[#allocation3 + $0x328] sm:$0xff]
    %v3699 = vld [vmem:[#allocation3 + $0x330] sm:$0xff]
    %v3700 = vld [vmem:[#allocation3 + $0x338] sm:$0xff]
    %v3701 = vld [vmem:[#allocation3 + $0x340] sm:$0xff]
    %v3702 = vld [vmem:[#allocation3 + $0x348] sm:$0xff]
    %v3703 = vld [vmem:[#allocation3 + $0x350] sm:$0xff]
    %v3704 = vld [vmem:[#allocation3 + $0x358] sm:$0xff]
    %v3705 = vld [vmem:[#allocation3 + $0x360] sm:$0xff]
    %v3706 = vld [vmem:[#allocation3 + $0x368] sm:$0xff]
    %v3707 = vld [vmem:[#allocation3 + $0x370] sm:$0xff]
    %v3708 = vld [vmem:[#allocation3 + $0x378] sm:$0xff]
    %v3709 = vld [vmem:[#allocation3 + $0x380] sm:$0xff]
    %v3710 = vld [vmem:[#allocation3 + $0x388] sm:$0xff]
    %v3711 = vld [vmem:[#allocation3 + $0x390] sm:$0xff]
    %v3712 = vld [vmem:[#allocation3 + $0x398] sm:$0xff]
    %v3713 = vld [vmem:[#allocation3 + $0x3a0] sm:$0xff]
    %v3714 = vld [vmem:[#allocation3 + $0x3a8] sm:$0xff]
    %v3715 = vld [vmem:[#allocation3 + $0x3b0] sm:$0xff]
    %v3716 = vld [vmem:[#allocation3 + $0x3b8] sm:$0xff]
    %v3717 = vld [vmem:[#allocation3 + $0x3c0] sm:$0xff]
    %v3718 = vld [vmem:[#allocation3 + $0x3c8] sm:$0xff]
    %v3719 = vld [vmem:[#allocation3 + $0x3d0] sm:$0xff]
    %v3720 = vld [vmem:[#allocation3 + $0x3d8] sm:$0xff]
    %v3721 = vld [vmem:[#allocation3 + $0x3e0] sm:$0xff]
    %v3722 = vld [vmem:[#allocation3 + $0x3e8] sm:$0xff]
    %v3723 = vld [vmem:[#allocation3 + $0x3f0] sm:$0xff]
    %v3724 = vld [vmem:[#allocation3 + $0x3f8] sm:$0xff]
    %v3725 = vpack.c.bf16 %v3585, %v3585
    %v3726 = vpack.c.bf16 %v3586, %v3586
    %v3727 = vpack.c.bf16 %v3587, %v3587
    %v3728 = vpack.c.bf16 %v3588, %v3588
    %v3729 = vpack.c.bf16 %v3589, %v3589
    %v3730 = vpack.c.bf16 %v3590, %v3590
    %v3731 = vpack.c.bf16 %v3591, %v3591
    %v3732 = vpack.c.bf16 %v3592, %v3592
    %v3733 = vld [vmem:[%s16] sm:$0x3]
    %v3735 = vlaneseq
    %v3736 = vshrl.u32 %v3735, 7
    %v3737 = vsub.s32 0, %v3736
    %v3738 = vrot.slane %v3733, %v3737
    %v3739 = vlaneseq
    %v3740 = vshrl.u32 %v3739, 7
    %v3741 = vsub.s32 1, %v3740
    %v3742 = vrot.slane %v3733, %v3741
    %v3873 = vunpack.c.l.b16 %v3597
    %v3874 = vunpack.c.h.b16 %v3597
    %v3875 = vunpack.c.l.b16 %v3598
    %v3876 = vunpack.c.h.b16 %v3598
    %v3877 = vunpack.c.l.b16 %v3599
    %v3878 = vunpack.c.h.b16 %v3599
    %v3879 = vunpack.c.l.b16 %v3600
    %v3880 = vunpack.c.h.b16 %v3600
    %v3881 = vunpack.c.l.b16 %v3601
    %v3882 = vunpack.c.h.b16 %v3601
    %v3883 = vunpack.c.l.b16 %v3602
    %v3884 = vunpack.c.h.b16 %v3602
    %v3885 = vunpack.c.l.b16 %v3603
    %v3886 = vunpack.c.h.b16 %v3603
    %v3887 = vunpack.c.l.b16 %v3604
    %v3888 = vunpack.c.h.b16 %v3604
    %v3889 = vunpack.c.l.b16 %v3605
    %v3890 = vunpack.c.h.b16 %v3605
    %v3891 = vunpack.c.l.b16 %v3606
    %v3892 = vunpack.c.h.b16 %v3606
    %v3893 = vunpack.c.l.b16 %v3607
    %v3894 = vunpack.c.h.b16 %v3607
    %v3895 = vunpack.c.l.b16 %v3608
    %v3896 = vunpack.c.h.b16 %v3608
    %v3897 = vunpack.c.l.b16 %v3609
    %v3898 = vunpack.c.h.b16 %v3609
    %v3899 = vunpack.c.l.b16 %v3610
    %v3900 = vunpack.c.h.b16 %v3610
    %v3901 = vunpack.c.l.b16 %v3611
    %v3902 = vunpack.c.h.b16 %v3611
    %v3903 = vunpack.c.l.b16 %v3612
    %v3904 = vunpack.c.h.b16 %v3612
    %v3905 = vunpack.c.l.b16 %v3613
    %v3906 = vunpack.c.h.b16 %v3613
    %v3907 = vunpack.c.l.b16 %v3614
    %v3908 = vunpack.c.h.b16 %v3614
    %v3909 = vunpack.c.l.b16 %v3615
    %v3910 = vunpack.c.h.b16 %v3615
    %v3911 = vunpack.c.l.b16 %v3616
    %v3912 = vunpack.c.h.b16 %v3616
    %v3913 = vunpack.c.l.b16 %v3617
    %v3914 = vunpack.c.h.b16 %v3617
    %v3915 = vunpack.c.l.b16 %v3618
    %v3916 = vunpack.c.h.b16 %v3618
    %v3917 = vunpack.c.l.b16 %v3619
    %v3918 = vunpack.c.h.b16 %v3619
    %v3919 = vunpack.c.l.b16 %v3620
    %v3920 = vunpack.c.h.b16 %v3620
    %v3921 = vunpack.c.l.b16 %v3621
    %v3922 = vunpack.c.h.b16 %v3621
    %v3923 = vunpack.c.l.b16 %v3622
    %v3924 = vunpack.c.h.b16 %v3622
    %v3925 = vunpack.c.l.b16 %v3623
    %v3926 = vunpack.c.h.b16 %v3623
    %v3927 = vunpack.c.l.b16 %v3624
    %v3928 = vunpack.c.h.b16 %v3624
    %v3929 = vunpack.c.l.b16 %v3625
    %v3930 = vunpack.c.h.b16 %v3625
    %v3931 = vunpack.c.l.b16 %v3626
    %v3932 = vunpack.c.h.b16 %v3626
    %v3933 = vunpack.c.l.b16 %v3627
    %v3934 = vunpack.c.h.b16 %v3627
    %v3935 = vunpack.c.l.b16 %v3628
    %v3936 = vunpack.c.h.b16 %v3628
    %v3937 = vunpack.c.l.b16 %v3629
    %v3938 = vunpack.c.h.b16 %v3629
    %v3939 = vunpack.c.l.b16 %v3630
    %v3940 = vunpack.c.h.b16 %v3630
    %v3941 = vunpack.c.l.b16 %v3631
    %v3942 = vunpack.c.h.b16 %v3631
    %v3943 = vunpack.c.l.b16 %v3632
    %v3944 = vunpack.c.h.b16 %v3632
    %v3945 = vunpack.c.l.b16 %v3633
    %v3946 = vunpack.c.h.b16 %v3633
    %v3947 = vunpack.c.l.b16 %v3634
    %v3948 = vunpack.c.h.b16 %v3634
    %v3949 = vunpack.c.l.b16 %v3635
    %v3950 = vunpack.c.h.b16 %v3635
    %v3951 = vunpack.c.l.b16 %v3636
    %v3952 = vunpack.c.h.b16 %v3636
    %v3953 = vunpack.c.l.b16 %v3637
    %v3954 = vunpack.c.h.b16 %v3637
    %v3955 = vunpack.c.l.b16 %v3638
    %v3956 = vunpack.c.h.b16 %v3638
    %v3957 = vunpack.c.l.b16 %v3639
    %v3958 = vunpack.c.h.b16 %v3639
    %v3959 = vunpack.c.l.b16 %v3640
    %v3960 = vunpack.c.h.b16 %v3640
    %v3961 = vunpack.c.l.b16 %v3641
    %v3962 = vunpack.c.h.b16 %v3641
    %v3963 = vunpack.c.l.b16 %v3642
    %v3964 = vunpack.c.h.b16 %v3642
    %v3965 = vunpack.c.l.b16 %v3643
    %v3966 = vunpack.c.h.b16 %v3643
    %v3967 = vunpack.c.l.b16 %v3644
    %v3968 = vunpack.c.h.b16 %v3644
    %v3969 = vunpack.c.l.b16 %v3645
    %v3970 = vunpack.c.h.b16 %v3645
    %v3971 = vunpack.c.l.b16 %v3646
    %v3972 = vunpack.c.h.b16 %v3646
    %v3973 = vunpack.c.l.b16 %v3647
    %v3974 = vunpack.c.h.b16 %v3647
    %v3975 = vunpack.c.l.b16 %v3648
    %v3976 = vunpack.c.h.b16 %v3648
    %v3977 = vunpack.c.l.b16 %v3649
    %v3978 = vunpack.c.h.b16 %v3649
    %v3979 = vunpack.c.l.b16 %v3650
    %v3980 = vunpack.c.h.b16 %v3650
    %v3981 = vunpack.c.l.b16 %v3651
    %v3982 = vunpack.c.h.b16 %v3651
    %v3983 = vunpack.c.l.b16 %v3652
    %v3984 = vunpack.c.h.b16 %v3652
    %v3985 = vunpack.c.l.b16 %v3653
    %v3986 = vunpack.c.h.b16 %v3653
    %v3987 = vunpack.c.l.b16 %v3654
    %v3988 = vunpack.c.h.b16 %v3654
    %v3989 = vunpack.c.l.b16 %v3655
    %v3990 = vunpack.c.h.b16 %v3655
    %v3991 = vunpack.c.l.b16 %v3656
    %v3992 = vunpack.c.h.b16 %v3656
    %v3993 = vunpack.c.l.b16 %v3657
    %v3994 = vunpack.c.h.b16 %v3657
    %v3995 = vunpack.c.l.b16 %v3658
    %v3996 = vunpack.c.h.b16 %v3658
    %v3997 = vunpack.c.l.b16 %v3659
    %v3998 = vunpack.c.h.b16 %v3659
    %v3999 = vunpack.c.l.b16 %v3660
    %v4000 = vunpack.c.h.b16 %v3660
    %v4001 = vunpack.c.l.b16 %v3661
    %v4002 = vunpack.c.h.b16 %v3661
    %v4003 = vunpack.c.l.b16 %v3662
    %v4004 = vunpack.c.h.b16 %v3662
    %v4005 = vunpack.c.l.b16 %v3663
    %v4006 = vunpack.c.h.b16 %v3663
    %v4007 = vunpack.c.l.b16 %v3664
    %v4008 = vunpack.c.h.b16 %v3664
    %v4009 = vunpack.c.l.b16 %v3665
    %v4010 = vunpack.c.h.b16 %v3665
    %v4011 = vunpack.c.l.b16 %v3666
    %v4012 = vunpack.c.h.b16 %v3666
    %v4013 = vunpack.c.l.b16 %v3667
    %v4014 = vunpack.c.h.b16 %v3667
    %v4015 = vunpack.c.l.b16 %v3668
    %v4016 = vunpack.c.h.b16 %v3668
    %v4017 = vunpack.c.l.b16 %v3669
    %v4018 = vunpack.c.h.b16 %v3669
    %v4019 = vunpack.c.l.b16 %v3670
    %v4020 = vunpack.c.h.b16 %v3670
    %v4021 = vunpack.c.l.b16 %v3671
    %v4022 = vunpack.c.h.b16 %v3671
    %v4023 = vunpack.c.l.b16 %v3672
    %v4024 = vunpack.c.h.b16 %v3672
    %v4025 = vunpack.c.l.b16 %v3673
    %v4026 = vunpack.c.h.b16 %v3673
    %v4027 = vunpack.c.l.b16 %v3674
    %v4028 = vunpack.c.h.b16 %v3674
    %v4029 = vunpack.c.l.b16 %v3675
    %v4030 = vunpack.c.h.b16 %v3675
    %v4031 = vunpack.c.l.b16 %v3676
    %v4032 = vunpack.c.h.b16 %v3676
    %v4033 = vunpack.c.l.b16 %v3677
    %v4034 = vunpack.c.h.b16 %v3677
    %v4035 = vunpack.c.l.b16 %v3678
    %v4036 = vunpack.c.h.b16 %v3678
    %v4037 = vunpack.c.l.b16 %v3679
    %v4038 = vunpack.c.h.b16 %v3679
    %v4039 = vunpack.c.l.b16 %v3680
    %v4040 = vunpack.c.h.b16 %v3680
    %v4041 = vunpack.c.l.b16 %v3681
    %v4042 = vunpack.c.h.b16 %v3681
    %v4043 = vunpack.c.l.b16 %v3682
    %v4044 = vunpack.c.h.b16 %v3682
    %v4045 = vunpack.c.l.b16 %v3683
    %v4046 = vunpack.c.h.b16 %v3683
    %v4047 = vunpack.c.l.b16 %v3684
    %v4048 = vunpack.c.h.b16 %v3684
    %v4049 = vunpack.c.l.b16 %v3685
    %v4050 = vunpack.c.h.b16 %v3685
    %v4051 = vunpack.c.l.b16 %v3686
    %v4052 = vunpack.c.h.b16 %v3686
    %v4053 = vunpack.c.l.b16 %v3687
    %v4054 = vunpack.c.h.b16 %v3687
    %v4055 = vunpack.c.l.b16 %v3688
    %v4056 = vunpack.c.h.b16 %v3688
    %v4057 = vunpack.c.l.b16 %v3689
    %v4058 = vunpack.c.h.b16 %v3689
    %v4059 = vunpack.c.l.b16 %v3690
    %v4060 = vunpack.c.h.b16 %v3690
    %v4061 = vunpack.c.l.b16 %v3691
    %v4062 = vunpack.c.h.b16 %v3691
    %v4063 = vunpack.c.l.b16 %v3692
    %v4064 = vunpack.c.h.b16 %v3692
    %v4065 = vunpack.c.l.b16 %v3693
    %v4066 = vunpack.c.h.b16 %v3693
    %v4067 = vunpack.c.l.b16 %v3694
    %v4068 = vunpack.c.h.b16 %v3694
    %v4069 = vunpack.c.l.b16 %v3695
    %v4070 = vunpack.c.h.b16 %v3695
    %v4071 = vunpack.c.l.b16 %v3696
    %v4072 = vunpack.c.h.b16 %v3696
    %v4073 = vunpack.c.l.b16 %v3697
    %v4074 = vunpack.c.h.b16 %v3697
    %v4075 = vunpack.c.l.b16 %v3698
    %v4076 = vunpack.c.h.b16 %v3698
    %v4077 = vunpack.c.l.b16 %v3699
    %v4078 = vunpack.c.h.b16 %v3699
    %v4079 = vunpack.c.l.b16 %v3700
    %v4080 = vunpack.c.h.b16 %v3700
    %v4081 = vunpack.c.l.b16 %v3701
    %v4082 = vunpack.c.h.b16 %v3701
    %v4083 = vunpack.c.l.b16 %v3702
    %v4084 = vunpack.c.h.b16 %v3702
    %v4085 = vunpack.c.l.b16 %v3703
    %v4086 = vunpack.c.h.b16 %v3703
    %v4087 = vunpack.c.l.b16 %v3704
    %v4088 = vunpack.c.h.b16 %v3704
    %v4089 = vunpack.c.l.b16 %v3705
    %v4090 = vunpack.c.h.b16 %v3705
    %v4091 = vunpack.c.l.b16 %v3706
    %v4092 = vunpack.c.h.b16 %v3706
    %v4093 = vunpack.c.l.b16 %v3707
    %v4094 = vunpack.c.h.b16 %v3707
    %v4095 = vunpack.c.l.b16 %v3708
    %v4096 = vunpack.c.h.b16 %v3708
    %v4097 = vunpack.c.l.b16 %v3709
    %v4098 = vunpack.c.h.b16 %v3709
    %v4099 = vunpack.c.l.b16 %v3710
    %v4100 = vunpack.c.h.b16 %v3710
    %v4101 = vunpack.c.l.b16 %v3711
    %v4102 = vunpack.c.h.b16 %v3711
    %v4103 = vunpack.c.l.b16 %v3712
    %v4104 = vunpack.c.h.b16 %v3712
    %v4105 = vunpack.c.l.b16 %v3713
    %v4106 = vunpack.c.h.b16 %v3713
    %v4107 = vunpack.c.l.b16 %v3714
    %v4108 = vunpack.c.h.b16 %v3714
    %v4109 = vunpack.c.l.b16 %v3715
    %v4110 = vunpack.c.h.b16 %v3715
    %v4111 = vunpack.c.l.b16 %v3716
    %v4112 = vunpack.c.h.b16 %v3716
    %v4113 = vunpack.c.l.b16 %v3717
    %v4114 = vunpack.c.h.b16 %v3717
    %v4115 = vunpack.c.l.b16 %v3718
    %v4116 = vunpack.c.h.b16 %v3718
    %v4117 = vunpack.c.l.b16 %v3719
    %v4118 = vunpack.c.h.b16 %v3719
    %v4119 = vunpack.c.l.b16 %v3720
    %v4120 = vunpack.c.h.b16 %v3720
    %v4121 = vunpack.c.l.b16 %v3721
    %v4122 = vunpack.c.h.b16 %v3721
    %v4123 = vunpack.c.l.b16 %v3722
    %v4124 = vunpack.c.h.b16 %v3722
    %v4125 = vunpack.c.l.b16 %v3723
    %v4126 = vunpack.c.h.b16 %v3723
    %v4127 = vunpack.c.l.b16 %v3724
    %v4128 = vunpack.c.h.b16 %v3724
    %v4129 = vpack.c.b16 %v3875, %v3873
    %v4130 = vpack.c.b16 %v3876, %v3874
    %v4131 = vpack.c.b16 %v3879, %v3877
    %v4132 = vpack.c.b16 %v3880, %v3878
    %v4133 = vpack.c.b16 %v3883, %v3881
    %v4134 = vpack.c.b16 %v3884, %v3882
    %v4135 = vpack.c.b16 %v3887, %v3885
    %v4136 = vpack.c.b16 %v3888, %v3886
    %v4137 = vpack.c.b16 %v3891, %v3889
    %v4138 = vpack.c.b16 %v3892, %v3890
    %v4139 = vpack.c.b16 %v3895, %v3893
    %v4140 = vpack.c.b16 %v3896, %v3894
    %v4141 = vpack.c.b16 %v3899, %v3897
    %v4142 = vpack.c.b16 %v3900, %v3898
    %v4143 = vpack.c.b16 %v3903, %v3901
    %v4144 = vpack.c.b16 %v3904, %v3902
    %v4145 = vpack.c.b16 %v3907, %v3905
    %v4146 = vpack.c.b16 %v3908, %v3906
    %v4147 = vpack.c.b16 %v3911, %v3909
    %v4148 = vpack.c.b16 %v3912, %v3910
    %v4149 = vpack.c.b16 %v3915, %v3913
    %v4150 = vpack.c.b16 %v3916, %v3914
    %v4151 = vpack.c.b16 %v3919, %v3917
    %v4152 = vpack.c.b16 %v3920, %v3918
    %v4153 = vpack.c.b16 %v3923, %v3921
    %v4154 = vpack.c.b16 %v3924, %v3922
    %v4155 = vpack.c.b16 %v3927, %v3925
    %v4156 = vpack.c.b16 %v3928, %v3926
    %v4157 = vpack.c.b16 %v3931, %v3929
    %v4158 = vpack.c.b16 %v3932, %v3930
    %v4159 = vpack.c.b16 %v3935, %v3933
    %v4160 = vpack.c.b16 %v3936, %v3934
    %v4161 = vpack.c.b16 %v3939, %v3937
    %v4162 = vpack.c.b16 %v3940, %v3938
    %v4163 = vpack.c.b16 %v3943, %v3941
    %v4164 = vpack.c.b16 %v3944, %v3942
    %v4165 = vpack.c.b16 %v3947, %v3945
    %v4166 = vpack.c.b16 %v3948, %v3946
    %v4167 = vpack.c.b16 %v3951, %v3949
    %v4168 = vpack.c.b16 %v3952, %v3950
    %v4169 = vpack.c.b16 %v3955, %v3953
    %v4170 = vpack.c.b16 %v3956, %v3954
    %v4171 = vpack.c.b16 %v3959, %v3957
    %v4172 = vpack.c.b16 %v3960, %v3958
    %v4173 = vpack.c.b16 %v3963, %v3961
    %v4174 = vpack.c.b16 %v3964, %v3962
    %v4175 = vpack.c.b16 %v3967, %v3965
    %v4176 = vpack.c.b16 %v3968, %v3966
    %v4177 = vpack.c.b16 %v3971, %v3969
    %v4178 = vpack.c.b16 %v3972, %v3970
    %v4179 = vpack.c.b16 %v3975, %v3973
    %v4180 = vpack.c.b16 %v3976, %v3974
    %v4181 = vpack.c.b16 %v3979, %v3977
    %v4182 = vpack.c.b16 %v3980, %v3978
    %v4183 = vpack.c.b16 %v3983, %v3981
    %v4184 = vpack.c.b16 %v3984, %v3982
    %v4185 = vpack.c.b16 %v3987, %v3985
    %v4186 = vpack.c.b16 %v3988, %v3986
    %v4187 = vpack.c.b16 %v3991, %v3989
    %v4188 = vpack.c.b16 %v3992, %v3990
    %v4189 = vpack.c.b16 %v3995, %v3993
    %v4190 = vpack.c.b16 %v3996, %v3994
    %v4191 = vpack.c.b16 %v3999, %v3997
    %v4192 = vpack.c.b16 %v4000, %v3998
    %v4193 = vpack.c.b16 %v4003, %v4001
    %v4194 = vpack.c.b16 %v4004, %v4002
    %v4195 = vpack.c.b16 %v4007, %v4005
    %v4196 = vpack.c.b16 %v4008, %v4006
    %v4197 = vpack.c.b16 %v4011, %v4009
    %v4198 = vpack.c.b16 %v4012, %v4010
    %v4199 = vpack.c.b16 %v4015, %v4013
    %v4200 = vpack.c.b16 %v4016, %v4014
    %v4201 = vpack.c.b16 %v4019, %v4017
    %v4202 = vpack.c.b16 %v4020, %v4018
    %v4203 = vpack.c.b16 %v4023, %v4021
    %v4204 = vpack.c.b16 %v4024, %v4022
    %v4205 = vpack.c.b16 %v4027, %v4025
    %v4206 = vpack.c.b16 %v4028, %v4026
    %v4207 = vpack.c.b16 %v4031, %v4029
    %v4208 = vpack.c.b16 %v4032, %v4030
    %v4209 = vpack.c.b16 %v4035, %v4033
    %v4210 = vpack.c.b16 %v4036, %v4034
    %v4211 = vpack.c.b16 %v4039, %v4037
    %v4212 = vpack.c.b16 %v4040, %v4038
    %v4213 = vpack.c.b16 %v4043, %v4041
    %v4214 = vpack.c.b16 %v4044, %v4042
    %v4215 = vpack.c.b16 %v4047, %v4045
    %v4216 = vpack.c.b16 %v4048, %v4046
    %v4217 = vpack.c.b16 %v4051, %v4049
    %v4218 = vpack.c.b16 %v4052, %v4050
    %v4219 = vpack.c.b16 %v4055, %v4053
    %v4220 = vpack.c.b16 %v4056, %v4054
    %v4221 = vpack.c.b16 %v4059, %v4057
    %v4222 = vpack.c.b16 %v4060, %v4058
    %v4223 = vpack.c.b16 %v4063, %v4061
    %v4224 = vpack.c.b16 %v4064, %v4062
    %v4225 = vpack.c.b16 %v4067, %v4065
    %v4226 = vpack.c.b16 %v4068, %v4066
    %v4227 = vpack.c.b16 %v4071, %v4069
    %v4228 = vpack.c.b16 %v4072, %v4070
    %v4229 = vpack.c.b16 %v4075, %v4073
    %v4230 = vpack.c.b16 %v4076, %v4074
    %v4231 = vpack.c.b16 %v4079, %v4077
    %v4232 = vpack.c.b16 %v4080, %v4078
    %v4233 = vpack.c.b16 %v4083, %v4081
    %v4234 = vpack.c.b16 %v4084, %v4082
    %v4235 = vpack.c.b16 %v4087, %v4085
    %v4236 = vpack.c.b16 %v4088, %v4086
    %v4237 = vpack.c.b16 %v4091, %v4089
    %v4238 = vpack.c.b16 %v4092, %v4090
    %v4239 = vpack.c.b16 %v4095, %v4093
    %v4240 = vpack.c.b16 %v4096, %v4094
    %v4241 = vpack.c.b16 %v4099, %v4097
    %v4242 = vpack.c.b16 %v4100, %v4098
    %v4243 = vpack.c.b16 %v4103, %v4101
    %v4244 = vpack.c.b16 %v4104, %v4102
    %v4245 = vpack.c.b16 %v4107, %v4105
    %v4246 = vpack.c.b16 %v4108, %v4106
    %v4247 = vpack.c.b16 %v4111, %v4109
    %v4248 = vpack.c.b16 %v4112, %v4110
    %v4249 = vpack.c.b16 %v4115, %v4113
    %v4250 = vpack.c.b16 %v4116, %v4114
    %v4251 = vpack.c.b16 %v4119, %v4117
    %v4252 = vpack.c.b16 %v4120, %v4118
    %v4253 = vpack.c.b16 %v4123, %v4121
    %v4254 = vpack.c.b16 %v4124, %v4122
    %v4255 = vpack.c.b16 %v4127, %v4125
    %v4256 = vpack.c.b16 %v4128, %v4126
    %4385 = vmatprep.subr.bf16.mxu0 %v4144
    %4386 = vmatpush1.bf16.msra.mxu0 %v4143
    %4387 = vmatprep.subr.bf16.mxu0 %v4142
    %4388 = vmatpush1.bf16.msra.mxu0 %v4141
    %4389 = vmatprep.subr.bf16.mxu0 %v4140
    %4390 = vmatpush1.bf16.msra.mxu0 %v4139
    %4391 = vmatprep.subr.bf16.mxu0 %v4138
    %4392 = vmatpush1.bf16.msra.mxu0 %v4137
    %4393 = vmatprep.subr.bf16.mxu0 %v4136
    %4394 = vmatpush1.bf16.msra.mxu0 %v4135
    %4395 = vmatprep.subr.bf16.mxu0 %v4134
    %4396 = vmatpush1.bf16.msra.mxu0 %v4133
    %4397 = vmatprep.subr.bf16.mxu0 %v4132
    %4398 = vmatpush1.bf16.msra.mxu0 %v4131
    %4399 = vmatprep.subr.bf16.mxu0 %v4130
    %4400 = vmatpush1.bf16.msra.mxu0 %v4129
    %4401 = vmatprep.subr.bf16.mxu0 %v4160
    %4402 = vmatpush2.bf16.msra.mxu0 %v4159
    %4403 = vmatprep.subr.bf16.mxu0 %v4158
    %4404 = vmatpush2.bf16.msra.mxu0 %v4157
    %4405 = vmatprep.subr.bf16.mxu0 %v4156
    %4406 = vmatpush2.bf16.msra.mxu0 %v4155
    %4407 = vmatprep.subr.bf16.mxu0 %v4154
    %4408 = vmatpush2.bf16.msra.mxu0 %v4153
    %4409 = vmatprep.subr.bf16.mxu0 %v4152
    %4410 = vmatpush2.bf16.msra.mxu0 %v4151
    %4411 = vmatprep.subr.bf16.mxu0 %v4150
    %4412 = vmatpush2.bf16.msra.mxu0 %v4149
    %4413 = vmatprep.subr.bf16.mxu0 %v4148
    %4414 = vmatpush2.bf16.msra.mxu0 %v4147
    %4415 = vmatprep.subr.bf16.mxu0 %v4146
    %4416 = vmatpush2.bf16.msra.mxu0 %v4145
    %4417 = vmatprep.mubr.bf16.mxu0 %v3726
    %4418 = vmatmul.mubr.bf16.gmra.mxu0 %v3725
    %v4419 = vpop.f32.mrf.mxu0
    %v4420 = vadd.f32 %v3738, %v4419
    %v4421 = vpop.f32.mrf.mxu0
    %v4422 = vadd.f32 %v3742, %v4421
    %v4423 = vpop.f32.mrf.mxu0
    %v4424 = vpop.f32.mrf.mxu0
    %4425 = vdwg.mxu0
    %4426 = vmatprep.subr.bf16.mxu0 %v4176
    %4427 = vmatpush1.bf16.msra.mxu0 %v4175
    %4428 = vmatprep.subr.bf16.mxu0 %v4174
    %4429 = vmatpush1.bf16.msra.mxu0 %v4173
    %4430 = vmatprep.subr.bf16.mxu0 %v4172
    %4431 = vmatpush1.bf16.msra.mxu0 %v4171
    %4432 = vmatprep.subr.bf16.mxu0 %v4170
    %4433 = vmatpush1.bf16.msra.mxu0 %v4169
    %4434 = vmatprep.subr.bf16.mxu0 %v4168
    %4435 = vmatpush1.bf16.msra.mxu0 %v4167
    %4436 = vmatprep.subr.bf16.mxu0 %v4166
    %4437 = vmatpush1.bf16.msra.mxu0 %v4165
    %4438 = vmatprep.subr.bf16.mxu0 %v4164
    %4439 = vmatpush1.bf16.msra.mxu0 %v4163
    %4440 = vmatprep.subr.bf16.mxu0 %v4162
    %4441 = vmatpush1.bf16.msra.mxu0 %v4161
    %4442 = vmatprep.subr.bf16.mxu0 %v4192
    %4443 = vmatpush2.bf16.msra.mxu0 %v4191
    %4444 = vmatprep.subr.bf16.mxu0 %v4190
    %4445 = vmatpush2.bf16.msra.mxu0 %v4189
    %4446 = vmatprep.subr.bf16.mxu0 %v4188
    %4447 = vmatpush2.bf16.msra.mxu0 %v4187
    %4448 = vmatprep.subr.bf16.mxu0 %v4186
    %4449 = vmatpush2.bf16.msra.mxu0 %v4185
    %4450 = vmatprep.subr.bf16.mxu0 %v4184
    %4451 = vmatpush2.bf16.msra.mxu0 %v4183
    %4452 = vmatprep.subr.bf16.mxu0 %v4182
    %4453 = vmatpush2.bf16.msra.mxu0 %v4181
    %4454 = vmatprep.subr.bf16.mxu0 %v4180
    %4455 = vmatpush2.bf16.msra.mxu0 %v4179
    %4456 = vmatprep.subr.bf16.mxu0 %v4178
    %4457 = vmatpush2.bf16.msra.mxu0 %v4177
    %4458 = vmatprep.mubr.bf16.mxu0 %v3728
    %4459 = vmatmul.mubr.bf16.gmra.mxu0 %v3727
    %v4460 = vpop.f32.mrf.mxu0
    %v4461 = vadd.f32 %v4420, %v4460
    %v4462 = vpop.f32.mrf.mxu0
    %v4463 = vadd.f32 %v4422, %v4462
    %v4464 = vpop.f32.mrf.mxu0
    %v4465 = vpop.f32.mrf.mxu0
    %4466 = vdwg.mxu0
    %4467 = vmatprep.subr.bf16.mxu0 %v4208
    %4468 = vmatpush1.bf16.msra.mxu0 %v4207
    %4469 = vmatprep.subr.bf16.mxu0 %v4206
    %4470 = vmatpush1.bf16.msra.mxu0 %v4205
    %4471 = vmatprep.subr.bf16.mxu0 %v4204
    %4472 = vmatpush1.bf16.msra.mxu0 %v4203
    %4473 = vmatprep.subr.bf16.mxu0 %v4202
    %4474 = vmatpush1.bf16.msra.mxu0 %v4201
    %4475 = vmatprep.subr.bf16.mxu0 %v4200
    %4476 = vmatpush1.bf16.msra.mxu0 %v4199
    %4477 = vmatprep.subr.bf16.mxu0 %v4198
    %4478 = vmatpush1.bf16.msra.mxu0 %v4197
    %4479 = vmatprep.subr.bf16.mxu0 %v4196
    %4480 = vmatpush1.bf16.msra.mxu0 %v4195
    %4481 = vmatprep.subr.bf16.mxu0 %v4194
    %4482 = vmatpush1.bf16.msra.mxu0 %v4193
    %4483 = vmatprep.subr.bf16.mxu0 %v4224
    %4484 = vmatpush2.bf16.msra.mxu0 %v4223
    %4485 = vmatprep.subr.bf16.mxu0 %v4222
    %4486 = vmatpush2.bf16.msra.mxu0 %v4221
    %4487 = vmatprep.subr.bf16.mxu0 %v4220
    %4488 = vmatpush2.bf16.msra.mxu0 %v4219
    %4489 = vmatprep.subr.bf16.mxu0 %v4218
    %4490 = vmatpush2.bf16.msra.mxu0 %v4217
    %4491 = vmatprep.subr.bf16.mxu0 %v4216
    %4492 = vmatpush2.bf16.msra.mxu0 %v4215
    %4493 = vmatprep.subr.bf16.mxu0 %v4214
    %4494 = vmatpush2.bf16.msra.mxu0 %v4213
    %4495 = vmatprep.subr.bf16.mxu0 %v4212
    %4496 = vmatpush2.bf16.msra.mxu0 %v4211
    %4497 = vmatprep.subr.bf16.mxu0 %v4210
    %4498 = vmatpush2.bf16.msra.mxu0 %v4209
    %4499 = vmatprep.mubr.bf16.mxu0 %v3730
    %4500 = vmatmul.mubr.bf16.gmra.mxu0 %v3729
    %v4501 = vpop.f32.mrf.mxu0
    %v4502 = vadd.f32 %v4461, %v4501
    %v4503 = vpop.f32.mrf.mxu0
    %v4504 = vadd.f32 %v4463, %v4503
    %v4505 = vpop.f32.mrf.mxu0
    %v4506 = vpop.f32.mrf.mxu0
    %4507 = vdwg.mxu0
    %4508 = vmatprep.subr.bf16.mxu0 %v4240
    %4509 = vmatpush1.bf16.msra.mxu0 %v4239
    %4510 = vmatprep.subr.bf16.mxu0 %v4238
    %4511 = vmatpush1.bf16.msra.mxu0 %v4237
    %4512 = vmatprep.subr.bf16.mxu0 %v4236
    %4513 = vmatpush1.bf16.msra.mxu0 %v4235
    %4514 = vmatprep.subr.bf16.mxu0 %v4234
    %4515 = vmatpush1.bf16.msra.mxu0 %v4233
    %4516 = vmatprep.subr.bf16.mxu0 %v4232
    %4517 = vmatpush1.bf16.msra.mxu0 %v4231
    %4518 = vmatprep.subr.bf16.mxu0 %v4230
    %4519 = vmatpush1.bf16.msra.mxu0 %v4229
    %4520 = vmatprep.subr.bf16.mxu0 %v4228
    %4521 = vmatpush1.bf16.msra.mxu0 %v4227
    %4522 = vmatprep.subr.bf16.mxu0 %v4226
    %4523 = vmatpush1.bf16.msra.mxu0 %v4225
    %4524 = vmatprep.subr.bf16.mxu0 %v4256
    %4525 = vmatpush2.bf16.msra.mxu0 %v4255
    %4526 = vmatprep.subr.bf16.mxu0 %v4254
    %4527 = vmatpush2.bf16.msra.mxu0 %v4253
    %4528 = vmatprep.subr.bf16.mxu0 %v4252
    %4529 = vmatpush2.bf16.msra.mxu0 %v4251
    %4530 = vmatprep.subr.bf16.mxu0 %v4250
    %4531 = vmatpush2.bf16.msra.mxu0 %v4249
    %4532 = vmatprep.subr.bf16.mxu0 %v4248
    %4533 = vmatpush2.bf16.msra.mxu0 %v4247
    %4534 = vmatprep.subr.bf16.mxu0 %v4246
    %4535 = vmatpush2.bf16.msra.mxu0 %v4245
    %4536 = vmatprep.subr.bf16.mxu0 %v4244
    %4537 = vmatpush2.bf16.msra.mxu0 %v4243
    %4538 = vmatprep.subr.bf16.mxu0 %v4242
    %4539 = vmatpush2.bf16.msra.mxu0 %v4241
    %4540 = vmatprep.mubr.bf16.mxu0 %v3732
    %4541 = vmatmul.mubr.bf16.gmra.mxu0 %v3731
    %v4542 = vpop.f32.mrf.mxu0
    %v4543 = vadd.f32 %v4502, %v4542
    %v4544 = vpop.f32.mrf.mxu0
    %v4545 = vadd.f32 %v4504, %v4544
    %v4546 = vpop.f32.mrf.mxu0
    %v4547 = vpop.f32.mrf.mxu0
    %4548 = vdwg.mxu0
    %v4549 = vtanh.pop %v4543
    %v4550 = vtanh.pop %v4545
    %4551 = vst [vmem:[#allocation20] sm:$0xff] %v4549
    %4552 = vst [vmem:[#allocation20 + $0x8] sm:$0xff] %v4550
    // Predicated region
    $region106: #{tpu_custom_call.1} parent=1 // pred_check
      _
    $region107: #{tpu_custom_call.1} parent=1 // pred_check_branch
      %4554 = sbr.rel (0) target = $region109
    $region108: #{tpu_custom_call.1} parent=1 // pred_region
      %s4556 = ssub.s32 256, 256
      %4557 = vsyncadd [#allocation7], %s4556
      %s4559 = sshll.u32 [#allocation20], 4
      %s4560 = int_to_ptr.vmem [resolvable:$true] %s4559
      %4562 = dma.vmem_to_hbm [thread:$0]  %s4560, 256, %s17, [#allocation7]
    $region109: #{tpu_custom_call.1} parent=1 // pred_fallthru
      _
    // Predicated region
    $region110: #{tpu_custom_call.1} parent=1 // pred_check
      _
    $region111: #{tpu_custom_call.1} parent=1 // pred_check_branch
      %4564 = sbr.rel (0) target = $region113
    $region112: #{tpu_custom_call.1} parent=1 // pred_region
      %4565 = dma.done [#allocation7], 256
    $region113: #{tpu_custom_call.1} parent=1 // pred_fallthru
      _
    %4566 = vsyncpa [#allocation6], 1
    %4567 = vsyncpa [#allocation9], 1
    %4568 = vsyncpa [#allocation12], 1
    %4569 = vsyncpa [#allocation15], 1
    %4570 = vsyncpa [#allocation18], 1
    %4571 = vsyncpa [#allocation7], 1
  %4572 = vsyncmov [#allocation4]
  %s4573 = vpop.sfrf %4572
  %p4574 = scmp.eq.s32.totalorder %s4573, 0
  %p4575 = pneg %p4574
  %4577 = shalt.err (%p4575)
  %s4578 = scalar_lea.sflag [#allocation4], 1
  %4579 = vsyncmov %s4578
  %s4580 = vpop.sfrf %4579
  %p4581 = scmp.eq.s32.totalorder %s4580, 0
  %p4582 = pneg %p4581
  %4584 = shalt.err (%p4582)

</llo_original>
